<compile_context>
chip_gen: v5e
topology: v5e:2x2
jax: 0.10.0
libtpu: 0.0.40
codegen_flags: <defaults>
</compile_context>

<pallas_src>
import functools

import jax
import jax.numpy as jnp
from jax import lax
from jax.experimental import pallas as pl
from jax.experimental.pallas import tpu as pltpu


def _round_up(x, m):
    return ((x + m - 1) // m) * m


def _pick_row_tile(H, Wp):
    """Output-row tile height: prefer >=2 tiles whose flat row count is 8-aligned."""
    for th in (8, 16, 32, 4, 2):
        if H % th == 0 and (th * Wp) % 8 == 0 and H // th >= 2:
            return th
    return H


def _vmem_capacity_bytes():
    try:
        return int(pltpu.get_tpu_info().vmem_capacity_bytes)
    except Exception:
        return 64 * 2 ** 20   # conservative (v7x-sized) fallback


def _scale_pred_kernel(x_ref, w1_ref, t1_ref, w2_ref, b2_ref, o_ref, acc_ref,
                       *, R, Wp):
    # One (batch, row-tile, tap) grid step.
    # x_ref : (S_in, Cin)   padded input row-slab for this row tile (bf16/f32)
    # w1_ref: (Cin, C1)     3x3 weights for the current tap, BN scale folded in
    # t1_ref: (1, C1) f32   folded BatchNorm shift
    # w2_ref: (C1, C2p)     1x1 weights, Cout zero-padded to a lane multiple
    # b2_ref: (1, C2p) f32  1x1 bias (zero-padded)
    # o_ref : (R, C2p)      output rows for this tile (padded width, lane-dense)
    # acc_ref: (R, C1) f32  VMEM accumulator, lives across the tap axis
    kk = pl.program_id(2)

    @pl.when(kk == 0)
    def _init():
        acc_ref[...] = jnp.zeros_like(acc_ref)

    # Unrolled 9-tap accumulate: one tap per reduction-grid step so w1 streams
    # per tap (no im2col buffer).  Static slice starts; one branch fires/step.
    for tap in range(9):
        ky, kx = divmod(tap, 3)
        off = ky * Wp + kx

        @pl.when(kk == tap)
        def _accum(off=off):
            acc_ref[...] += jnp.dot(x_ref[off:off + R, :], w1_ref[...],
                                    preferred_element_type=jnp.float32)

    @pl.when(kk == pl.num_programs(2) - 1)
    def _finalize():
        h = acc_ref[...] + t1_ref[...]          # BN scale already folded into w1
        h = jnp.maximum(h, 0.1 * h)             # LeakyReLU(0.1)
        out = jnp.dot(h.astype(w2_ref.dtype), w2_ref[...],
                      preferred_element_type=jnp.float32) + b2_ref[...]
        o_ref[...] = out.astype(o_ref.dtype)


def scale_prediction_forward(x_nchw, params, num_classes,
                             compute_dtype=jnp.bfloat16):
    """x_nchw: (N, Cin, H, W) f32 -> (N, 3, H, W, num_classes + 5) f32."""
    N, Cin, H, W = x_nchw.shape
    C1 = 2 * Cin
    C2 = 3 * (num_classes + 5)
    C2p = _round_up(C2, 128)      # lane-dense output channels (unmasked vst)
    Wp = W + 2
    TH = _pick_row_tile(H, Wp)    # output rows per tile
    T = H // TH
    S_in = (TH + 3) * Wp          # padded rows per slab (+2 conv halo, +1 slack)
    R = TH * Wp                   # output rows per tile (padded width)
    eps = 1e-5

    # Fold eval-mode BatchNorm: scale goes into the 3x3 weights, shift stays.
    gamma, beta = params["bn_gamma"], params["bn_beta"]
    mean, var = params["bn_mean"], params["bn_var"]
    inv_std = 1.0 / jnp.sqrt(var + eps)
    scale1 = gamma * inv_std
    shift1 = (beta - mean * scale1).reshape(1, C1).astype(jnp.float32)

    # 3x3 weights HWIO (3,3,Cin,C1) * BN scale -> (9, Cin, C1); tap kk=ky*3+kx
    # streams as one (Cin, C1) chunk.  1x1 weights/bias padded to C2p.
    w1 = (params["w1"] * scale1[None, None, None, :]).reshape(9, Cin, C1)
    w1 = w1.astype(compute_dtype)
    w2 = jnp.pad(params["w2"], ((0, 0), (0, C2p - C2))).astype(compute_dtype)
    b2 = jnp.pad(params["b2"], (0, C2p - C2)).reshape(1, C2p).astype(jnp.float32)

    # NCHW -> NHWC, zero-pad (conv padding=1; +1 bottom slack row so flat tap
    # slices stay in bounds), cut into per-row-tile slabs with duplicated halo
    # rows, flatten spatial dims.
    x_nhwc = jnp.transpose(x_nchw, (0, 2, 3, 1))
    x_pad = jnp.pad(x_nhwc, ((0, 0), (1, 2), (1, 1), (0, 0)))
    x_tiles = jnp.stack(
        [x_pad[:, t * TH:t * TH + TH + 3, :, :] for t in range(T)], axis=1)
    x_tiles = x_tiles.reshape(N, T, S_in, Cin).astype(compute_dtype)

    kernel = functools.partial(_scale_pred_kernel, R=R, Wp=Wp)

    # Per-step VMEM: double-buffered x slab / streamed w1 chunk / out tile,
    # single-buffered constants, accumulator scratch and live temporaries.
    csz = jnp.dtype(compute_dtype).itemsize
    est = (2 * S_in * Cin * csz
           + 2 * Cin * C1 * csz
           + C1 * 4 + C1 * C2p * csz + C2p * 4
           + 2 * R * C2p * csz
           + R * C1 * 4
           + R * Cin * csz + R * C1 * 4 + R * C2p * 4)
    vmem_cap = _vmem_capacity_bytes()
    vmem_limit = int(min(max(2 * est, 32 * 2 ** 20), vmem_cap - 8 * 2 ** 20))

    def _make_call(single_buffer_consts):
        if single_buffer_consts:
            def const_spec(bs, im):
                return pl.BlockSpec(bs, im, pipeline_mode=pl.Buffered(1))
        else:
            const_spec = pl.BlockSpec
        in_specs = [
            pl.BlockSpec((None, None, S_in, Cin), lambda n, t, k: (n, t, 0, 0)),
            pl.BlockSpec((None, Cin, C1), lambda n, t, k: (k, 0, 0)),
            const_spec((1, C1), lambda n, t, k: (0, 0)),
            const_spec((C1, C2p), lambda n, t, k: (0, 0)),
            const_spec((1, C2p), lambda n, t, k: (0, 0)),
        ]
        return pl.pallas_call(
            kernel,
            out_shape=jax.ShapeDtypeStruct((N, H * Wp, C2p), compute_dtype),
            grid_spec=pltpu.PrefetchScalarGridSpec(
                num_scalar_prefetch=0,
                grid=(N, T, 9),
                in_specs=in_specs,
                out_specs=pl.BlockSpec((None, R, C2p), lambda n, t, k: (n, t, 0)),
                scratch_shapes=[pltpu.VMEM((R, C1), jnp.float32)],
            ),
            compiler_params=pltpu.CompilerParams(
                dimension_semantics=("parallel", "parallel", "arbitrary"),
                vmem_limit_bytes=vmem_limit),
        )(x_tiles, w1, shift1, w2, b2)

    try:
        # Single-buffer the grid-invariant operands (shift, w2, b2).
        out_flat = _make_call(True)
    except Exception:
        # Fallback for Pallas builds without BlockSpec pipeline_mode support.
        out_flat = _make_call(False)

    # (N, H*Wp, C2p) -> drop padded width cols & padded channels
    #                -> (N, H, W, 3, nc+5) -> (N, 3, H, W, nc+5), f32 out.
    out = out_flat.reshape(N, H, Wp, C2p)[:, :, :W, :C2].astype(jnp.float32)
    out = out.reshape(N, H, W, 3, num_classes + 5)
    return jnp.transpose(out, (0, 3, 1, 2, 4))


def _reference_forward(x_nchw, params, num_classes):
    """Pure-JAX reference (lax.conv, f32) matching the PyTorch module in eval mode."""
    N, Cin, H, W = x_nchw.shape
    eps = 1e-5
    x_nhwc = jnp.transpose(x_nchw, (0, 2, 3, 1))
    y = lax.conv_general_dilated(
        x_nhwc, params["w1"], window_strides=(1, 1), padding=((1, 1), (1, 1)),
        dimension_numbers=("NHWC", "HWIO", "NHWC"))
    scale = params["bn_gamma"] / jnp.sqrt(params["bn_var"] + eps)
    y = y * scale + (params["bn_beta"] - params["bn_mean"] * scale)
    y = jnp.where(y >= 0, y, 0.1 * y)
    y = jnp.einsum("nhwc,cd->nhwd", y, params["w2"]) + params["b2"]
    y = y.reshape(N, H, W, 3, num_classes + 5)
    return jnp.transpose(y, (0, 3, 1, 2, 4))


if __name__ == "__main__":
    # Small config consistent with ScalePrediction(in_channels=4, num_classes=3).
    N, Cin, H, W = 2, 4, 16, 16
    num_classes = 3
    C1 = 2 * Cin
    C2 = 3 * (num_classes + 5)

    key = jax.random.PRNGKey(0)
    k = jax.random.split(key, 8)
    x = jax.random.normal(k[0], (N, Cin, H, W), dtype=jnp.float32)
    params = {
        # conv1 (3x3, no bias), HWIO layout
        "w1": 0.1 * jax.random.normal(k[1], (3, 3, Cin, C1), dtype=jnp.float32),
        # BatchNorm2d(C1) — eval-mode stats/affine params
        "bn_gamma": 1.0 + 0.1 * jax.random.normal(k[2], (C1,), dtype=jnp.float32),
        "bn_beta": 0.1 * jax.random.normal(k[3], (C1,), dtype=jnp.float32),
        "bn_mean": 0.1 * jax.random.normal(k[4], (C1,), dtype=jnp.float32),
        "bn_var": jnp.abs(1.0 + 0.1 * jax.random.normal(k[5], (C1,), dtype=jnp.float32)),
        # conv2 (1x1, with bias), stored as (Cin=C1, Cout=C2)
        "w2": 0.1 * jax.random.normal(k[6], (C1, C2), dtype=jnp.float32),
        "b2": 0.1 * jax.random.normal(k[7], (C2,), dtype=jnp.float32),
    }

    ref = jax.block_until_ready(_reference_forward(x, params, num_classes))

    # Structural correctness at tight tolerance (f32 MXU path, f32 output).
    out_f32 = jax.block_until_ready(
        scale_prediction_forward(x, params, num_classes, jnp.float32))
    assert out_f32.shape == (N, 3, H, W, num_classes + 5), out_f32.shape
    assert jnp.allclose(out_f32, ref, atol=2e-4, rtol=2e-4), \
        float(jnp.max(jnp.abs(out_f32 - ref)))

    # Performance-default bf16 path (bf16 operands/output, f32 accumulation).
    out = jax.block_until_ready(
        scale_prediction_forward(x, params, num_classes, jnp.bfloat16))
    assert out.shape == (N, 3, H, W, num_classes + 5), out.shape
    assert jnp.allclose(out, ref, atol=4e-2, rtol=4e-2), \
        float(jnp.max(jnp.abs(out - ref)))

    print("KERNEL_OK")
</pallas_src>

<mosaic_0001>
module attributes {stable_mosaic.version = 11 : i64} {
  func.func @_scale_pred_kernel(%arg0: i32, %arg1: i32, %arg2: i32, %arg3: memref<1x1x198x4xf32, #tpu.memory_space<vmem>>, %arg4: memref<1x4x8xf32, #tpu.memory_space<vmem>>, %arg5: memref<1x8xf32, #tpu.memory_space<vmem>>, %arg6: memref<8x128xf32, #tpu.memory_space<vmem>>, %arg7: memref<1x128xf32, #tpu.memory_space<vmem>>, %arg8: memref<1x144x128xf32, #tpu.memory_space<vmem>>, %arg9: memref<144x8xf32, #tpu.memory_space<vmem>>) attributes {dimension_semantics = [#tpu.dimension_semantics<parallel>, #tpu.dimension_semantics<parallel>, #tpu.dimension_semantics<arbitrary>], iteration_bounds = array<i64: 2, 2, 9>, scalar_prefetch = 0 : i64, scratch_operands = 1 : i64, tpu.core_type = #tpu.core_type<tc>, window_params = [{transform_indices = @transform_0, window_bounds = array<i64: 1, 1, 198, 4>}, {transform_indices = @transform_1, window_bounds = array<i64: 1, 4, 8>}, {pipeline_mode = #tpu.pipeline_mode<synchronous>, transform_indices = @transform_2, window_bounds = array<i64: 1, 8>}, {pipeline_mode = #tpu.pipeline_mode<synchronous>, transform_indices = @transform_3, window_bounds = array<i64: 8, 128>}, {pipeline_mode = #tpu.pipeline_mode<synchronous>, transform_indices = @transform_4, window_bounds = array<i64: 1, 128>}, {transform_indices = @transform_5, window_bounds = array<i64: 1, 144, 128>}]} {
    %c0_i32 = arith.constant 0 : i32
    %0 = arith.cmpi eq, %arg2, %c0_i32 : i32
    %1 = arith.extui %0 : i1 to i32
    %c0_i32_0 = arith.constant 0 : i32
    %2 = arith.cmpi ne, %1, %c0_i32_0 : i32
    scf.if %2 {
      %cst = arith.constant 0.000000e+00 : f32
      %33 = vector.broadcast %cst : f32 to vector<144x8xf32>
      %c0 = arith.constant 0 : index
      %c0_13 = arith.constant 0 : index
      %34 = vector.load %arg9[%c0, %c0_13] : memref<144x8xf32, #tpu.memory_space<vmem>>, vector<144x8xf32>
      tpu.vector_store %arg9[%c0, %c0_13], %33 {strides = array<i32>} : memref<144x8xf32, #tpu.memory_space<vmem>>, vector<144x8xf32>,
    } else {
    }
    %c0_i32_1 = arith.constant 0 : i32
    %3 = arith.cmpi eq, %arg2, %c0_i32_1 : i32
    %4 = arith.extui %3 : i1 to i32
    %c0_i32_2 = arith.constant 0 : i32
    %5 = arith.cmpi ne, %4, %c0_i32_2 : i32
    scf.if %5 {
      %c0 = arith.constant 0 : index
      %c0_13 = arith.constant 0 : index
      %33 = vector.load %arg9[%c0, %c0_13] : memref<144x8xf32, #tpu.memory_space<vmem>>, vector<144x8xf32>
      %c0_14 = arith.constant 0 : index
      %c0_15 = arith.constant 0 : index
      %c0_16 = arith.constant 0 : index
      %c0_17 = arith.constant 0 : index
      %34 = vector.load %arg3[%c0_14, %c0_15, %c0_16, %c0_17] : memref<1x1x198x4xf32, #tpu.memory_space<vmem>>, vector<1x1x144x4xf32>
      %35 = vector.shape_cast %34 : vector<1x1x144x4xf32> to vector<144x4xf32>
      %c0_18 = arith.constant 0 : index
      %c0_19 = arith.constant 0 : index
      %c0_20 = arith.constant 0 : index
      %36 = vector.load %arg4[%c0_18, %c0_19, %c0_20] : memref<1x4x8xf32, #tpu.memory_space<vmem>>, vector<1x4x8xf32>
      %37 = vector.shape_cast %36 : vector<1x4x8xf32> to vector<4x8xf32>
      %cst = arith.constant dense<0.000000e+00> : vector<144x8xf32>
      %38 = tpu.matmul %35, %37, %cst {dimension_numbers = #tpu.dot_dimension_numbers<[1], [0], [0], [1], [0, 0, 1, 1], [], []>} : vector<144x4xf32>, vector<4x8xf32>, vector<144x8xf32> -> vector<144x8xf32>
      %39 = arith.addf %33, %38 : vector<144x8xf32>
      %c0_21 = arith.constant 0 : index
      %c0_22 = arith.constant 0 : index
      %40 = vector.load %arg9[%c0_21, %c0_22] : memref<144x8xf32, #tpu.memory_space<vmem>>, vector<144x8xf32>
      tpu.vector_store %arg9[%c0_21, %c0_22], %39 {strides = array<i32>} : memref<144x8xf32, #tpu.memory_space<vmem>>, vector<144x8xf32>,
    } else {
    }
    %c1_i32 = arith.constant 1 : i32
    %6 = arith.cmpi eq, %arg2, %c1_i32 : i32
    %7 = arith.extui %6 : i1 to i32
    %c0_i32_3 = arith.constant 0 : i32
    %8 = arith.cmpi ne, %7, %c0_i32_3 : i32
    scf.if %8 {
      %c0 = arith.constant 0 : index
      %c0_13 = arith.constant 0 : index
      %33 = vector.load %arg9[%c0, %c0_13] : memref<144x8xf32, #tpu.memory_space<vmem>>, vector<144x8xf32>
      %c0_14 = arith.constant 0 : index
      %c0_15 = arith.constant 0 : index
      %c1 = arith.constant 1 : index
      %c0_16 = arith.constant 0 : index
      %34 = vector.load %arg3[%c0_14, %c0_15, %c1, %c0_16] : memref<1x1x198x4xf32, #tpu.memory_space<vmem>>, vector<1x1x144x4xf32>
      %35 = vector.shape_cast %34 : vector<1x1x144x4xf32> to vector<144x4xf32>
      %c0_17 = arith.constant 0 : index
      %c0_18 = arith.constant 0 : index
      %c0_19 = arith.constant 0 : index
      %36 = vector.load %arg4[%c0_17, %c0_18, %c0_19] : memref<1x4x8xf32, #tpu.memory_space<vmem>>, vector<1x4x8xf32>
      %37 = vector.shape_cast %36 : vector<1x4x8xf32> to vector<4x8xf32>
      %cst = arith.constant dense<0.000000e+00> : vector<144x8xf32>
      %38 = tpu.matmul %35, %37, %cst {dimension_numbers = #tpu.dot_dimension_numbers<[1], [0], [0], [1], [0, 0, 1, 1], [], []>} : vector<144x4xf32>, vector<4x8xf32>, vector<144x8xf32> -> vector<144x8xf32>
      %39 = arith.addf %33, %38 : vector<144x8xf32>
      %c0_20 = arith.constant 0 : index
      %c0_21 = arith.constant 0 : index
      %40 = vector.load %arg9[%c0_20, %c0_21] : memref<144x8xf32, #tpu.memory_space<vmem>>, vector<144x8xf32>
      tpu.vector_store %arg9[%c0_20, %c0_21], %39 {strides = array<i32>} : memref<144x8xf32, #tpu.memory_space<vmem>>, vector<144x8xf32>,
    } else {
    }
    %c2_i32 = arith.constant 2 : i32
    %9 = arith.cmpi eq, %arg2, %c2_i32 : i32
    %10 = arith.extui %9 : i1 to i32
    %c0_i32_4 = arith.constant 0 : i32
    %11 = arith.cmpi ne, %10, %c0_i32_4 : i32
    scf.if %11 {
      %c0 = arith.constant 0 : index
      %c0_13 = arith.constant 0 : index
      %33 = vector.load %arg9[%c0, %c0_13] : memref<144x8xf32, #tpu.memory_space<vmem>>, vector<144x8xf32>
      %c0_14 = arith.constant 0 : index
      %c0_15 = arith.constant 0 : index
      %c2 = arith.constant 2 : index
      %c0_16 = arith.constant 0 : index
      %34 = vector.load %arg3[%c0_14, %c0_15, %c2, %c0_16] : memref<1x1x198x4xf32, #tpu.memory_space<vmem>>, vector<1x1x144x4xf32>
      %35 = vector.shape_cast %34 : vector<1x1x144x4xf32> to vector<144x4xf32>
      %c0_17 = arith.constant 0 : index
      %c0_18 = arith.constant 0 : index
      %c0_19 = arith.constant 0 : index
      %36 = vector.load %arg4[%c0_17, %c0_18, %c0_19] : memref<1x4x8xf32, #tpu.memory_space<vmem>>, vector<1x4x8xf32>
      %37 = vector.shape_cast %36 : vector<1x4x8xf32> to vector<4x8xf32>
      %cst = arith.constant dense<0.000000e+00> : vector<144x8xf32>
      %38 = tpu.matmul %35, %37, %cst {dimension_numbers = #tpu.dot_dimension_numbers<[1], [0], [0], [1], [0, 0, 1, 1], [], []>} : vector<144x4xf32>, vector<4x8xf32>, vector<144x8xf32> -> vector<144x8xf32>
      %39 = arith.addf %33, %38 : vector<144x8xf32>
      %c0_20 = arith.constant 0 : index
      %c0_21 = arith.constant 0 : index
      %40 = vector.load %arg9[%c0_20, %c0_21] : memref<144x8xf32, #tpu.memory_space<vmem>>, vector<144x8xf32>
      tpu.vector_store %arg9[%c0_20, %c0_21], %39 {strides = array<i32>} : memref<144x8xf32, #tpu.memory_space<vmem>>, vector<144x8xf32>,
    } else {
    }
    %c3_i32 = arith.constant 3 : i32
    %12 = arith.cmpi eq, %arg2, %c3_i32 : i32
    %13 = arith.extui %12 : i1 to i32
    %c0_i32_5 = arith.constant 0 : i32
    %14 = arith.cmpi ne, %13, %c0_i32_5 : i32
    scf.if %14 {
      %c0 = arith.constant 0 : index
      %c0_13 = arith.constant 0 : index
      %33 = vector.load %arg9[%c0, %c0_13] : memref<144x8xf32, #tpu.memory_space<vmem>>, vector<144x8xf32>
      %c0_14 = arith.constant 0 : index
      %c0_15 = arith.constant 0 : index
      %c18 = arith.constant 18 : index
      %c0_16 = arith.constant 0 : index
      %34 = vector.load %arg3[%c0_14, %c0_15, %c18, %c0_16] : memref<1x1x198x4xf32, #tpu.memory_space<vmem>>, vector<1x1x144x4xf32>
      %35 = vector.shape_cast %34 : vector<1x1x144x4xf32> to vector<144x4xf32>
      %c0_17 = arith.constant 0 : index
      %c0_18 = arith.constant 0 : index
      %c0_19 = arith.constant 0 : index
      %36 = vector.load %arg4[%c0_17, %c0_18, %c0_19] : memref<1x4x8xf32, #tpu.memory_space<vmem>>, vector<1x4x8xf32>
      %37 = vector.shape_cast %36 : vector<1x4x8xf32> to vector<4x8xf32>
      %cst = arith.constant dense<0.000000e+00> : vector<144x8xf32>
      %38 = tpu.matmul %35, %37, %cst {dimension_numbers = #tpu.dot_dimension_numbers<[1], [0], [0], [1], [0, 0, 1, 1], [], []>} : vector<144x4xf32>, vector<4x8xf32>, vector<144x8xf32> -> vector<144x8xf32>
      %39 = arith.addf %33, %38 : vector<144x8xf32>
      %c0_20 = arith.constant 0 : index
      %c0_21 = arith.constant 0 : index
      %40 = vector.load %arg9[%c0_20, %c0_21] : memref<144x8xf32, #tpu.memory_space<vmem>>, vector<144x8xf32>
      tpu.vector_store %arg9[%c0_20, %c0_21], %39 {strides = array<i32>} : memref<144x8xf32, #tpu.memory_space<vmem>>, vector<144x8xf32>,
    } else {
    }
    %c4_i32 = arith.constant 4 : i32
    %15 = arith.cmpi eq, %arg2, %c4_i32 : i32
    %16 = arith.extui %15 : i1 to i32
    %c0_i32_6 = arith.constant 0 : i32
    %17 = arith.cmpi ne, %16, %c0_i32_6 : i32
    scf.if %17 {
      %c0 = arith.constant 0 : index
      %c0_13 = arith.constant 0 : index
      %33 = vector.load %arg9[%c0, %c0_13] : memref<144x8xf32, #tpu.memory_space<vmem>>, vector<144x8xf32>
      %c0_14 = arith.constant 0 : index
      %c0_15 = arith.constant 0 : index
      %c19 = arith.constant 19 : index
      %c0_16 = arith.constant 0 : index
      %34 = vector.load %arg3[%c0_14, %c0_15, %c19, %c0_16] : memref<1x1x198x4xf32, #tpu.memory_space<vmem>>, vector<1x1x144x4xf32>
      %35 = vector.shape_cast %34 : vector<1x1x144x4xf32> to vector<144x4xf32>
      %c0_17 = arith.constant 0 : index
      %c0_18 = arith.constant 0 : index
      %c0_19 = arith.constant 0 : index
      %36 = vector.load %arg4[%c0_17, %c0_18, %c0_19] : memref<1x4x8xf32, #tpu.memory_space<vmem>>, vector<1x4x8xf32>
      %37 = vector.shape_cast %36 : vector<1x4x8xf32> to vector<4x8xf32>
      %cst = arith.constant dense<0.000000e+00> : vector<144x8xf32>
      %38 = tpu.matmul %35, %37, %cst {dimension_numbers = #tpu.dot_dimension_numbers<[1], [0], [0], [1], [0, 0, 1, 1], [], []>} : vector<144x4xf32>, vector<4x8xf32>, vector<144x8xf32> -> vector<144x8xf32>
      %39 = arith.addf %33, %38 : vector<144x8xf32>
      %c0_20 = arith.constant 0 : index
      %c0_21 = arith.constant 0 : index
      %40 = vector.load %arg9[%c0_20, %c0_21] : memref<144x8xf32, #tpu.memory_space<vmem>>, vector<144x8xf32>
      tpu.vector_store %arg9[%c0_20, %c0_21], %39 {strides = array<i32>} : memref<144x8xf32, #tpu.memory_space<vmem>>, vector<144x8xf32>,
    } else {
    }
    %c5_i32 = arith.constant 5 : i32
    %18 = arith.cmpi eq, %arg2, %c5_i32 : i32
    %19 = arith.extui %18 : i1 to i32
    %c0_i32_7 = arith.constant 0 : i32
    %20 = arith.cmpi ne, %19, %c0_i32_7 : i32
    scf.if %20 {
      %c0 = arith.constant 0 : index
      %c0_13 = arith.constant 0 : index
      %33 = vector.load %arg9[%c0, %c0_13] : memref<144x8xf32, #tpu.memory_space<vmem>>, vector<144x8xf32>
      %c0_14 = arith.constant 0 : index
      %c0_15 = arith.constant 0 : index
      %c20 = arith.constant 20 : index
      %c0_16 = arith.constant 0 : index
      %34 = vector.load %arg3[%c0_14, %c0_15, %c20, %c0_16] : memref<1x1x198x4xf32, #tpu.memory_space<vmem>>, vector<1x1x144x4xf32>
      %35 = vector.shape_cast %34 : vector<1x1x144x4xf32> to vector<144x4xf32>
      %c0_17 = arith.constant 0 : index
      %c0_18 = arith.constant 0 : index
      %c0_19 = arith.constant 0 : index
      %36 = vector.load %arg4[%c0_17, %c0_18, %c0_19] : memref<1x4x8xf32, #tpu.memory_space<vmem>>, vector<1x4x8xf32>
      %37 = vector.shape_cast %36 : vector<1x4x8xf32> to vector<4x8xf32>
      %cst = arith.constant dense<0.000000e+00> : vector<144x8xf32>
      %38 = tpu.matmul %35, %37, %cst {dimension_numbers = #tpu.dot_dimension_numbers<[1], [0], [0], [1], [0, 0, 1, 1], [], []>} : vector<144x4xf32>, vector<4x8xf32>, vector<144x8xf32> -> vector<144x8xf32>
      %39 = arith.addf %33, %38 : vector<144x8xf32>
      %c0_20 = arith.constant 0 : index
      %c0_21 = arith.constant 0 : index
      %40 = vector.load %arg9[%c0_20, %c0_21] : memref<144x8xf32, #tpu.memory_space<vmem>>, vector<144x8xf32>
      tpu.vector_store %arg9[%c0_20, %c0_21], %39 {strides = array<i32>} : memref<144x8xf32, #tpu.memory_space<vmem>>, vector<144x8xf32>,
    } else {
    }
    %c6_i32 = arith.constant 6 : i32
    %21 = arith.cmpi eq, %arg2, %c6_i32 : i32
    %22 = arith.extui %21 : i1 to i32
    %c0_i32_8 = arith.constant 0 : i32
    %23 = arith.cmpi ne, %22, %c0_i32_8 : i32
    scf.if %23 {
      %c0 = arith.constant 0 : index
      %c0_13 = arith.constant 0 : index
      %33 = vector.load %arg9[%c0, %c0_13] : memref<144x8xf32, #tpu.memory_space<vmem>>, vector<144x8xf32>
      %c0_14 = arith.constant 0 : index
      %c0_15 = arith.constant 0 : index
      %c36 = arith.constant 36 : index
      %c0_16 = arith.constant 0 : index
      %34 = vector.load %arg3[%c0_14, %c0_15, %c36, %c0_16] : memref<1x1x198x4xf32, #tpu.memory_space<vmem>>, vector<1x1x144x4xf32>
      %35 = vector.shape_cast %34 : vector<1x1x144x4xf32> to vector<144x4xf32>
      %c0_17 = arith.constant 0 : index
      %c0_18 = arith.constant 0 : index
      %c0_19 = arith.constant 0 : index
      %36 = vector.load %arg4[%c0_17, %c0_18, %c0_19] : memref<1x4x8xf32, #tpu.memory_space<vmem>>, vector<1x4x8xf32>
      %37 = vector.shape_cast %36 : vector<1x4x8xf32> to vector<4x8xf32>
      %cst = arith.constant dense<0.000000e+00> : vector<144x8xf32>
      %38 = tpu.matmul %35, %37, %cst {dimension_numbers = #tpu.dot_dimension_numbers<[1], [0], [0], [1], [0, 0, 1, 1], [], []>} : vector<144x4xf32>, vector<4x8xf32>, vector<144x8xf32> -> vector<144x8xf32>
      %39 = arith.addf %33, %38 : vector<144x8xf32>
      %c0_20 = arith.constant 0 : index
      %c0_21 = arith.constant 0 : index
      %40 = vector.load %arg9[%c0_20, %c0_21] : memref<144x8xf32, #tpu.memory_space<vmem>>, vector<144x8xf32>
      tpu.vector_store %arg9[%c0_20, %c0_21], %39 {strides = array<i32>} : memref<144x8xf32, #tpu.memory_space<vmem>>, vector<144x8xf32>,
    } else {
    }
    %c7_i32 = arith.constant 7 : i32
    %24 = arith.cmpi eq, %arg2, %c7_i32 : i32
    %25 = arith.extui %24 : i1 to i32
    %c0_i32_9 = arith.constant 0 : i32
    %26 = arith.cmpi ne, %25, %c0_i32_9 : i32
    scf.if %26 {
      %c0 = arith.constant 0 : index
      %c0_13 = arith.constant 0 : index
      %33 = vector.load %arg9[%c0, %c0_13] : memref<144x8xf32, #tpu.memory_space<vmem>>, vector<144x8xf32>
      %c0_14 = arith.constant 0 : index
      %c0_15 = arith.constant 0 : index
      %c37 = arith.constant 37 : index
      %c0_16 = arith.constant 0 : index
      %34 = vector.load %arg3[%c0_14, %c0_15, %c37, %c0_16] : memref<1x1x198x4xf32, #tpu.memory_space<vmem>>, vector<1x1x144x4xf32>
      %35 = vector.shape_cast %34 : vector<1x1x144x4xf32> to vector<144x4xf32>
      %c0_17 = arith.constant 0 : index
      %c0_18 = arith.constant 0 : index
      %c0_19 = arith.constant 0 : index
      %36 = vector.load %arg4[%c0_17, %c0_18, %c0_19] : memref<1x4x8xf32, #tpu.memory_space<vmem>>, vector<1x4x8xf32>
      %37 = vector.shape_cast %36 : vector<1x4x8xf32> to vector<4x8xf32>
      %cst = arith.constant dense<0.000000e+00> : vector<144x8xf32>
      %38 = tpu.matmul %35, %37, %cst {dimension_numbers = #tpu.dot_dimension_numbers<[1], [0], [0], [1], [0, 0, 1, 1], [], []>} : vector<144x4xf32>, vector<4x8xf32>, vector<144x8xf32> -> vector<144x8xf32>
      %39 = arith.addf %33, %38 : vector<144x8xf32>
      %c0_20 = arith.constant 0 : index
      %c0_21 = arith.constant 0 : index
      %40 = vector.load %arg9[%c0_20, %c0_21] : memref<144x8xf32, #tpu.memory_space<vmem>>, vector<144x8xf32>
      tpu.vector_store %arg9[%c0_20, %c0_21], %39 {strides = array<i32>} : memref<144x8xf32, #tpu.memory_space<vmem>>, vector<144x8xf32>,
    } else {
    }
    %c8_i32 = arith.constant 8 : i32
    %27 = arith.cmpi eq, %arg2, %c8_i32 : i32
    %28 = arith.extui %27 : i1 to i32
    %c0_i32_10 = arith.constant 0 : i32
    %29 = arith.cmpi ne, %28, %c0_i32_10 : i32
    scf.if %29 {
      %c0 = arith.constant 0 : index
      %c0_13 = arith.constant 0 : index
      %33 = vector.load %arg9[%c0, %c0_13] : memref<144x8xf32, #tpu.memory_space<vmem>>, vector<144x8xf32>
      %c0_14 = arith.constant 0 : index
      %c0_15 = arith.constant 0 : index
      %c38 = arith.constant 38 : index
      %c0_16 = arith.constant 0 : index
      %34 = vector.load %arg3[%c0_14, %c0_15, %c38, %c0_16] : memref<1x1x198x4xf32, #tpu.memory_space<vmem>>, vector<1x1x144x4xf32>
      %35 = vector.shape_cast %34 : vector<1x1x144x4xf32> to vector<144x4xf32>
      %c0_17 = arith.constant 0 : index
      %c0_18 = arith.constant 0 : index
      %c0_19 = arith.constant 0 : index
      %36 = vector.load %arg4[%c0_17, %c0_18, %c0_19] : memref<1x4x8xf32, #tpu.memory_space<vmem>>, vector<1x4x8xf32>
      %37 = vector.shape_cast %36 : vector<1x4x8xf32> to vector<4x8xf32>
      %cst = arith.constant dense<0.000000e+00> : vector<144x8xf32>
      %38 = tpu.matmul %35, %37, %cst {dimension_numbers = #tpu.dot_dimension_numbers<[1], [0], [0], [1], [0, 0, 1, 1], [], []>} : vector<144x4xf32>, vector<4x8xf32>, vector<144x8xf32> -> vector<144x8xf32>
      %39 = arith.addf %33, %38 : vector<144x8xf32>
      %c0_20 = arith.constant 0 : index
      %c0_21 = arith.constant 0 : index
      %40 = vector.load %arg9[%c0_20, %c0_21] : memref<144x8xf32, #tpu.memory_space<vmem>>, vector<144x8xf32>
      tpu.vector_store %arg9[%c0_20, %c0_21], %39 {strides = array<i32>} : memref<144x8xf32, #tpu.memory_space<vmem>>, vector<144x8xf32>,
    } else {
    }
    %c8_i32_11 = arith.constant 8 : i32
    %30 = arith.cmpi eq, %arg2, %c8_i32_11 : i32
    %31 = arith.extui %30 : i1 to i32
    %c0_i32_12 = arith.constant 0 : i32
    %32 = arith.cmpi ne, %31, %c0_i32_12 : i32
    scf.if %32 {
      %c0 = arith.constant 0 : index
      %c0_13 = arith.constant 0 : index
      %33 = vector.load %arg9[%c0, %c0_13] : memref<144x8xf32, #tpu.memory_space<vmem>>, vector<144x8xf32>
      %c0_14 = arith.constant 0 : index
      %c0_15 = arith.constant 0 : index
      %34 = vector.load %arg5[%c0_14, %c0_15] : memref<1x8xf32, #tpu.memory_space<vmem>>, vector<1x8xf32>
      %35 = vector.broadcast %34 : vector<1x8xf32> to vector<144x8xf32>
      %36 = arith.addf %33, %35 : vector<144x8xf32>
      %cst = arith.constant 1.000000e-01 : f32
      %37 = vector.broadcast %cst : f32 to vector<144x8xf32>
      %38 = arith.mulf %37, %36 : vector<144x8xf32>
      %39 = arith.maximumf %36, %38 : vector<144x8xf32>
      %c0_16 = arith.constant 0 : index
      %c0_17 = arith.constant 0 : index
      %40 = vector.load %arg6[%c0_16, %c0_17] : memref<8x128xf32, #tpu.memory_space<vmem>>, vector<8x128xf32>
      %cst_18 = arith.constant dense<0.000000e+00> : vector<144x128xf32>
      %41 = tpu.matmul %39, %40, %cst_18 {dimension_numbers = #tpu.dot_dimension_numbers<[1], [0], [0], [1], [0, 0, 1, 1], [], []>} : vector<144x8xf32>, vector<8x128xf32>, vector<144x128xf32> -> vector<144x128xf32>
      %c0_19 = arith.constant 0 : index
      %c0_20 = arith.constant 0 : index
      %42 = vector.load %arg7[%c0_19, %c0_20] : memref<1x128xf32, #tpu.memory_space<vmem>>, vector<1x128xf32>
      %43 = vector.broadcast %42 : vector<1x128xf32> to vector<144x128xf32>
      %44 = arith.addf %41, %43 : vector<144x128xf32>
      %c0_21 = arith.constant 0 : index
      %c0_22 = arith.constant 0 : index
      %c0_23 = arith.constant 0 : index
      %45 = vector.load %arg8[%c0_21, %c0_22, %c0_23] : memref<1x144x128xf32, #tpu.memory_space<vmem>>, vector<1x144x128xf32>
      %46 = vector.shape_cast %45 : vector<1x144x128xf32> to vector<144x128xf32>
      %47 = vector.shape_cast %44 : vector<144x128xf32> to vector<1x144x128xf32>
      tpu.vector_store %arg8[%c0_21, %c0_22, %c0_23], %47 {strides = array<i32>} : memref<1x144x128xf32, #tpu.memory_space<vmem>>, vector<1x144x128xf32>,
    } else {
    }
    return
  }
  func.func @transform_0(%arg0: i32, %arg1: i32, %arg2: i32) -> (i32, i32, i32, i32) {
    %c0_i32 = arith.constant 0 : i32
    %c0_i32_0 = arith.constant 0 : i32
    %c0_i32_1 = arith.constant 0 : i32
    return %arg0, %arg1, %c0_i32, %c0_i32_0 : i32, i32, i32, i32
  }
  func.func @transform_1(%arg0: i32, %arg1: i32, %arg2: i32) -> (i32, i32, i32) {
    %c0_i32 = arith.constant 0 : i32
    %c0_i32_0 = arith.constant 0 : i32
    %c0_i32_1 = arith.constant 0 : i32
    return %arg2, %c0_i32, %c0_i32_0 : i32, i32, i32
  }
  func.func @transform_2(%arg0: i32, %arg1: i32, %arg2: i32) -> (i32, i32) {
    %c0_i32 = arith.constant 0 : i32
    %c0_i32_0 = arith.constant 0 : i32
    %c0_i32_1 = arith.constant 0 : i32
    return %c0_i32, %c0_i32_0 : i32, i32
  }
  func.func @transform_3(%arg0: i32, %arg1: i32, %arg2: i32) -> (i32, i32) {
    %c0_i32 = arith.constant 0 : i32
    %c0_i32_0 = arith.constant 0 : i32
    %c0_i32_1 = arith.constant 0 : i32
    return %c0_i32, %c0_i32_0 : i32, i32
  }
  func.func @transform_4(%arg0: i32, %arg1: i32, %arg2: i32) -> (i32, i32) {
    %c0_i32 = arith.constant 0 : i32
    %c0_i32_0 = arith.constant 0 : i32
    %c0_i32_1 = arith.constant 0 : i32
    return %c0_i32, %c0_i32_0 : i32, i32
  }
  func.func @transform_5(%arg0: i32, %arg1: i32, %arg2: i32) -> (i32, i32, i32) {
    %c0_i32 = arith.constant 0 : i32
    %c0_i32_0 = arith.constant 0 : i32
    return %arg0, %arg1, %c0_i32 : i32, i32, i32
  }
}

module attributes {stable_mosaic.version = 11 : i64} {
  func.func @_scale_pred_kernel(%arg0: i32, %arg1: i32, %arg2: i32, %arg3: memref<1x1x198x4xf32, #tpu.memory_space<vmem>>, %arg4: memref<1x4x8xf32, #tpu.memory_space<vmem>>, %arg5: memref<1x8xf32, #tpu.memory_space<vmem>>, %arg6: memref<8x128xf32, #tpu.memory_space<vmem>>, %arg7: memref<1x128xf32, #tpu.memory_space<vmem>>, %arg8: memref<1x144x128xf32, #tpu.memory_space<vmem>>, %arg9: memref<144x8xf32, #tpu.memory_space<vmem>>) attributes {dimension_semantics = [#tpu.dimension_semantics<parallel>, #tpu.dimension_semantics<parallel>, #tpu.dimension_semantics<arbitrary>], iteration_bounds = array<i64: 2, 2, 9>, scalar_prefetch = 0 : i64, scratch_operands = 1 : i64, tpu.core_type = #tpu.core_type<tc>, window_params = [{transform_indices = @transform_0, window_bounds = array<i64: 1, 1, 198, 4>}, {transform_indices = @transform_1, window_bounds = array<i64: 1, 4, 8>}, {pipeline_mode = #tpu.pipeline_mode<synchronous>, transform_indices = @transform_2, window_bounds = array<i64: 1, 8>}, {pipeline_mode = #tpu.pipeline_mode<synchronous>, transform_indices = @transform_3, window_bounds = array<i64: 8, 128>}, {pipeline_mode = #tpu.pipeline_mode<synchronous>, transform_indices = @transform_4, window_bounds = array<i64: 1, 128>}, {transform_indices = @transform_5, window_bounds = array<i64: 1, 144, 128>}]} {
    %c0_i32 = arith.constant 0 : i32
    %0 = arith.cmpi eq, %arg2, %c0_i32 : i32
    %1 = arith.extui %0 : i1 to i32
    %c0_i32_0 = arith.constant 0 : i32
    %2 = arith.cmpi ne, %1, %c0_i32_0 : i32
    scf.if %2 {
      %cst = arith.constant 0.000000e+00 : f32
      %33 = vector.broadcast %cst : f32 to vector<144x8xf32>
      %c0 = arith.constant 0 : index
      %c0_13 = arith.constant 0 : index
      %34 = vector.load %arg9[%c0, %c0_13] : memref<144x8xf32, #tpu.memory_space<vmem>>, vector<144x8xf32>
      tpu.vector_store %arg9[%c0, %c0_13], %33 {strides = array<i32>} : memref<144x8xf32, #tpu.memory_space<vmem>>, vector<144x8xf32>,
    } else {
    }
    %c0_i32_1 = arith.constant 0 : i32
    %3 = arith.cmpi eq, %arg2, %c0_i32_1 : i32
    %4 = arith.extui %3 : i1 to i32
    %c0_i32_2 = arith.constant 0 : i32
    %5 = arith.cmpi ne, %4, %c0_i32_2 : i32
    scf.if %5 {
      %c0 = arith.constant 0 : index
      %c0_13 = arith.constant 0 : index
      %33 = vector.load %arg9[%c0, %c0_13] : memref<144x8xf32, #tpu.memory_space<vmem>>, vector<144x8xf32>
      %c0_14 = arith.constant 0 : index
      %c0_15 = arith.constant 0 : index
      %c0_16 = arith.constant 0 : index
      %c0_17 = arith.constant 0 : index
      %34 = vector.load %arg3[%c0_14, %c0_15, %c0_16, %c0_17] : memref<1x1x198x4xf32, #tpu.memory_space<vmem>>, vector<1x1x144x4xf32>
      %35 = vector.shape_cast %34 : vector<1x1x144x4xf32> to vector<144x4xf32>
      %c0_18 = arith.constant 0 : index
      %c0_19 = arith.constant 0 : index
      %c0_20 = arith.constant 0 : index
      %36 = vector.load %arg4[%c0_18, %c0_19, %c0_20] : memref<1x4x8xf32, #tpu.memory_space<vmem>>, vector<1x4x8xf32>
      %37 = vector.shape_cast %36 : vector<1x4x8xf32> to vector<4x8xf32>
      %cst = arith.constant dense<0.000000e+00> : vector<144x8xf32>
      %38 = tpu.matmul %35, %37, %cst {dimension_numbers = #tpu.dot_dimension_numbers<[1], [0], [0], [1], [0, 0, 1, 1], [], []>} : vector<144x4xf32>, vector<4x8xf32>, vector<144x8xf32> -> vector<144x8xf32>
      %39 = arith.addf %33, %38 : vector<144x8xf32>
      %c0_21 = arith.constant 0 : index
      %c0_22 = arith.constant 0 : index
      %40 = vector.load %arg9[%c0_21, %c0_22] : memref<144x8xf32, #tpu.memory_space<vmem>>, vector<144x8xf32>
      tpu.vector_store %arg9[%c0_21, %c0_22], %39 {strides = array<i32>} : memref<144x8xf32, #tpu.memory_space<vmem>>, vector<144x8xf32>,
    } else {
    }
    %c1_i32 = arith.constant 1 : i32
    %6 = arith.cmpi eq, %arg2, %c1_i32 : i32
    %7 = arith.extui %6 : i1 to i32
    %c0_i32_3 = arith.constant 0 : i32
    %8 = arith.cmpi ne, %7, %c0_i32_3 : i32
    scf.if %8 {
      %c0 = arith.constant 0 : index
      %c0_13 = arith.constant 0 : index
      %33 = vector.load %arg9[%c0, %c0_13] : memref<144x8xf32, #tpu.memory_space<vmem>>, vector<144x8xf32>
      %c0_14 = arith.constant 0 : index
      %c0_15 = arith.constant 0 : index
      %c1 = arith.constant 1 : index
      %c0_16 = arith.constant 0 : index
      %34 = vector.load %arg3[%c0_14, %c0_15, %c1, %c0_16] : memref<1x1x198x4xf32, #tpu.memory_space<vmem>>, vector<1x1x144x4xf32>
      %35 = vector.shape_cast %34 : vector<1x1x144x4xf32> to vector<144x4xf32>
      %c0_17 = arith.constant 0 : index
      %c0_18 = arith.constant 0 : index
      %c0_19 = arith.constant 0 : index
      %36 = vector.load %arg4[%c0_17, %c0_18, %c0_19] : memref<1x4x8xf32, #tpu.memory_space<vmem>>, vector<1x4x8xf32>
      %37 = vector.shape_cast %36 : vector<1x4x8xf32> to vector<4x8xf32>
      %cst = arith.constant dense<0.000000e+00> : vector<144x8xf32>
      %38 = tpu.matmul %35, %37, %cst {dimension_numbers = #tpu.dot_dimension_numbers<[1], [0], [0], [1], [0, 0, 1, 1], [], []>} : vector<144x4xf32>, vector<4x8xf32>, vector<144x8xf32> -> vector<144x8xf32>
      %39 = arith.addf %33, %38 : vector<144x8xf32>
      %c0_20 = arith.constant 0 : index
      %c0_21 = arith.constant 0 : index
      %40 = vector.load %arg9[%c0_20, %c0_21] : memref<144x8xf32, #tpu.memory_space<vmem>>, vector<144x8xf32>
      tpu.vector_store %arg9[%c0_20, %c0_21], %39 {strides = array<i32>} : memref<144x8xf32, #tpu.memory_space<vmem>>, vector<144x8xf32>,
    } else {
    }
    %c2_i32 = arith.constant 2 : i32
    %9 = arith.cmpi eq, %arg2, %c2_i32 : i32
    %10 = arith.extui %9 : i1 to i32
    %c0_i32_4 = arith.constant 0 : i32
    %11 = arith.cmpi ne, %10, %c0_i32_4 : i32
    scf.if %11 {
      %c0 = arith.constant 0 : index
      %c0_13 = arith.constant 0 : index
      %33 = vector.load %arg9[%c0, %c0_13] : memref<144x8xf32, #tpu.memory_space<vmem>>, vector<144x8xf32>
      %c0_14 = arith.constant 0 : index
      %c0_15 = arith.constant 0 : index
      %c2 = arith.constant 2 : index
      %c0_16 = arith.constant 0 : index
      %34 = vector.load %arg3[%c0_14, %c0_15, %c2, %c0_16] : memref<1x1x198x4xf32, #tpu.memory_space<vmem>>, vector<1x1x144x4xf32>
      %35 = vector.shape_cast %34 : vector<1x1x144x4xf32> to vector<144x4xf32>
      %c0_17 = arith.constant 0 : index
      %c0_18 = arith.constant 0 : index
      %c0_19 = arith.constant 0 : index
      %36 = vector.load %arg4[%c0_17, %c0_18, %c0_19] : memref<1x4x8xf32, #tpu.memory_space<vmem>>, vector<1x4x8xf32>
      %37 = vector.shape_cast %36 : vector<1x4x8xf32> to vector<4x8xf32>
      %cst = arith.constant dense<0.000000e+00> : vector<144x8xf32>
      %38 = tpu.matmul %35, %37, %cst {dimension_numbers = #tpu.dot_dimension_numbers<[1], [0], [0], [1], [0, 0, 1, 1], [], []>} : vector<144x4xf32>, vector<4x8xf32>, vector<144x8xf32> -> vector<144x8xf32>
      %39 = arith.addf %33, %38 : vector<144x8xf32>
      %c0_20 = arith.constant 0 : index
      %c0_21 = arith.constant 0 : index
      %40 = vector.load %arg9[%c0_20, %c0_21] : memref<144x8xf32, #tpu.memory_space<vmem>>, vector<144x8xf32>
      tpu.vector_store %arg9[%c0_20, %c0_21], %39 {strides = array<i32>} : memref<144x8xf32, #tpu.memory_space<vmem>>, vector<144x8xf32>,
    } else {
    }
    %c3_i32 = arith.constant 3 : i32
    %12 = arith.cmpi eq, %arg2, %c3_i32 : i32
    %13 = arith.extui %12 : i1 to i32
    %c0_i32_5 = arith.constant 0 : i32
    %14 = arith.cmpi ne, %13, %c0_i32_5 : i32
    scf.if %14 {
      %c0 = arith.constant 0 : index
      %c0_13 = arith.constant 0 : index
      %33 = vector.load %arg9[%c0, %c0_13] : memref<144x8xf32, #tpu.memory_space<vmem>>, vector<144x8xf32>
      %c0_14 = arith.constant 0 : index
      %c0_15 = arith.constant 0 : index
      %c18 = arith.constant 18 : index
      %c0_16 = arith.constant 0 : index
      %34 = vector.load %arg3[%c0_14, %c0_15, %c18, %c0_16] : memref<1x1x198x4xf32, #tpu.memory_space<vmem>>, vector<1x1x144x4xf32>
      %35 = vector.shape_cast %34 : vector<1x1x144x4xf32> to vector<144x4xf32>
      %c0_17 = arith.constant 0 : index
      %c0_18 = arith.constant 0 : index
      %c0_19 = arith.constant 0 : index
      %36 = vector.load %arg4[%c0_17, %c0_18, %c0_19] : memref<1x4x8xf32, #tpu.memory_space<vmem>>, vector<1x4x8xf32>
      %37 = vector.shape_cast %36 : vector<1x4x8xf32> to vector<4x8xf32>
      %cst = arith.constant dense<0.000000e+00> : vector<144x8xf32>
      %38 = tpu.matmul %35, %37, %cst {dimension_numbers = #tpu.dot_dimension_numbers<[1], [0], [0], [1], [0, 0, 1, 1], [], []>} : vector<144x4xf32>, vector<4x8xf32>, vector<144x8xf32> -> vector<144x8xf32>
      %39 = arith.addf %33, %38 : vector<144x8xf32>
      %c0_20 = arith.constant 0 : index
      %c0_21 = arith.constant 0 : index
      %40 = vector.load %arg9[%c0_20, %c0_21] : memref<144x8xf32, #tpu.memory_space<vmem>>, vector<144x8xf32>
      tpu.vector_store %arg9[%c0_20, %c0_21], %39 {strides = array<i32>} : memref<144x8xf32, #tpu.memory_space<vmem>>, vector<144x8xf32>,
    } else {
    }
    %c4_i32 = arith.constant 4 : i32
    %15 = arith.cmpi eq, %arg2, %c4_i32 : i32
    %16 = arith.extui %15 : i1 to i32
    %c0_i32_6 = arith.constant 0 : i32
    %17 = arith.cmpi ne, %16, %c0_i32_6 : i32
    scf.if %17 {
      %c0 = arith.constant 0 : index
      %c0_13 = arith.constant 0 : index
      %33 = vector.load %arg9[%c0, %c0_13] : memref<144x8xf32, #tpu.memory_space<vmem>>, vector<144x8xf32>
      %c0_14 = arith.constant 0 : index
      %c0_15 = arith.constant 0 : index
      %c19 = arith.constant 19 : index
      %c0_16 = arith.constant 0 : index
      %34 = vector.load %arg3[%c0_14, %c0_15, %c19, %c0_16] : memref<1x1x198x4xf32, #tpu.memory_space<vmem>>, vector<1x1x144x4xf32>
      %35 = vector.shape_cast %34 : vector<1x1x144x4xf32> to vector<144x4xf32>
      %c0_17 = arith.constant 0 : index
      %c0_18 = arith.constant 0 : index
      %c0_19 = arith.constant 0 : index
      %36 = vector.load %arg4[%c0_17, %c0_18, %c0_19] : memref<1x4x8xf32, #tpu.memory_space<vmem>>, vector<1x4x8xf32>
      %37 = vector.shape_cast %36 : vector<1x4x8xf32> to vector<4x8xf32>
      %cst = arith.constant dense<0.000000e+00> : vector<144x8xf32>
      %38 = tpu.matmul %35, %37, %cst {dimension_numbers = #tpu.dot_dimension_numbers<[1], [0], [0], [1], [0, 0, 1, 1], [], []>} : vector<144x4xf32>, vector<4x8xf32>, vector<144x8xf32> -> vector<144x8xf32>
      %39 = arith.addf %33, %38 : vector<144x8xf32>
      %c0_20 = arith.constant 0 : index
      %c0_21 = arith.constant 0 : index
      %40 = vector.load %arg9[%c0_20, %c0_21] : memref<144x8xf32, #tpu.memory_space<vmem>>, vector<144x8xf32>
      tpu.vector_store %arg9[%c0_20, %c0_21], %39 {strides = array<i32>} : memref<144x8xf32, #tpu.memory_space<vmem>>, vector<144x8xf32>,
    } else {
    }
    %c5_i32 = arith.constant 5 : i32
    %18 = arith.cmpi eq, %arg2, %c5_i32 : i32
    %19 = arith.extui %18 : i1 to i32
    %c0_i32_7 = arith.constant 0 : i32
    %20 = arith.cmpi ne, %19, %c0_i32_7 : i32
    scf.if %20 {
      %c0 = arith.constant 0 : index
      %c0_13 = arith.constant 0 : index
      %33 = vector.load %arg9[%c0, %c0_13] : memref<144x8xf32, #tpu.memory_space<vmem>>, vector<144x8xf32>
      %c0_14 = arith.constant 0 : index
      %c0_15 = arith.constant 0 : index
      %c20 = arith.constant 20 : index
      %c0_16 = arith.constant 0 : index
      %34 = vector.load %arg3[%c0_14, %c0_15, %c20, %c0_16] : memref<1x1x198x4xf32, #tpu.memory_space<vmem>>, vector<1x1x144x4xf32>
      %35 = vector.shape_cast %34 : vector<1x1x144x4xf32> to vector<144x4xf32>
      %c0_17 = arith.constant 0 : index
      %c0_18 = arith.constant 0 : index
      %c0_19 = arith.constant 0 : index
      %36 = vector.load %arg4[%c0_17, %c0_18, %c0_19] : memref<1x4x8xf32, #tpu.memory_space<vmem>>, vector<1x4x8xf32>
      %37 = vector.shape_cast %36 : vector<1x4x8xf32> to vector<4x8xf32>
      %cst = arith.constant dense<0.000000e+00> : vector<144x8xf32>
      %38 = tpu.matmul %35, %37, %cst {dimension_numbers = #tpu.dot_dimension_numbers<[1], [0], [0], [1], [0, 0, 1, 1], [], []>} : vector<144x4xf32>, vector<4x8xf32>, vector<144x8xf32> -> vector<144x8xf32>
      %39 = arith.addf %33, %38 : vector<144x8xf32>
      %c0_20 = arith.constant 0 : index
      %c0_21 = arith.constant 0 : index
      %40 = vector.load %arg9[%c0_20, %c0_21] : memref<144x8xf32, #tpu.memory_space<vmem>>, vector<144x8xf32>
      tpu.vector_store %arg9[%c0_20, %c0_21], %39 {strides = array<i32>} : memref<144x8xf32, #tpu.memory_space<vmem>>, vector<144x8xf32>,
    } else {
    }
    %c6_i32 = arith.constant 6 : i32
    %21 = arith.cmpi eq, %arg2, %c6_i32 : i32
    %22 = arith.extui %21 : i1 to i32
    %c0_i32_8 = arith.constant 0 : i32
    %23 = arith.cmpi ne, %22, %c0_i32_8 : i32
    scf.if %23 {
      %c0 = arith.constant 0 : index
      %c0_13 = arith.constant 0 : index
      %33 = vector.load %arg9[%c0, %c0_13] : memref<144x8xf32, #tpu.memory_space<vmem>>, vector<144x8xf32>
      %c0_14 = arith.constant 0 : index
      %c0_15 = arith.constant 0 : index
      %c36 = arith.constant 36 : index
      %c0_16 = arith.constant 0 : index
      %34 = vector.load %arg3[%c0_14, %c0_15, %c36, %c0_16] : memref<1x1x198x4xf32, #tpu.memory_space<vmem>>, vector<1x1x144x4xf32>
      %35 = vector.shape_cast %34 : vector<1x1x144x4xf32> to vector<144x4xf32>
      %c0_17 = arith.constant 0 : index
      %c0_18 = arith.constant 0 : index
      %c0_19 = arith.constant 0 : index
      %36 = vector.load %arg4[%c0_17, %c0_18, %c0_19] : memref<1x4x8xf32, #tpu.memory_space<vmem>>, vector<1x4x8xf32>
      %37 = vector.shape_cast %36 : vector<1x4x8xf32> to vector<4x8xf32>
      %cst = arith.constant dense<0.000000e+00> : vector<144x8xf32>
      %38 = tpu.matmul %35, %37, %cst {dimension_numbers = #tpu.dot_dimension_numbers<[1], [0], [0], [1], [0, 0, 1, 1], [], []>} : vector<144x4xf32>, vector<4x8xf32>, vector<144x8xf32> -> vector<144x8xf32>
      %39 = arith.addf %33, %38 : vector<144x8xf32>
      %c0_20 = arith.constant 0 : index
      %c0_21 = arith.constant 0 : index
      %40 = vector.load %arg9[%c0_20, %c0_21] : memref<144x8xf32, #tpu.memory_space<vmem>>, vector<144x8xf32>
      tpu.vector_store %arg9[%c0_20, %c0_21], %39 {strides = array<i32>} : memref<144x8xf32, #tpu.memory_space<vmem>>, vector<144x8xf32>,
    } else {
    }
    %c7_i32 = arith.constant 7 : i32
    %24 = arith.cmpi eq, %arg2, %c7_i32 : i32
    %25 = arith.extui %24 : i1 to i32
    %c0_i32_9 = arith.constant 0 : i32
    %26 = arith.cmpi ne, %25, %c0_i32_9 : i32
    scf.if %26 {
      %c0 = arith.constant 0 : index
      %c0_13 = arith.constant 0 : index
      %33 = vector.load %arg9[%c0, %c0_13] : memref<144x8xf32, #tpu.memory_space<vmem>>, vector<144x8xf32>
      %c0_14 = arith.constant 0 : index
      %c0_15 = arith.constant 0 : index
      %c37 = arith.constant 37 : index
      %c0_16 = arith.constant 0 : index
      %34 = vector.load %arg3[%c0_14, %c0_15, %c37, %c0_16] : memref<1x1x198x4xf32, #tpu.memory_space<vmem>>, vector<1x1x144x4xf32>
      %35 = vector.shape_cast %34 : vector<1x1x144x4xf32> to vector<144x4xf32>
      %c0_17 = arith.constant 0 : index
      %c0_18 = arith.constant 0 : index
      %c0_19 = arith.constant 0 : index
      %36 = vector.load %arg4[%c0_17, %c0_18, %c0_19] : memref<1x4x8xf32, #tpu.memory_space<vmem>>, vector<1x4x8xf32>
      %37 = vector.shape_cast %36 : vector<1x4x8xf32> to vector<4x8xf32>
      %cst = arith.constant dense<0.000000e+00> : vector<144x8xf32>
      %38 = tpu.matmul %35, %37, %cst {dimension_numbers = #tpu.dot_dimension_numbers<[1], [0], [0], [1], [0, 0, 1, 1], [], []>} : vector<144x4xf32>, vector<4x8xf32>, vector<144x8xf32> -> vector<144x8xf32>
      %39 = arith.addf %33, %38 : vector<144x8xf32>
      %c0_20 = arith.constant 0 : index
      %c0_21 = arith.constant 0 : index
      %40 = vector.load %arg9[%c0_20, %c0_21] : memref<144x8xf32, #tpu.memory_space<vmem>>, vector<144x8xf32>
      tpu.vector_store %arg9[%c0_20, %c0_21], %39 {strides = array<i32>} : memref<144x8xf32, #tpu.memory_space<vmem>>, vector<144x8xf32>,
    } else {
    }
    %c8_i32 = arith.constant 8 : i32
    %27 = arith.cmpi eq, %arg2, %c8_i32 : i32
    %28 = arith.extui %27 : i1 to i32
    %c0_i32_10 = arith.constant 0 : i32
    %29 = arith.cmpi ne, %28, %c0_i32_10 : i32
    scf.if %29 {
      %c0 = arith.constant 0 : index
      %c0_13 = arith.constant 0 : index
      %33 = vector.load %arg9[%c0, %c0_13] : memref<144x8xf32, #tpu.memory_space<vmem>>, vector<144x8xf32>
      %c0_14 = arith.constant 0 : index
      %c0_15 = arith.constant 0 : index
      %c38 = arith.constant 38 : index
      %c0_16 = arith.constant 0 : index
      %34 = vector.load %arg3[%c0_14, %c0_15, %c38, %c0_16] : memref<1x1x198x4xf32, #tpu.memory_space<vmem>>, vector<1x1x144x4xf32>
      %35 = vector.shape_cast %34 : vector<1x1x144x4xf32> to vector<144x4xf32>
      %c0_17 = arith.constant 0 : index
      %c0_18 = arith.constant 0 : index
      %c0_19 = arith.constant 0 : index
      %36 = vector.load %arg4[%c0_17, %c0_18, %c0_19] : memref<1x4x8xf32, #tpu.memory_space<vmem>>, vector<1x4x8xf32>
      %37 = vector.shape_cast %36 : vector<1x4x8xf32> to vector<4x8xf32>
      %cst = arith.constant dense<0.000000e+00> : vector<144x8xf32>
      %38 = tpu.matmul %35, %37, %cst {dimension_numbers = #tpu.dot_dimension_numbers<[1], [0], [0], [1], [0, 0, 1, 1], [], []>} : vector<144x4xf32>, vector<4x8xf32>, vector<144x8xf32> -> vector<144x8xf32>
      %39 = arith.addf %33, %38 : vector<144x8xf32>
      %c0_20 = arith.constant 0 : index
      %c0_21 = arith.constant 0 : index
      %40 = vector.load %arg9[%c0_20, %c0_21] : memref<144x8xf32, #tpu.memory_space<vmem>>, vector<144x8xf32>
      tpu.vector_store %arg9[%c0_20, %c0_21], %39 {strides = array<i32>} : memref<144x8xf32, #tpu.memory_space<vmem>>, vector<144x8xf32>,
    } else {
    }
    %c8_i32_11 = arith.constant 8 : i32
    %30 = arith.cmpi eq, %arg2, %c8_i32_11 : i32
    %31 = arith.extui %30 : i1 to i32
    %c0_i32_12 = arith.constant 0 : i32
    %32 = arith.cmpi ne, %31, %c0_i32_12 : i32
    scf.if %32 {
      %c0 = arith.constant 0 : index
      %c0_13 = arith.constant 0 : index
      %33 = vector.load %arg9[%c0, %c0_13] : memref<144x8xf32, #tpu.memory_space<vmem>>, vector<144x8xf32>
      %c0_14 = arith.constant 0 : index
      %c0_15 = arith.constant 0 : index
      %34 = vector.load %arg5[%c0_14, %c0_15] : memref<1x8xf32, #tpu.memory_space<vmem>>, vector<1x8xf32>
      %35 = vector.broadcast %34 : vector<1x8xf32> to vector<144x8xf32>
      %36 = arith.addf %33, %35 : vector<144x8xf32>
      %cst = arith.constant 1.000000e-01 : f32
      %37 = vector.broadcast %cst : f32 to vector<144x8xf32>
      %38 = arith.mulf %37, %36 : vector<144x8xf32>
      %39 = arith.maximumf %36, %38 : vector<144x8xf32>
      %c0_16 = arith.constant 0 : index
      %c0_17 = arith.constant 0 : index
      %40 = vector.load %arg6[%c0_16, %c0_17] : memref<8x128xf32, #tpu.memory_space<vmem>>, vector<8x128xf32>
      %cst_18 = arith.constant dense<0.000000e+00> : vector<144x128xf32>
      %41 = tpu.matmul %39, %40, %cst_18 {dimension_numbers = #tpu.dot_dimension_numbers<[1], [0], [0], [1], [0, 0, 1, 1], [], []>} : vector<144x8xf32>, vector<8x128xf32>, vector<144x128xf32> -> vector<144x128xf32>
      %c0_19 = arith.constant 0 : index
      %c0_20 = arith.constant 0 : index
      %42 = vector.load %arg7[%c0_19, %c0_20] : memref<1x128xf32, #tpu.memory_space<vmem>>, vector<1x128xf32>
      %43 = vector.broadcast %42 : vector<1x128xf32> to vector<144x128xf32>
      %44 = arith.addf %41, %43 : vector<144x128xf32>
      %c0_21 = arith.constant 0 : index
      %c0_22 = arith.constant 0 : index
      %c0_23 = arith.constant 0 : index
      %45 = vector.load %arg8[%c0_21, %c0_22, %c0_23] : memref<1x144x128xf32, #tpu.memory_space<vmem>>, vector<1x144x128xf32>
      %46 = vector.shape_cast %45 : vector<1x144x128xf32> to vector<144x128xf32>
      %47 = vector.shape_cast %44 : vector<144x128xf32> to vector<1x144x128xf32>
      tpu.vector_store %arg8[%c0_21, %c0_22, %c0_23], %47 {strides = array<i32>} : memref<1x144x128xf32, #tpu.memory_space<vmem>>, vector<1x144x128xf32>,
    } else {
    }
    return
  }
  func.func @transform_0(%arg0: i32, %arg1: i32, %arg2: i32) -> (i32, i32, i32, i32) {
    %c0_i32 = arith.constant 0 : i32
    %c0_i32_0 = arith.constant 0 : i32
    %c0_i32_1 = arith.constant 0 : i32
    return %arg0, %arg1, %c0_i32, %c0_i32_0 : i32, i32, i32, i32
  }
  func.func @transform_1(%arg0: i32, %arg1: i32, %arg2: i32) -> (i32, i32, i32) {
    %c0_i32 = arith.constant 0 : i32
    %c0_i32_0 = arith.constant 0 : i32
    %c0_i32_1 = arith.constant 0 : i32
    return %arg2, %c0_i32, %c0_i32_0 : i32, i32, i32
  }
  func.func @transform_2(%arg0: i32, %arg1: i32, %arg2: i32) -> (i32, i32) {
    %c0_i32 = arith.constant 0 : i32
    %c0_i32_0 = arith.constant 0 : i32
    %c0_i32_1 = arith.constant 0 : i32
    return %c0_i32, %c0_i32_0 : i32, i32
  }
  func.func @transform_3(%arg0: i32, %arg1: i32, %arg2: i32) -> (i32, i32) {
    %c0_i32 = arith.constant 0 : i32
    %c0_i32_0 = arith.constant 0 : i32
    %c0_i32_1 = arith.constant 0 : i32
    return %c0_i32, %c0_i32_0 : i32, i32
  }
  func.func @transform_4(%arg0: i32, %arg1: i32, %arg2: i32) -> (i32, i32) {
    %c0_i32 = arith.constant 0 : i32
    %c0_i32_0 = arith.constant 0 : i32
    %c0_i32_1 = arith.constant 0 : i32
    return %c0_i32, %c0_i32_0 : i32, i32
  }
  func.func @transform_5(%arg0: i32, %arg1: i32, %arg2: i32) -> (i32, i32, i32) {
    %c0_i32 = arith.constant 0 : i32
    %c0_i32_0 = arith.constant 0 : i32
    return %arg0, %arg1, %c0_i32 : i32, i32, i32
  }
}

</mosaic_0001>

<llo_original>
// kernel: tpu_custom_call.1
$region0: #{tpu_custom_call.1}
  #allocation0 [shape = 'u32[]', space=smem, size = 0x4, offset = 0x4, fixed_abs, tag = 'smem constant byte address 0x4 - core index']
  #allocation1 [shape = 'u32[72,128]{1,0:T(1,128)}', space=vmem, size = 0x9000, scoped, tag = 'internal scratch']
  #allocation2 [shape = 'f32[144,8]{1,0:T(8,128)}', space=vmem, size = 0x12000, scoped, tag = 'scratch operand']
  %s0 = inlined_call_operand.vmem [shape: f32[2,2,198,4], index: 0, kind: input, shape index: {}]
  %s1 = inlined_call_operand.vmem [shape: f32[9,4,8], index: 1, kind: input, shape index: {}]
  %s2 = inlined_call_operand.vmem [shape: f32[1,8], index: 2, kind: input, shape index: {}]
  %s3 = inlined_call_operand.vmem [shape: f32[8,128], index: 3, kind: input, shape index: {}]
  %s4 = inlined_call_operand.vmem [shape: f32[1,128], index: 4, kind: input, shape index: {}]
  %s5 = inlined_call_operand.hbm [shape: f32[2,288,128], index: 5, kind: output, shape index: {}]
  %s6 = sld [smem:[#allocation0]]
  $region89: #{tpu_custom_call.1} parent=0
    _
  %s8 = ssub.s32 1, %s6
  %s9 = scalar_select 0, %s8, %s6
  $region1: #{tpu_custom_call.1} parent=0
    #allocation3 [shape = 'u8[147456]{0}', space=vmem, size = 0x24000, scoped, tag = 'output window, operand 0']
    #allocation4 [shape = 's32[2]{0}', space=sflag, size = 0x8, scoped, tag = 'scoped memory for tpu_custom_call.1']
    %10 = vsyncpa [#allocation4], 0
    %s11 = scalar_lea.sflag [#allocation4], 1
    %12 = vsyncpa %s11, 0
    loop: start=0, step=1, limit=38
    $region2: #{tpu_custom_call.1} parent=1 // loop_pre_header
      _
    $region3: #{tpu_custom_call.1} parent=1 // loop_header
      %s14 = sphi 0, %s18
      %p15 = scmp.ge.s32.totalorder %s14, 38
      %s21 = sphi 0, %s40
      %s22 = sphi 0, %s36
      %s23 = sphi 0, %s32
      %s24 = sphi 0, %s21
      %s25 = sphi 0, %s22
      %s26 = sphi 0, %s23
      %s27 = sphi 0, %s24
      %s28 = sphi 0, %s25
      %s29 = sphi 0, %s26
      %s45 = sphi 0, %s47
      %s48 = sphi 0, %s45
      %s49 = sphi 0, %s48
      %s65 = sphi 0, %s49
      %s71 = sphi 0, %s73
      %s74 = sphi 0, %s71
      %s75 = sphi 0, %s74
      %s91 = sphi 0, %s75
      %s95 = sphi 0, %s95
      %s97 = sphi 0, %s95
      %s98 = sphi 0, %s97
      %s112 = sphi 0, %s98
      %s116 = sphi 0, %s116
      %s118 = sphi 0, %s116
      %s119 = sphi 0, %s118
      %s133 = sphi 0, %s119
      %s137 = sphi 0, %s137
      %s139 = sphi 0, %s137
      %s140 = sphi 0, %s139
      %s154 = sphi 0, %s140
      %s162 = sphi 0, %s164
      %s165 = sphi 0, %s162
      %s166 = sphi 0, %s165
      %s182 = sphi 0, %s166
    $region4: #{tpu_custom_call.1} parent=1 // loop_header_branch
      %17 = sbr.rel (%p15) target = $region8
    $region5: #{tpu_custom_call.1} parent=1 // loop_body
      %s19 = ssub.s32 %s14, 1
      %s20 = ssub.s32 %s14, 2
      %s30 = sadd.s32 1, %s23
      %p31 = scmp.ge.s32.totalorder %s30, 9
      %s32 = scalar_select %p31, 0, %s30
      %s33 = sadd.s32 1, %s22
      %s34 = scalar_select %p31, %s33, %s22
      %p35 = scmp.ge.s32.totalorder %s34, 2
      %s36 = scalar_select %p35, 0, %s34
      %s37 = sadd.s32 1, %s21
      %s38 = scalar_select %p35, %s37, %s21
      %p39 = scmp.ge.s32.totalorder %s38, 2
      %s40 = scalar_select %p39, 0, %s38
      %s41 = ssub.s32 %s21, %s40
      %s42 = ssub.s32 %s22, %s36
      %s43 = sor.u32 %s41, %s42
      %p44 = scmp.eq.s32.totalorder %s43, 0
      %s46 = sadd.s32 %s45, 1
      %s47 = scalar_select %p44, %s45, %s46
      %p50 = pneg %p44
      %p51 = scmp.eq.s32.totalorder %s14, 35
      %p52 = por %p50, %p51
      %p53 = scmp.ne.s32.totalorder %s45, %s48
      %p54 = scmp.eq.s32.totalorder %s14, 0
      %p55 = por %p53, %p54
      %p56 = scmp.ne.s32.totalorder %s45, %s48
      %p57 = scmp.eq.s32.totalorder %s19, 35
      %p58 = por %p56, %p57
      %p59 = scmp.ne.s32.totalorder %s48, %s49
      %p60 = scmp.eq.s32.totalorder %s19, 0
      %p61 = por %p59, %p60
      %p62 = scmp.ne.s32.totalorder %s48, %s49
      %p63 = scmp.eq.s32.totalorder %s20, 35
      %p64 = por %p62, %p63
      %p66 = scmp.ne.s32.totalorder %s49, %s65
      %p67 = scmp.eq.s32.totalorder %s20, 0
      %p68 = por %p66, %p67
      %s69 = ssub.s32 %s23, %s32
      %p70 = scmp.eq.s32.totalorder %s69, 0
      %s72 = sadd.s32 %s71, 1
      %s73 = scalar_select %p70, %s71, %s72
      %p76 = pneg %p70
      %p77 = scmp.eq.s32.totalorder %s14, 35
      %p78 = por %p76, %p77
      %p79 = scmp.ne.s32.totalorder %s71, %s74
      %p80 = scmp.eq.s32.totalorder %s14, 0
      %p81 = por %p79, %p80
      %p82 = scmp.ne.s32.totalorder %s71, %s74
      %p83 = scmp.eq.s32.totalorder %s19, 35
      %p84 = por %p82, %p83
      %p85 = scmp.ne.s32.totalorder %s74, %s75
      %p86 = scmp.eq.s32.totalorder %s19, 0
      %p87 = por %p85, %p86
      %p88 = scmp.ne.s32.totalorder %s74, %s75
      %p89 = scmp.eq.s32.totalorder %s20, 35
      %p90 = por %p88, %p89
      %p92 = scmp.ne.s32.totalorder %s75, %s91
      %p93 = scmp.eq.s32.totalorder %s20, 0
      %p94 = por %p92, %p93
      %s96 = sadd.s32 %s95, 1
      %p99 = scmp.eq.s32.totalorder %s14, 35
      %p100 = scmp.ne.s32.totalorder %s95, %s97
      %p101 = scmp.eq.s32.totalorder %s14, 0
      %p102 = por %p100, %p101
      %p103 = scmp.ne.s32.totalorder %s95, %s97
      %p104 = scmp.eq.s32.totalorder %s19, 35
      %p105 = por %p103, %p104
      %p106 = scmp.ne.s32.totalorder %s97, %s98
      %p107 = scmp.eq.s32.totalorder %s19, 0
      %p108 = por %p106, %p107
      %p109 = scmp.ne.s32.totalorder %s97, %s98
      %p110 = scmp.eq.s32.totalorder %s20, 35
      %p111 = por %p109, %p110
      %p113 = scmp.ne.s32.totalorder %s98, %s112
      %p114 = scmp.eq.s32.totalorder %s20, 0
      %p115 = por %p113, %p114
      %s117 = sadd.s32 %s116, 1
      %p120 = scmp.eq.s32.totalorder %s14, 35
      %p121 = scmp.ne.s32.totalorder %s116, %s118
      %p122 = scmp.eq.s32.totalorder %s14, 0
      %p123 = por %p121, %p122
      %p124 = scmp.ne.s32.totalorder %s116, %s118
      %p125 = scmp.eq.s32.totalorder %s19, 35
      %p126 = por %p124, %p125
      %p127 = scmp.ne.s32.totalorder %s118, %s119
      %p128 = scmp.eq.s32.totalorder %s19, 0
      %p129 = por %p127, %p128
      %p130 = scmp.ne.s32.totalorder %s118, %s119
      %p131 = scmp.eq.s32.totalorder %s20, 35
      %p132 = por %p130, %p131
      %p134 = scmp.ne.s32.totalorder %s119, %s133
      %p135 = scmp.eq.s32.totalorder %s20, 0
      %p136 = por %p134, %p135
      %s138 = sadd.s32 %s137, 1
      %p141 = scmp.eq.s32.totalorder %s14, 35
      %p142 = scmp.ne.s32.totalorder %s137, %s139
      %p143 = scmp.eq.s32.totalorder %s14, 0
      %p144 = por %p142, %p143
      %p145 = scmp.ne.s32.totalorder %s137, %s139
      %p146 = scmp.eq.s32.totalorder %s19, 35
      %p147 = por %p145, %p146
      %p148 = scmp.ne.s32.totalorder %s139, %s140
      %p149 = scmp.eq.s32.totalorder %s19, 0
      %p150 = por %p148, %p149
      %p151 = scmp.ne.s32.totalorder %s139, %s140
      %p152 = scmp.eq.s32.totalorder %s20, 35
      %p153 = por %p151, %p152
      %p155 = scmp.ne.s32.totalorder %s140, %s154
      %p156 = scmp.eq.s32.totalorder %s20, 0
      %p157 = por %p155, %p156
      %s158 = ssub.s32 %s21, %s40
      %s159 = ssub.s32 %s22, %s36
      %s160 = sor.u32 %s158, %s159
      %p161 = scmp.eq.s32.totalorder %s160, 0
      %s163 = sadd.s32 %s162, 1
      %s164 = scalar_select %p161, %s162, %s163
      %p167 = pneg %p161
      %p168 = scmp.eq.s32.totalorder %s14, 35
      %p169 = por %p167, %p168
      %p170 = scmp.ne.s32.totalorder %s162, %s165
      %p171 = scmp.eq.s32.totalorder %s14, 0
      %p172 = por %p170, %p171
      %p173 = scmp.ne.s32.totalorder %s162, %s165
      %p174 = scmp.eq.s32.totalorder %s19, 35
      %p175 = por %p173, %p174
      %p176 = scmp.ne.s32.totalorder %s165, %s166
      %p177 = scmp.eq.s32.totalorder %s19, 0
      %p178 = por %p176, %p177
      %p179 = scmp.ne.s32.totalorder %s165, %s166
      %p180 = scmp.eq.s32.totalorder %s20, 35
      %p181 = por %p179, %p180
      %p183 = scmp.ne.s32.totalorder %s166, %s182
      %p184 = scmp.eq.s32.totalorder %s20, 0
      %p185 = por %p183, %p184
      %p186 = scmp.le.s32.totalorder 1, %s14
      %p187 = scmp.lt.s32.totalorder %s14, 37
      %p188 = pnand %p186, %p187
      %p189 = pneg %p188
      // Predicated region
      $region9: #{tpu_custom_call.1} parent=5 // pred_check
        _
      $region10: #{tpu_custom_call.1} parent=5 // pred_check_branch
        %191 = sbr.rel (%p188) target = $region12
      $region11: #{tpu_custom_call.1} parent=5 // pred_region
        %s192 = ssub.s32 %s14, 1
        // Predicated region
        $region13: #{tpu_custom_call.1} parent=11 // pred_check
          %p193 = pneg %p108
        $region14: #{tpu_custom_call.1} parent=11 // pred_check_branch
          %195 = sbr.rel (%p193) target = $region16
        $region15: #{tpu_custom_call.1} parent=11 // pred_region
          _
        $region16: #{tpu_custom_call.1} parent=11 // pred_fallthru
          _
        // Predicated region
        $region17: #{tpu_custom_call.1} parent=11 // pred_check
          %p196 = pneg %p129
        $region18: #{tpu_custom_call.1} parent=11 // pred_check_branch
          %198 = sbr.rel (%p196) target = $region20
        $region19: #{tpu_custom_call.1} parent=11 // pred_region
          _
        $region20: #{tpu_custom_call.1} parent=11 // pred_fallthru
          _
        // Predicated region
        $region21: #{tpu_custom_call.1} parent=11 // pred_check
          %p199 = pneg %p150
        $region22: #{tpu_custom_call.1} parent=11 // pred_check_branch
          %201 = sbr.rel (%p199) target = $region24
        $region23: #{tpu_custom_call.1} parent=11 // pred_region
          _
        $region24: #{tpu_custom_call.1} parent=11 // pred_fallthru
          _
      $region12: #{tpu_custom_call.1} parent=5 // pred_fallthru
        _
      %p202 = scmp.lt.s32.totalorder %s14, 36
      // Predicated region
      $region25: #{tpu_custom_call.1} parent=5 // pred_check
        %p203 = pneg %p202
      $region26: #{tpu_custom_call.1} parent=5 // pred_check_branch
        %205 = sbr.rel (%p203) target = $region28
      $region27: #{tpu_custom_call.1} parent=5 // pred_region
        // Predicated region
        $region29: #{tpu_custom_call.1} parent=27 // pred_check
          %p206 = pneg %p55
        $region30: #{tpu_custom_call.1} parent=27 // pred_check_branch
          %208 = sbr.rel (%p206) target = $region32
        $region31: #{tpu_custom_call.1} parent=27 // pred_region
          %p209 = scmp.lt.s32.totalorder %s21, 1
          %s210 = scalar_select %p209, %s21, 1
          %p211 = scmp.lt.s32.totalorder %s22, 1
          %s212 = scalar_select %p211, %s22, 1
          %s213 = smul.addr %s212, 25
          %s214 = smul.addr %s210, 50
          %s215 = sadd.s32 %s213, %s214
          %s216 = smul.addr %s215, 8
          %s217 = scalar_lea.vmem %s0, %s216
        $region32: #{tpu_custom_call.1} parent=27 // pred_fallthru
          _
        // Predicated region
        $region33: #{tpu_custom_call.1} parent=27 // pred_check
          %p218 = pneg %p81
        $region34: #{tpu_custom_call.1} parent=27 // pred_check_branch
          %220 = sbr.rel (%p218) target = $region36
        $region35: #{tpu_custom_call.1} parent=27 // pred_region
          %p221 = scmp.lt.s32.totalorder %s23, 8
          %s222 = scalar_select %p221, %s23, 8
          %s223 = smul.addr %s222, 4
          %s224 = scalar_lea.vmem %s1, %s223
        $region36: #{tpu_custom_call.1} parent=27 // pred_fallthru
          _
      $region28: #{tpu_custom_call.1} parent=5 // pred_fallthru
        _
      %p225 = scmp.le.s32.totalorder 1, %s14
      %p226 = scmp.lt.s32.totalorder %s14, 37
      %p227 = pnand %p225, %p226
      %p228 = pneg %p227
      // Predicated region
      $region37: #{tpu_custom_call.1} parent=5 // pred_check
        _
      $region38: #{tpu_custom_call.1} parent=5 // pred_check_branch
        %230 = sbr.rel (%p227) target = $region40
      $region39: #{tpu_custom_call.1} parent=5 // pred_region
        %s231 = ssub.s32 %s14, 1
        %p232 = scmp.lt.s32.totalorder %s24, 1
        %s233 = scalar_select %p232, %s24, 1
        %p234 = scmp.lt.s32.totalorder %s25, 1
        %s235 = scalar_select %p234, %s25, 1
        %s236 = smul.addr %s235, 25
        %s237 = smul.addr %s233, 50
        %s238 = sadd.s32 %s236, %s237
        %s239 = smul.addr %s238, 8
        %s240 = scalar_lea.vmem %s0, %s239
        %p241 = pneg %p61
        %p242 = pneg %p58
        %p243 = scmp.lt.s32.totalorder %s26, 8
        %s244 = scalar_select %p243, %s26, 8
        %s245 = smul.addr %s244, 4
        %s246 = scalar_lea.vmem %s1, %s245
        %p247 = pneg %p87
        %p248 = pneg %p84
        %p249 = pneg %p108
        %p250 = pneg %p105
        %p251 = pneg %p129
        %p252 = pneg %p126
        %p253 = pneg %p150
        %p254 = pneg %p147
        %p255 = pneg %p178
        %p256 = pneg %p175
        %s257 = sand.u32 %s165, 1
        %s258 = scalar_lea.sflag [#allocation4], %s257
        %s259 = sand.u32 %s165, 1
        %s260 = smul.addr %s259, 144
        %s261 = scalar_lea.vmem [#allocation3], %s260
        %p262 = scmp.lt.s32.totalorder %s24, 1
        %s263 = scalar_select %p262, %s24, 1
        %p264 = scmp.lt.s32.totalorder %s25, 1
        %s265 = scalar_select %p264, %s25, 1
        %s266 = smul.addr %s265, 25
        %s267 = smul.addr %s263, 50
        %s268 = sadd.s32 %s266, %s267
        %s269 = smul.addr %s268, 8
        %s270 = scalar_lea.vmem %s0, %s269
        %p271 = scmp.lt.s32.totalorder %s26, 8
        %s272 = scalar_select %p271, %s26, 8
        %s273 = smul.addr %s272, 4
        %s274 = scalar_lea.vmem %s1, %s273
        %s275 = smul.u32 18, %s25
        %p276 = scmp.eq.s32.totalorder %s26, 0
        // Predicated region
        $region41: #{tpu_custom_call.1} parent=39 // pred_check
          %p277 = pneg %p276
        $region42: #{tpu_custom_call.1} parent=39 // pred_check_branch
          %279 = sbr.rel (%p277) target = $region44
        $region43: #{tpu_custom_call.1} parent=39 // pred_region
          %vm280 = vcmask 64512
          %281 = vst.msk [vmem:[#allocation2] sm:$0xff] %vm280, 0.0
          %282 = vst.msk [vmem:[#allocation2 + $0x8] sm:$0xff] %vm280, 0.0
          %283 = vst.msk [vmem:[#allocation2 + $0x10] sm:$0xff] %vm280, 0.0
          %284 = vst.msk [vmem:[#allocation2 + $0x18] sm:$0xff] %vm280, 0.0
          %285 = vst.msk [vmem:[#allocation2 + $0x20] sm:$0xff] %vm280, 0.0
          %286 = vst.msk [vmem:[#allocation2 + $0x28] sm:$0xff] %vm280, 0.0
          %287 = vst.msk [vmem:[#allocation2 + $0x30] sm:$0xff] %vm280, 0.0
          %288 = vst.msk [vmem:[#allocation2 + $0x38] sm:$0xff] %vm280, 0.0
          %289 = vst.msk [vmem:[#allocation2 + $0x40] sm:$0xff] %vm280, 0.0
          %290 = vst.msk [vmem:[#allocation2 + $0x48] sm:$0xff] %vm280, 0.0
          %291 = vst.msk [vmem:[#allocation2 + $0x50] sm:$0xff] %vm280, 0.0
          %292 = vst.msk [vmem:[#allocation2 + $0x58] sm:$0xff] %vm280, 0.0
          %293 = vst.msk [vmem:[#allocation2 + $0x60] sm:$0xff] %vm280, 0.0
          %294 = vst.msk [vmem:[#allocation2 + $0x68] sm:$0xff] %vm280, 0.0
          %295 = vst.msk [vmem:[#allocation2 + $0x70] sm:$0xff] %vm280, 0.0
          %296 = vst.msk [vmem:[#allocation2 + $0x78] sm:$0xff] %vm280, 0.0
          %297 = vst.msk [vmem:[#allocation2 + $0x80] sm:$0xff] %vm280, 0.0
          %298 = vst.msk [vmem:[#allocation2 + $0x88] sm:$0xff] %vm280, 0.0
          %v299 = vld [vmem:[#allocation2] sm:$0xff]
          %v300 = vld [vmem:[#allocation2 + $0x8] sm:$0xff]
          %v301 = vld [vmem:[#allocation2 + $0x10] sm:$0xff]
          %v302 = vld [vmem:[#allocation2 + $0x18] sm:$0xff]
          %v303 = vld [vmem:[#allocation2 + $0x20] sm:$0xff]
          %v304 = vld [vmem:[#allocation2 + $0x28] sm:$0xff]
          %v305 = vld [vmem:[#allocation2 + $0x30] sm:$0xff]
          %v306 = vld [vmem:[#allocation2 + $0x38] sm:$0xff]
          %v307 = vld [vmem:[#allocation2 + $0x40] sm:$0xff]
          %v308 = vld [vmem:[#allocation2 + $0x48] sm:$0xff]
          %v309 = vld [vmem:[#allocation2 + $0x50] sm:$0xff]
          %v310 = vld [vmem:[#allocation2 + $0x58] sm:$0xff]
          %v311 = vld [vmem:[#allocation2 + $0x60] sm:$0xff]
          %v312 = vld [vmem:[#allocation2 + $0x68] sm:$0xff]
          %v313 = vld [vmem:[#allocation2 + $0x70] sm:$0xff]
          %v314 = vld [vmem:[#allocation2 + $0x78] sm:$0xff]
          %v315 = vld [vmem:[#allocation2 + $0x80] sm:$0xff]
          %v316 = vld [vmem:[#allocation2 + $0x88] sm:$0xff]
          %v317 = vld [vmem:[%s270] sm:$0xff]
          %v318 = vld [vmem:[%s270 + $0x8] sm:$0xff]
          %v319 = vld [vmem:[%s270 + $0x10] sm:$0xff]
          %v320 = vld [vmem:[%s270 + $0x18] sm:$0xff]
          %v321 = vld [vmem:[%s270 + $0x20] sm:$0xff]
          %v322 = vld [vmem:[%s270 + $0x28] sm:$0xff]
          %v323 = vld [vmem:[%s270 + $0x30] sm:$0xff]
          %v324 = vld [vmem:[%s270 + $0x38] sm:$0xff]
          %v325 = vld [vmem:[%s270 + $0x40] sm:$0xff]
          %v326 = vld [vmem:[%s270 + $0x48] sm:$0xff]
          %v327 = vld [vmem:[%s270 + $0x50] sm:$0xff]
          %v328 = vld [vmem:[%s270 + $0x58] sm:$0xff]
          %v329 = vld [vmem:[%s270 + $0x60] sm:$0xff]
          %v330 = vld [vmem:[%s270 + $0x68] sm:$0xff]
          %v331 = vld [vmem:[%s270 + $0x70] sm:$0xff]
          %v332 = vld [vmem:[%s270 + $0x78] sm:$0xff]
          %v333 = vld [vmem:[%s270 + $0x80] sm:$0xff]
          %v334 = vld [vmem:[%s270 + $0x88] sm:$0xff]
          %v335 = vld [vmem:[%s274] sm:$0xf]
          %vm336 = vcmask 31744
          %v338 = vsel %vm336, %v317, 0
          %v341 = vsel %vm336, %v318, 0
          %v344 = vsel %vm336, %v319, 0
          %v347 = vsel %vm336, %v320, 0
          %v350 = vsel %vm336, %v321, 0
          %v353 = vsel %vm336, %v322, 0
          %v356 = vsel %vm336, %v323, 0
          %v359 = vsel %vm336, %v324, 0
          %v362 = vsel %vm336, %v325, 0
          %v365 = vsel %vm336, %v326, 0
          %v368 = vsel %vm336, %v327, 0
          %v371 = vsel %vm336, %v328, 0
          %v374 = vsel %vm336, %v329, 0
          %v377 = vsel %vm336, %v330, 0
          %v380 = vsel %vm336, %v331, 0
          %v383 = vsel %vm336, %v332, 0
          %v386 = vsel %vm336, %v333, 0
          %v389 = vsel %vm336, %v334, 0
          %vm391 = vcmask 1043456
          %v393 = vsel %vm391, %v335, 0
          %395 = vmatpush.msra.mxu0 0.0
          %396 = vmatpush.msra.mxu0 0.0
          %397 = vmatpush.msra.mxu0 0.0
          %398 = vmatpush.msra.mxu0 0.0
          %399 = vmatpush.msra.mxu0 0.0
          %400 = vmatpush.msra.mxu0 0.0
          %401 = vmatpush.msra.mxu0 0.0
          %402 = vmatpush.msra.mxu0 0.0
          %403 = vmatpush.msra.mxu0 0.0
          %404 = vmatpush.msra.mxu0 0.0
          %405 = vmatpush.msra.mxu0 0.0
          %406 = vmatpush.msra.mxu0 0.0
          %407 = vmatpush.msra.mxu0 0.0
          %408 = vmatpush.msra.mxu0 0.0
          %409 = vmatpush.msra.mxu0 0.0
          %410 = vmatpush.msra.mxu0 %v393
          %411 = vmatmul.f32.gmra.mxu0 %v338
          %v412 = vpop.f32.mrf.mxu0
          %v413 = vadd.f32 0.0, %v412
          %414 = vmatmul.f32.gmra.mxu0 %v341
          %v415 = vpop.f32.mrf.mxu0
          %v416 = vadd.f32 0.0, %v415
          %417 = vmatmul.f32.gmra.mxu0 %v344
          %v418 = vpop.f32.mrf.mxu0
          %v419 = vadd.f32 0.0, %v418
          %420 = vmatmul.f32.gmra.mxu0 %v347
          %v421 = vpop.f32.mrf.mxu0
          %v422 = vadd.f32 0.0, %v421
          %423 = vmatmul.f32.gmra.mxu0 %v350
          %v424 = vpop.f32.mrf.mxu0
          %v425 = vadd.f32 0.0, %v424
          %426 = vmatmul.f32.gmra.mxu0 %v353
          %v427 = vpop.f32.mrf.mxu0
          %v428 = vadd.f32 0.0, %v427
          %429 = vmatmul.f32.gmra.mxu0 %v356
          %v430 = vpop.f32.mrf.mxu0
          %v431 = vadd.f32 0.0, %v430
          %432 = vmatmul.f32.gmra.mxu0 %v359
          %v433 = vpop.f32.mrf.mxu0
          %v434 = vadd.f32 0.0, %v433
          %435 = vmatmul.f32.gmra.mxu0 %v362
          %v436 = vpop.f32.mrf.mxu0
          %v437 = vadd.f32 0.0, %v436
          %438 = vmatmul.f32.gmra.mxu0 %v365
          %v439 = vpop.f32.mrf.mxu0
          %v440 = vadd.f32 0.0, %v439
          %441 = vmatmul.f32.gmra.mxu0 %v368
          %v442 = vpop.f32.mrf.mxu0
          %v443 = vadd.f32 0.0, %v442
          %444 = vmatmul.f32.gmra.mxu0 %v371
          %v445 = vpop.f32.mrf.mxu0
          %v446 = vadd.f32 0.0, %v445
          %447 = vmatmul.f32.gmra.mxu0 %v374
          %v448 = vpop.f32.mrf.mxu0
          %v449 = vadd.f32 0.0, %v448
          %450 = vmatmul.f32.gmra.mxu0 %v377
          %v451 = vpop.f32.mrf.mxu0
          %v452 = vadd.f32 0.0, %v451
          %453 = vmatmul.f32.gmra.mxu0 %v380
          %v454 = vpop.f32.mrf.mxu0
          %v455 = vadd.f32 0.0, %v454
          %456 = vmatmul.f32.gmra.mxu0 %v383
          %v457 = vpop.f32.mrf.mxu0
          %v458 = vadd.f32 0.0, %v457
          %459 = vmatmul.f32.gmra.mxu0 %v386
          %v460 = vpop.f32.mrf.mxu0
          %v461 = vadd.f32 0.0, %v460
          %462 = vmatmul.f32.gmra.mxu0 %v389
          %v463 = vpop.f32.mrf.mxu0
          %v464 = vadd.f32 0.0, %v463
          %465 = vdwg.mxu0
          %v466 = vadd.f32 %v299, %v413
          %v467 = vadd.f32 %v300, %v416
          %v468 = vadd.f32 %v301, %v419
          %v469 = vadd.f32 %v302, %v422
          %v470 = vadd.f32 %v303, %v425
          %v471 = vadd.f32 %v304, %v428
          %v472 = vadd.f32 %v305, %v431
          %v473 = vadd.f32 %v306, %v434
          %v474 = vadd.f32 %v307, %v437
          %v475 = vadd.f32 %v308, %v440
          %v476 = vadd.f32 %v309, %v443
          %v477 = vadd.f32 %v310, %v446
          %v478 = vadd.f32 %v311, %v449
          %v479 = vadd.f32 %v312, %v452
          %v480 = vadd.f32 %v313, %v455
          %v481 = vadd.f32 %v314, %v458
          %v482 = vadd.f32 %v315, %v461
          %v483 = vadd.f32 %v316, %v464
          %484 = vst.msk [vmem:[#allocation2] sm:$0xff] %vm280, %v466
          %485 = vst.msk [vmem:[#allocation2 + $0x8] sm:$0xff] %vm280, %v467
          %486 = vst.msk [vmem:[#allocation2 + $0x10] sm:$0xff] %vm280, %v468
          %487 = vst.msk [vmem:[#allocation2 + $0x18] sm:$0xff] %vm280, %v469
          %488 = vst.msk [vmem:[#allocation2 + $0x20] sm:$0xff] %vm280, %v470
          %489 = vst.msk [vmem:[#allocation2 + $0x28] sm:$0xff] %vm280, %v471
          %490 = vst.msk [vmem:[#allocation2 + $0x30] sm:$0xff] %vm280, %v472
          %491 = vst.msk [vmem:[#allocation2 + $0x38] sm:$0xff] %vm280, %v473
          %492 = vst.msk [vmem:[#allocation2 + $0x40] sm:$0xff] %vm280, %v474
          %493 = vst.msk [vmem:[#allocation2 + $0x48] sm:$0xff] %vm280, %v475
          %494 = vst.msk [vmem:[#allocation2 + $0x50] sm:$0xff] %vm280, %v476
          %495 = vst.msk [vmem:[#allocation2 + $0x58] sm:$0xff] %vm280, %v477
          %496 = vst.msk [vmem:[#allocation2 + $0x60] sm:$0xff] %vm280, %v478
          %497 = vst.msk [vmem:[#allocation2 + $0x68] sm:$0xff] %vm280, %v479
          %498 = vst.msk [vmem:[#allocation2 + $0x70] sm:$0xff] %vm280, %v480
          %499 = vst.msk [vmem:[#allocation2 + $0x78] sm:$0xff] %vm280, %v481
          %500 = vst.msk [vmem:[#allocation2 + $0x80] sm:$0xff] %vm280, %v482
          %501 = vst.msk [vmem:[#allocation2 + $0x88] sm:$0xff] %vm280, %v483
        $region44: #{tpu_custom_call.1} parent=39 // pred_fallthru
          _
        %p502 = scmp.eq.s32.totalorder %s26, 1
        // Predicated region
        $region45: #{tpu_custom_call.1} parent=39 // pred_check
          %p503 = pneg %p502
        $region46: #{tpu_custom_call.1} parent=39 // pred_check_branch
          %505 = sbr.rel (%p503) target = $region48
        $region47: #{tpu_custom_call.1} parent=39 // pred_region
          %v506 = vld [vmem:[#allocation2] sm:$0xff]
          %v507 = vld [vmem:[#allocation2 + $0x8] sm:$0xff]
          %v508 = vld [vmem:[#allocation2 + $0x10] sm:$0xff]
          %v509 = vld [vmem:[#allocation2 + $0x18] sm:$0xff]
          %v510 = vld [vmem:[#allocation2 + $0x20] sm:$0xff]
          %v511 = vld [vmem:[#allocation2 + $0x28] sm:$0xff]
          %v512 = vld [vmem:[#allocation2 + $0x30] sm:$0xff]
          %v513 = vld [vmem:[#allocation2 + $0x38] sm:$0xff]
          %v514 = vld [vmem:[#allocation2 + $0x40] sm:$0xff]
          %v515 = vld [vmem:[#allocation2 + $0x48] sm:$0xff]
          %v516 = vld [vmem:[#allocation2 + $0x50] sm:$0xff]
          %v517 = vld [vmem:[#allocation2 + $0x58] sm:$0xff]
          %v518 = vld [vmem:[#allocation2 + $0x60] sm:$0xff]
          %v519 = vld [vmem:[#allocation2 + $0x68] sm:$0xff]
          %v520 = vld [vmem:[#allocation2 + $0x70] sm:$0xff]
          %v521 = vld [vmem:[#allocation2 + $0x78] sm:$0xff]
          %v522 = vld [vmem:[#allocation2 + $0x80] sm:$0xff]
          %v523 = vld [vmem:[#allocation2 + $0x88] sm:$0xff]
          %v524 = vld [vmem:[%s270 + $0x1] sm:$0xff]
          %v525 = vld [vmem:[%s270 + $0x9] sm:$0xff]
          %v526 = vld [vmem:[%s270 + $0x11] sm:$0xff]
          %v527 = vld [vmem:[%s270 + $0x19] sm:$0xff]
          %v528 = vld [vmem:[%s270 + $0x21] sm:$0xff]
          %v529 = vld [vmem:[%s270 + $0x29] sm:$0xff]
          %v530 = vld [vmem:[%s270 + $0x31] sm:$0xff]
          %v531 = vld [vmem:[%s270 + $0x39] sm:$0xff]
          %v532 = vld [vmem:[%s270 + $0x41] sm:$0xff]
          %v533 = vld [vmem:[%s270 + $0x49] sm:$0xff]
          %v534 = vld [vmem:[%s270 + $0x51] sm:$0xff]
          %v535 = vld [vmem:[%s270 + $0x59] sm:$0xff]
          %v536 = vld [vmem:[%s270 + $0x61] sm:$0xff]
          %v537 = vld [vmem:[%s270 + $0x69] sm:$0xff]
          %v538 = vld [vmem:[%s270 + $0x71] sm:$0xff]
          %v539 = vld [vmem:[%s270 + $0x79] sm:$0xff]
          %v540 = vld [vmem:[%s270 + $0x81] sm:$0xff]
          %v541 = vld [vmem:[%s270 + $0x89] sm:$0xff]
          %v542 = vld [vmem:[%s274] sm:$0xf]
          %vm543 = vcmask 31744
          %v545 = vsel %vm543, %v524, 0
          %v548 = vsel %vm543, %v525, 0
          %v551 = vsel %vm543, %v526, 0
          %v554 = vsel %vm543, %v527, 0
          %v557 = vsel %vm543, %v528, 0
          %v560 = vsel %vm543, %v529, 0
          %v563 = vsel %vm543, %v530, 0
          %v566 = vsel %vm543, %v531, 0
          %v569 = vsel %vm543, %v532, 0
          %v572 = vsel %vm543, %v533, 0
          %v575 = vsel %vm543, %v534, 0
          %v578 = vsel %vm543, %v535, 0
          %v581 = vsel %vm543, %v536, 0
          %v584 = vsel %vm543, %v537, 0
          %v587 = vsel %vm543, %v538, 0
          %v590 = vsel %vm543, %v539, 0
          %v593 = vsel %vm543, %v540, 0
          %v596 = vsel %vm543, %v541, 0
          %vm598 = vcmask 1043456
          %v600 = vsel %vm598, %v542, 0
          %602 = vmatpush.msra.mxu0 0.0
          %603 = vmatpush.msra.mxu0 0.0
          %604 = vmatpush.msra.mxu0 0.0
          %605 = vmatpush.msra.mxu0 0.0
          %606 = vmatpush.msra.mxu0 0.0
          %607 = vmatpush.msra.mxu0 0.0
          %608 = vmatpush.msra.mxu0 0.0
          %609 = vmatpush.msra.mxu0 0.0
          %610 = vmatpush.msra.mxu0 0.0
          %611 = vmatpush.msra.mxu0 0.0
          %612 = vmatpush.msra.mxu0 0.0
          %613 = vmatpush.msra.mxu0 0.0
          %614 = vmatpush.msra.mxu0 0.0
          %615 = vmatpush.msra.mxu0 0.0
          %616 = vmatpush.msra.mxu0 0.0
          %617 = vmatpush.msra.mxu0 %v600
          %618 = vmatmul.f32.gmra.mxu0 %v545
          %v619 = vpop.f32.mrf.mxu0
          %v620 = vadd.f32 0.0, %v619
          %621 = vmatmul.f32.gmra.mxu0 %v548
          %v622 = vpop.f32.mrf.mxu0
          %v623 = vadd.f32 0.0, %v622
          %624 = vmatmul.f32.gmra.mxu0 %v551
          %v625 = vpop.f32.mrf.mxu0
          %v626 = vadd.f32 0.0, %v625
          %627 = vmatmul.f32.gmra.mxu0 %v554
          %v628 = vpop.f32.mrf.mxu0
          %v629 = vadd.f32 0.0, %v628
          %630 = vmatmul.f32.gmra.mxu0 %v557
          %v631 = vpop.f32.mrf.mxu0
          %v632 = vadd.f32 0.0, %v631
          %633 = vmatmul.f32.gmra.mxu0 %v560
          %v634 = vpop.f32.mrf.mxu0
          %v635 = vadd.f32 0.0, %v634
          %636 = vmatmul.f32.gmra.mxu0 %v563
          %v637 = vpop.f32.mrf.mxu0
          %v638 = vadd.f32 0.0, %v637
          %639 = vmatmul.f32.gmra.mxu0 %v566
          %v640 = vpop.f32.mrf.mxu0
          %v641 = vadd.f32 0.0, %v640
          %642 = vmatmul.f32.gmra.mxu0 %v569
          %v643 = vpop.f32.mrf.mxu0
          %v644 = vadd.f32 0.0, %v643
          %645 = vmatmul.f32.gmra.mxu0 %v572
          %v646 = vpop.f32.mrf.mxu0
          %v647 = vadd.f32 0.0, %v646
          %648 = vmatmul.f32.gmra.mxu0 %v575
          %v649 = vpop.f32.mrf.mxu0
          %v650 = vadd.f32 0.0, %v649
          %651 = vmatmul.f32.gmra.mxu0 %v578
          %v652 = vpop.f32.mrf.mxu0
          %v653 = vadd.f32 0.0, %v652
          %654 = vmatmul.f32.gmra.mxu0 %v581
          %v655 = vpop.f32.mrf.mxu0
          %v656 = vadd.f32 0.0, %v655
          %657 = vmatmul.f32.gmra.mxu0 %v584
          %v658 = vpop.f32.mrf.mxu0
          %v659 = vadd.f32 0.0, %v658
          %660 = vmatmul.f32.gmra.mxu0 %v587
          %v661 = vpop.f32.mrf.mxu0
          %v662 = vadd.f32 0.0, %v661
          %663 = vmatmul.f32.gmra.mxu0 %v590
          %v664 = vpop.f32.mrf.mxu0
          %v665 = vadd.f32 0.0, %v664
          %666 = vmatmul.f32.gmra.mxu0 %v593
          %v667 = vpop.f32.mrf.mxu0
          %v668 = vadd.f32 0.0, %v667
          %669 = vmatmul.f32.gmra.mxu0 %v596
          %v670 = vpop.f32.mrf.mxu0
          %v671 = vadd.f32 0.0, %v670
          %672 = vdwg.mxu0
          %v673 = vadd.f32 %v506, %v620
          %v674 = vadd.f32 %v507, %v623
          %v675 = vadd.f32 %v508, %v626
          %v676 = vadd.f32 %v509, %v629
          %v677 = vadd.f32 %v510, %v632
          %v678 = vadd.f32 %v511, %v635
          %v679 = vadd.f32 %v512, %v638
          %v680 = vadd.f32 %v513, %v641
          %v681 = vadd.f32 %v514, %v644
          %v682 = vadd.f32 %v515, %v647
          %v683 = vadd.f32 %v516, %v650
          %v684 = vadd.f32 %v517, %v653
          %v685 = vadd.f32 %v518, %v656
          %v686 = vadd.f32 %v519, %v659
          %v687 = vadd.f32 %v520, %v662
          %v688 = vadd.f32 %v521, %v665
          %v689 = vadd.f32 %v522, %v668
          %v690 = vadd.f32 %v523, %v671
          %vm691 = vcmask 64512
          %692 = vst.msk [vmem:[#allocation2] sm:$0xff] %vm691, %v673
          %693 = vst.msk [vmem:[#allocation2 + $0x8] sm:$0xff] %vm691, %v674
          %694 = vst.msk [vmem:[#allocation2 + $0x10] sm:$0xff] %vm691, %v675
          %695 = vst.msk [vmem:[#allocation2 + $0x18] sm:$0xff] %vm691, %v676
          %696 = vst.msk [vmem:[#allocation2 + $0x20] sm:$0xff] %vm691, %v677
          %697 = vst.msk [vmem:[#allocation2 + $0x28] sm:$0xff] %vm691, %v678
          %698 = vst.msk [vmem:[#allocation2 + $0x30] sm:$0xff] %vm691, %v679
          %699 = vst.msk [vmem:[#allocation2 + $0x38] sm:$0xff] %vm691, %v680
          %700 = vst.msk [vmem:[#allocation2 + $0x40] sm:$0xff] %vm691, %v681
          %701 = vst.msk [vmem:[#allocation2 + $0x48] sm:$0xff] %vm691, %v682
          %702 = vst.msk [vmem:[#allocation2 + $0x50] sm:$0xff] %vm691, %v683
          %703 = vst.msk [vmem:[#allocation2 + $0x58] sm:$0xff] %vm691, %v684
          %704 = vst.msk [vmem:[#allocation2 + $0x60] sm:$0xff] %vm691, %v685
          %705 = vst.msk [vmem:[#allocation2 + $0x68] sm:$0xff] %vm691, %v686
          %706 = vst.msk [vmem:[#allocation2 + $0x70] sm:$0xff] %vm691, %v687
          %707 = vst.msk [vmem:[#allocation2 + $0x78] sm:$0xff] %vm691, %v688
          %708 = vst.msk [vmem:[#allocation2 + $0x80] sm:$0xff] %vm691, %v689
          %709 = vst.msk [vmem:[#allocation2 + $0x88] sm:$0xff] %vm691, %v690
        $region48: #{tpu_custom_call.1} parent=39 // pred_fallthru
          _
        %p710 = scmp.eq.s32.totalorder %s26, 2
        // Predicated region
        $region49: #{tpu_custom_call.1} parent=39 // pred_check
          %p711 = pneg %p710
        $region50: #{tpu_custom_call.1} parent=39 // pred_check_branch
          %713 = sbr.rel (%p711) target = $region52
        $region51: #{tpu_custom_call.1} parent=39 // pred_region
          %v714 = vld [vmem:[#allocation2] sm:$0xff]
          %v715 = vld [vmem:[#allocation2 + $0x8] sm:$0xff]
          %v716 = vld [vmem:[#allocation2 + $0x10] sm:$0xff]
          %v717 = vld [vmem:[#allocation2 + $0x18] sm:$0xff]
          %v718 = vld [vmem:[#allocation2 + $0x20] sm:$0xff]
          %v719 = vld [vmem:[#allocation2 + $0x28] sm:$0xff]
          %v720 = vld [vmem:[#allocation2 + $0x30] sm:$0xff]
          %v721 = vld [vmem:[#allocation2 + $0x38] sm:$0xff]
          %v722 = vld [vmem:[#allocation2 + $0x40] sm:$0xff]
          %v723 = vld [vmem:[#allocation2 + $0x48] sm:$0xff]
          %v724 = vld [vmem:[#allocation2 + $0x50] sm:$0xff]
          %v725 = vld [vmem:[#allocation2 + $0x58] sm:$0xff]
          %v726 = vld [vmem:[#allocation2 + $0x60] sm:$0xff]
          %v727 = vld [vmem:[#allocation2 + $0x68] sm:$0xff]
          %v728 = vld [vmem:[#allocation2 + $0x70] sm:$0xff]
          %v729 = vld [vmem:[#allocation2 + $0x78] sm:$0xff]
          %v730 = vld [vmem:[#allocation2 + $0x80] sm:$0xff]
          %v731 = vld [vmem:[#allocation2 + $0x88] sm:$0xff]
          %v732 = vld [vmem:[%s270 + $0x2] sm:$0xff]
          %v733 = vld [vmem:[%s270 + $0xa] sm:$0xff]
          %v734 = vld [vmem:[%s270 + $0x12] sm:$0xff]
          %v735 = vld [vmem:[%s270 + $0x1a] sm:$0xff]
          %v736 = vld [vmem:[%s270 + $0x22] sm:$0xff]
          %v737 = vld [vmem:[%s270 + $0x2a] sm:$0xff]
          %v738 = vld [vmem:[%s270 + $0x32] sm:$0xff]
          %v739 = vld [vmem:[%s270 + $0x3a] sm:$0xff]
          %v740 = vld [vmem:[%s270 + $0x42] sm:$0xff]
          %v741 = vld [vmem:[%s270 + $0x4a] sm:$0xff]
          %v742 = vld [vmem:[%s270 + $0x52] sm:$0xff]
          %v743 = vld [vmem:[%s270 + $0x5a] sm:$0xff]
          %v744 = vld [vmem:[%s270 + $0x62] sm:$0xff]
          %v745 = vld [vmem:[%s270 + $0x6a] sm:$0xff]
          %v746 = vld [vmem:[%s270 + $0x72] sm:$0xff]
          %v747 = vld [vmem:[%s270 + $0x7a] sm:$0xff]
          %v748 = vld [vmem:[%s270 + $0x82] sm:$0xff]
          %v749 = vld [vmem:[%s270 + $0x8a] sm:$0xff]
          %v750 = vld [vmem:[%s274] sm:$0xf]
          %vm751 = vcmask 31744
          %v753 = vsel %vm751, %v732, 0
          %v756 = vsel %vm751, %v733, 0
          %v759 = vsel %vm751, %v734, 0
          %v762 = vsel %vm751, %v735, 0
          %v765 = vsel %vm751, %v736, 0
          %v768 = vsel %vm751, %v737, 0
          %v771 = vsel %vm751, %v738, 0
          %v774 = vsel %vm751, %v739, 0
          %v777 = vsel %vm751, %v740, 0
          %v780 = vsel %vm751, %v741, 0
          %v783 = vsel %vm751, %v742, 0
          %v786 = vsel %vm751, %v743, 0
          %v789 = vsel %vm751, %v744, 0
          %v792 = vsel %vm751, %v745, 0
          %v795 = vsel %vm751, %v746, 0
          %v798 = vsel %vm751, %v747, 0
          %v801 = vsel %vm751, %v748, 0
          %v804 = vsel %vm751, %v749, 0
          %vm806 = vcmask 1043456
          %v808 = vsel %vm806, %v750, 0
          %810 = vmatpush.msra.mxu0 0.0
          %811 = vmatpush.msra.mxu0 0.0
          %812 = vmatpush.msra.mxu0 0.0
          %813 = vmatpush.msra.mxu0 0.0
          %814 = vmatpush.msra.mxu0 0.0
          %815 = vmatpush.msra.mxu0 0.0
          %816 = vmatpush.msra.mxu0 0.0
          %817 = vmatpush.msra.mxu0 0.0
          %818 = vmatpush.msra.mxu0 0.0
          %819 = vmatpush.msra.mxu0 0.0
          %820 = vmatpush.msra.mxu0 0.0
          %821 = vmatpush.msra.mxu0 0.0
          %822 = vmatpush.msra.mxu0 0.0
          %823 = vmatpush.msra.mxu0 0.0
          %824 = vmatpush.msra.mxu0 0.0
          %825 = vmatpush.msra.mxu0 %v808
          %826 = vmatmul.f32.gmra.mxu0 %v753
          %v827 = vpop.f32.mrf.mxu0
          %v828 = vadd.f32 0.0, %v827
          %829 = vmatmul.f32.gmra.mxu0 %v756
          %v830 = vpop.f32.mrf.mxu0
          %v831 = vadd.f32 0.0, %v830
          %832 = vmatmul.f32.gmra.mxu0 %v759
          %v833 = vpop.f32.mrf.mxu0
          %v834 = vadd.f32 0.0, %v833
          %835 = vmatmul.f32.gmra.mxu0 %v762
          %v836 = vpop.f32.mrf.mxu0
          %v837 = vadd.f32 0.0, %v836
          %838 = vmatmul.f32.gmra.mxu0 %v765
          %v839 = vpop.f32.mrf.mxu0
          %v840 = vadd.f32 0.0, %v839
          %841 = vmatmul.f32.gmra.mxu0 %v768
          %v842 = vpop.f32.mrf.mxu0
          %v843 = vadd.f32 0.0, %v842
          %844 = vmatmul.f32.gmra.mxu0 %v771
          %v845 = vpop.f32.mrf.mxu0
          %v846 = vadd.f32 0.0, %v845
          %847 = vmatmul.f32.gmra.mxu0 %v774
          %v848 = vpop.f32.mrf.mxu0
          %v849 = vadd.f32 0.0, %v848
          %850 = vmatmul.f32.gmra.mxu0 %v777
          %v851 = vpop.f32.mrf.mxu0
          %v852 = vadd.f32 0.0, %v851
          %853 = vmatmul.f32.gmra.mxu0 %v780
          %v854 = vpop.f32.mrf.mxu0
          %v855 = vadd.f32 0.0, %v854
          %856 = vmatmul.f32.gmra.mxu0 %v783
          %v857 = vpop.f32.mrf.mxu0
          %v858 = vadd.f32 0.0, %v857
          %859 = vmatmul.f32.gmra.mxu0 %v786
          %v860 = vpop.f32.mrf.mxu0
          %v861 = vadd.f32 0.0, %v860
          %862 = vmatmul.f32.gmra.mxu0 %v789
          %v863 = vpop.f32.mrf.mxu0
          %v864 = vadd.f32 0.0, %v863
          %865 = vmatmul.f32.gmra.mxu0 %v792
          %v866 = vpop.f32.mrf.mxu0
          %v867 = vadd.f32 0.0, %v866
          %868 = vmatmul.f32.gmra.mxu0 %v795
          %v869 = vpop.f32.mrf.mxu0
          %v870 = vadd.f32 0.0, %v869
          %871 = vmatmul.f32.gmra.mxu0 %v798
          %v872 = vpop.f32.mrf.mxu0
          %v873 = vadd.f32 0.0, %v872
          %874 = vmatmul.f32.gmra.mxu0 %v801
          %v875 = vpop.f32.mrf.mxu0
          %v876 = vadd.f32 0.0, %v875
          %877 = vmatmul.f32.gmra.mxu0 %v804
          %v878 = vpop.f32.mrf.mxu0
          %v879 = vadd.f32 0.0, %v878
          %880 = vdwg.mxu0
          %v881 = vadd.f32 %v714, %v828
          %v882 = vadd.f32 %v715, %v831
          %v883 = vadd.f32 %v716, %v834
          %v884 = vadd.f32 %v717, %v837
          %v885 = vadd.f32 %v718, %v840
          %v886 = vadd.f32 %v719, %v843
          %v887 = vadd.f32 %v720, %v846
          %v888 = vadd.f32 %v721, %v849
          %v889 = vadd.f32 %v722, %v852
          %v890 = vadd.f32 %v723, %v855
          %v891 = vadd.f32 %v724, %v858
          %v892 = vadd.f32 %v725, %v861
          %v893 = vadd.f32 %v726, %v864
          %v894 = vadd.f32 %v727, %v867
          %v895 = vadd.f32 %v728, %v870
          %v896 = vadd.f32 %v729, %v873
          %v897 = vadd.f32 %v730, %v876
          %v898 = vadd.f32 %v731, %v879
          %vm899 = vcmask 64512
          %900 = vst.msk [vmem:[#allocation2] sm:$0xff] %vm899, %v881
          %901 = vst.msk [vmem:[#allocation2 + $0x8] sm:$0xff] %vm899, %v882
          %902 = vst.msk [vmem:[#allocation2 + $0x10] sm:$0xff] %vm899, %v883
          %903 = vst.msk [vmem:[#allocation2 + $0x18] sm:$0xff] %vm899, %v884
          %904 = vst.msk [vmem:[#allocation2 + $0x20] sm:$0xff] %vm899, %v885
          %905 = vst.msk [vmem:[#allocation2 + $0x28] sm:$0xff] %vm899, %v886
          %906 = vst.msk [vmem:[#allocation2 + $0x30] sm:$0xff] %vm899, %v887
          %907 = vst.msk [vmem:[#allocation2 + $0x38] sm:$0xff] %vm899, %v888
          %908 = vst.msk [vmem:[#allocation2 + $0x40] sm:$0xff] %vm899, %v889
          %909 = vst.msk [vmem:[#allocation2 + $0x48] sm:$0xff] %vm899, %v890
          %910 = vst.msk [vmem:[#allocation2 + $0x50] sm:$0xff] %vm899, %v891
          %911 = vst.msk [vmem:[#allocation2 + $0x58] sm:$0xff] %vm899, %v892
          %912 = vst.msk [vmem:[#allocation2 + $0x60] sm:$0xff] %vm899, %v893
          %913 = vst.msk [vmem:[#allocation2 + $0x68] sm:$0xff] %vm899, %v894
          %914 = vst.msk [vmem:[#allocation2 + $0x70] sm:$0xff] %vm899, %v895
          %915 = vst.msk [vmem:[#allocation2 + $0x78] sm:$0xff] %vm899, %v896
          %916 = vst.msk [vmem:[#allocation2 + $0x80] sm:$0xff] %vm899, %v897
          %917 = vst.msk [vmem:[#allocation2 + $0x88] sm:$0xff] %vm899, %v898
        $region52: #{tpu_custom_call.1} parent=39 // pred_fallthru
          _
        %p918 = scmp.eq.s32.totalorder %s26, 3
        // Predicated region
        $region53: #{tpu_custom_call.1} parent=39 // pred_check
          %p919 = pneg %p918
        $region54: #{tpu_custom_call.1} parent=39 // pred_check_branch
          %921 = sbr.rel (%p919) target = $region56
        $region55: #{tpu_custom_call.1} parent=39 // pred_region
          %v922 = vld [vmem:[#allocation2] sm:$0xff]
          %v923 = vld [vmem:[#allocation2 + $0x8] sm:$0xff]
          %v924 = vld [vmem:[#allocation2 + $0x10] sm:$0xff]
          %v925 = vld [vmem:[#allocation2 + $0x18] sm:$0xff]
          %v926 = vld [vmem:[#allocation2 + $0x20] sm:$0xff]
          %v927 = vld [vmem:[#allocation2 + $0x28] sm:$0xff]
          %v928 = vld [vmem:[#allocation2 + $0x30] sm:$0xff]
          %v929 = vld [vmem:[#allocation2 + $0x38] sm:$0xff]
          %v930 = vld [vmem:[#allocation2 + $0x40] sm:$0xff]
          %v931 = vld [vmem:[#allocation2 + $0x48] sm:$0xff]
          %v932 = vld [vmem:[#allocation2 + $0x50] sm:$0xff]
          %v933 = vld [vmem:[#allocation2 + $0x58] sm:$0xff]
          %v934 = vld [vmem:[#allocation2 + $0x60] sm:$0xff]
          %v935 = vld [vmem:[#allocation2 + $0x68] sm:$0xff]
          %v936 = vld [vmem:[#allocation2 + $0x70] sm:$0xff]
          %v937 = vld [vmem:[#allocation2 + $0x78] sm:$0xff]
          %v938 = vld [vmem:[#allocation2 + $0x80] sm:$0xff]
          %v939 = vld [vmem:[#allocation2 + $0x88] sm:$0xff]
          %v940 = vld [vmem:[%s270 + $0x12] sm:$0xff]
          %v941 = vld [vmem:[%s270 + $0x1a] sm:$0xff]
          %v942 = vld [vmem:[%s270 + $0x22] sm:$0xff]
          %v943 = vld [vmem:[%s270 + $0x2a] sm:$0xff]
          %v944 = vld [vmem:[%s270 + $0x32] sm:$0xff]
          %v945 = vld [vmem:[%s270 + $0x3a] sm:$0xff]
          %v946 = vld [vmem:[%s270 + $0x42] sm:$0xff]
          %v947 = vld [vmem:[%s270 + $0x4a] sm:$0xff]
          %v948 = vld [vmem:[%s270 + $0x52] sm:$0xff]
          %v949 = vld [vmem:[%s270 + $0x5a] sm:$0xff]
          %v950 = vld [vmem:[%s270 + $0x62] sm:$0xff]
          %v951 = vld [vmem:[%s270 + $0x6a] sm:$0xff]
          %v952 = vld [vmem:[%s270 + $0x72] sm:$0xff]
          %v953 = vld [vmem:[%s270 + $0x7a] sm:$0xff]
          %v954 = vld [vmem:[%s270 + $0x82] sm:$0xff]
          %v955 = vld [vmem:[%s270 + $0x8a] sm:$0xff]
          %v956 = vld [vmem:[%s270 + $0x92] sm:$0xff]
          %v957 = vld [vmem:[%s270 + $0x9a] sm:$0xff]
          %v958 = vld [vmem:[%s274] sm:$0xf]
          %vm959 = vcmask 31744
          %v961 = vsel %vm959, %v940, 0
          %v964 = vsel %vm959, %v941, 0
          %v967 = vsel %vm959, %v942, 0
          %v970 = vsel %vm959, %v943, 0
          %v973 = vsel %vm959, %v944, 0
          %v976 = vsel %vm959, %v945, 0
          %v979 = vsel %vm959, %v946, 0
          %v982 = vsel %vm959, %v947, 0
          %v985 = vsel %vm959, %v948, 0
          %v988 = vsel %vm959, %v949, 0
          %v991 = vsel %vm959, %v950, 0
          %v994 = vsel %vm959, %v951, 0
          %v997 = vsel %vm959, %v952, 0
          %v1000 = vsel %vm959, %v953, 0
          %v1003 = vsel %vm959, %v954, 0
          %v1006 = vsel %vm959, %v955, 0
          %v1009 = vsel %vm959, %v956, 0
          %v1012 = vsel %vm959, %v957, 0
          %vm1014 = vcmask 1043456
          %v1016 = vsel %vm1014, %v958, 0
          %1018 = vmatpush.msra.mxu0 0.0
          %1019 = vmatpush.msra.mxu0 0.0
          %1020 = vmatpush.msra.mxu0 0.0
          %1021 = vmatpush.msra.mxu0 0.0
          %1022 = vmatpush.msra.mxu0 0.0
          %1023 = vmatpush.msra.mxu0 0.0
          %1024 = vmatpush.msra.mxu0 0.0
          %1025 = vmatpush.msra.mxu0 0.0
          %1026 = vmatpush.msra.mxu0 0.0
          %1027 = vmatpush.msra.mxu0 0.0
          %1028 = vmatpush.msra.mxu0 0.0
          %1029 = vmatpush.msra.mxu0 0.0
          %1030 = vmatpush.msra.mxu0 0.0
          %1031 = vmatpush.msra.mxu0 0.0
          %1032 = vmatpush.msra.mxu0 0.0
          %1033 = vmatpush.msra.mxu0 %v1016
          %1034 = vmatmul.f32.gmra.mxu0 %v961
          %v1035 = vpop.f32.mrf.mxu0
          %v1036 = vadd.f32 0.0, %v1035
          %1037 = vmatmul.f32.gmra.mxu0 %v964
          %v1038 = vpop.f32.mrf.mxu0
          %v1039 = vadd.f32 0.0, %v1038
          %1040 = vmatmul.f32.gmra.mxu0 %v967
          %v1041 = vpop.f32.mrf.mxu0
          %v1042 = vadd.f32 0.0, %v1041
          %1043 = vmatmul.f32.gmra.mxu0 %v970
          %v1044 = vpop.f32.mrf.mxu0
          %v1045 = vadd.f32 0.0, %v1044
          %1046 = vmatmul.f32.gmra.mxu0 %v973
          %v1047 = vpop.f32.mrf.mxu0
          %v1048 = vadd.f32 0.0, %v1047
          %1049 = vmatmul.f32.gmra.mxu0 %v976
          %v1050 = vpop.f32.mrf.mxu0
          %v1051 = vadd.f32 0.0, %v1050
          %1052 = vmatmul.f32.gmra.mxu0 %v979
          %v1053 = vpop.f32.mrf.mxu0
          %v1054 = vadd.f32 0.0, %v1053
          %1055 = vmatmul.f32.gmra.mxu0 %v982
          %v1056 = vpop.f32.mrf.mxu0
          %v1057 = vadd.f32 0.0, %v1056
          %1058 = vmatmul.f32.gmra.mxu0 %v985
          %v1059 = vpop.f32.mrf.mxu0
          %v1060 = vadd.f32 0.0, %v1059
          %1061 = vmatmul.f32.gmra.mxu0 %v988
          %v1062 = vpop.f32.mrf.mxu0
          %v1063 = vadd.f32 0.0, %v1062
          %1064 = vmatmul.f32.gmra.mxu0 %v991
          %v1065 = vpop.f32.mrf.mxu0
          %v1066 = vadd.f32 0.0, %v1065
          %1067 = vmatmul.f32.gmra.mxu0 %v994
          %v1068 = vpop.f32.mrf.mxu0
          %v1069 = vadd.f32 0.0, %v1068
          %1070 = vmatmul.f32.gmra.mxu0 %v997
          %v1071 = vpop.f32.mrf.mxu0
          %v1072 = vadd.f32 0.0, %v1071
          %1073 = vmatmul.f32.gmra.mxu0 %v1000
          %v1074 = vpop.f32.mrf.mxu0
          %v1075 = vadd.f32 0.0, %v1074
          %1076 = vmatmul.f32.gmra.mxu0 %v1003
          %v1077 = vpop.f32.mrf.mxu0
          %v1078 = vadd.f32 0.0, %v1077
          %1079 = vmatmul.f32.gmra.mxu0 %v1006
          %v1080 = vpop.f32.mrf.mxu0
          %v1081 = vadd.f32 0.0, %v1080
          %1082 = vmatmul.f32.gmra.mxu0 %v1009
          %v1083 = vpop.f32.mrf.mxu0
          %v1084 = vadd.f32 0.0, %v1083
          %1085 = vmatmul.f32.gmra.mxu0 %v1012
          %v1086 = vpop.f32.mrf.mxu0
          %v1087 = vadd.f32 0.0, %v1086
          %1088 = vdwg.mxu0
          %v1089 = vadd.f32 %v922, %v1036
          %v1090 = vadd.f32 %v923, %v1039
          %v1091 = vadd.f32 %v924, %v1042
          %v1092 = vadd.f32 %v925, %v1045
          %v1093 = vadd.f32 %v926, %v1048
          %v1094 = vadd.f32 %v927, %v1051
          %v1095 = vadd.f32 %v928, %v1054
          %v1096 = vadd.f32 %v929, %v1057
          %v1097 = vadd.f32 %v930, %v1060
          %v1098 = vadd.f32 %v931, %v1063
          %v1099 = vadd.f32 %v932, %v1066
          %v1100 = vadd.f32 %v933, %v1069
          %v1101 = vadd.f32 %v934, %v1072
          %v1102 = vadd.f32 %v935, %v1075
          %v1103 = vadd.f32 %v936, %v1078
          %v1104 = vadd.f32 %v937, %v1081
          %v1105 = vadd.f32 %v938, %v1084
          %v1106 = vadd.f32 %v939, %v1087
          %vm1107 = vcmask 64512
          %1108 = vst.msk [vmem:[#allocation2] sm:$0xff] %vm1107, %v1089
          %1109 = vst.msk [vmem:[#allocation2 + $0x8] sm:$0xff] %vm1107, %v1090
          %1110 = vst.msk [vmem:[#allocation2 + $0x10] sm:$0xff] %vm1107, %v1091
          %1111 = vst.msk [vmem:[#allocation2 + $0x18] sm:$0xff] %vm1107, %v1092
          %1112 = vst.msk [vmem:[#allocation2 + $0x20] sm:$0xff] %vm1107, %v1093
          %1113 = vst.msk [vmem:[#allocation2 + $0x28] sm:$0xff] %vm1107, %v1094
          %1114 = vst.msk [vmem:[#allocation2 + $0x30] sm:$0xff] %vm1107, %v1095
          %1115 = vst.msk [vmem:[#allocation2 + $0x38] sm:$0xff] %vm1107, %v1096
          %1116 = vst.msk [vmem:[#allocation2 + $0x40] sm:$0xff] %vm1107, %v1097
          %1117 = vst.msk [vmem:[#allocation2 + $0x48] sm:$0xff] %vm1107, %v1098
          %1118 = vst.msk [vmem:[#allocation2 + $0x50] sm:$0xff] %vm1107, %v1099
          %1119 = vst.msk [vmem:[#allocation2 + $0x58] sm:$0xff] %vm1107, %v1100
          %1120 = vst.msk [vmem:[#allocation2 + $0x60] sm:$0xff] %vm1107, %v1101
          %1121 = vst.msk [vmem:[#allocation2 + $0x68] sm:$0xff] %vm1107, %v1102
          %1122 = vst.msk [vmem:[#allocation2 + $0x70] sm:$0xff] %vm1107, %v1103
          %1123 = vst.msk [vmem:[#allocation2 + $0x78] sm:$0xff] %vm1107, %v1104
          %1124 = vst.msk [vmem:[#allocation2 + $0x80] sm:$0xff] %vm1107, %v1105
          %1125 = vst.msk [vmem:[#allocation2 + $0x88] sm:$0xff] %vm1107, %v1106
        $region56: #{tpu_custom_call.1} parent=39 // pred_fallthru
          _
        %p1126 = scmp.eq.s32.totalorder %s26, 4
        // Predicated region
        $region57: #{tpu_custom_call.1} parent=39 // pred_check
          %p1127 = pneg %p1126
        $region58: #{tpu_custom_call.1} parent=39 // pred_check_branch
          %1129 = sbr.rel (%p1127) target = $region60
        $region59: #{tpu_custom_call.1} parent=39 // pred_region
          %v1130 = vld [vmem:[#allocation2] sm:$0xff]
          %v1131 = vld [vmem:[#allocation2 + $0x8] sm:$0xff]
          %v1132 = vld [vmem:[#allocation2 + $0x10] sm:$0xff]
          %v1133 = vld [vmem:[#allocation2 + $0x18] sm:$0xff]
          %v1134 = vld [vmem:[#allocation2 + $0x20] sm:$0xff]
          %v1135 = vld [vmem:[#allocation2 + $0x28] sm:$0xff]
          %v1136 = vld [vmem:[#allocation2 + $0x30] sm:$0xff]
          %v1137 = vld [vmem:[#allocation2 + $0x38] sm:$0xff]
          %v1138 = vld [vmem:[#allocation2 + $0x40] sm:$0xff]
          %v1139 = vld [vmem:[#allocation2 + $0x48] sm:$0xff]
          %v1140 = vld [vmem:[#allocation2 + $0x50] sm:$0xff]
          %v1141 = vld [vmem:[#allocation2 + $0x58] sm:$0xff]
          %v1142 = vld [vmem:[#allocation2 + $0x60] sm:$0xff]
          %v1143 = vld [vmem:[#allocation2 + $0x68] sm:$0xff]
          %v1144 = vld [vmem:[#allocation2 + $0x70] sm:$0xff]
          %v1145 = vld [vmem:[#allocation2 + $0x78] sm:$0xff]
          %v1146 = vld [vmem:[#allocation2 + $0x80] sm:$0xff]
          %v1147 = vld [vmem:[#allocation2 + $0x88] sm:$0xff]
          %v1148 = vld [vmem:[%s270 + $0x13] sm:$0xff]
          %v1149 = vld [vmem:[%s270 + $0x1b] sm:$0xff]
          %v1150 = vld [vmem:[%s270 + $0x23] sm:$0xff]
          %v1151 = vld [vmem:[%s270 + $0x2b] sm:$0xff]
          %v1152 = vld [vmem:[%s270 + $0x33] sm:$0xff]
          %v1153 = vld [vmem:[%s270 + $0x3b] sm:$0xff]
          %v1154 = vld [vmem:[%s270 + $0x43] sm:$0xff]
          %v1155 = vld [vmem:[%s270 + $0x4b] sm:$0xff]
          %v1156 = vld [vmem:[%s270 + $0x53] sm:$0xff]
          %v1157 = vld [vmem:[%s270 + $0x5b] sm:$0xff]
          %v1158 = vld [vmem:[%s270 + $0x63] sm:$0xff]
          %v1159 = vld [vmem:[%s270 + $0x6b] sm:$0xff]
          %v1160 = vld [vmem:[%s270 + $0x73] sm:$0xff]
          %v1161 = vld [vmem:[%s270 + $0x7b] sm:$0xff]
          %v1162 = vld [vmem:[%s270 + $0x83] sm:$0xff]
          %v1163 = vld [vmem:[%s270 + $0x8b] sm:$0xff]
          %v1164 = vld [vmem:[%s270 + $0x93] sm:$0xff]
          %v1165 = vld [vmem:[%s270 + $0x9b] sm:$0xff]
          %v1166 = vld [vmem:[%s274] sm:$0xf]
          %vm1167 = vcmask 31744
          %v1169 = vsel %vm1167, %v1148, 0
          %v1172 = vsel %vm1167, %v1149, 0
          %v1175 = vsel %vm1167, %v1150, 0
          %v1178 = vsel %vm1167, %v1151, 0
          %v1181 = vsel %vm1167, %v1152, 0
          %v1184 = vsel %vm1167, %v1153, 0
          %v1187 = vsel %vm1167, %v1154, 0
          %v1190 = vsel %vm1167, %v1155, 0
          %v1193 = vsel %vm1167, %v1156, 0
          %v1196 = vsel %vm1167, %v1157, 0
          %v1199 = vsel %vm1167, %v1158, 0
          %v1202 = vsel %vm1167, %v1159, 0
          %v1205 = vsel %vm1167, %v1160, 0
          %v1208 = vsel %vm1167, %v1161, 0
          %v1211 = vsel %vm1167, %v1162, 0
          %v1214 = vsel %vm1167, %v1163, 0
          %v1217 = vsel %vm1167, %v1164, 0
          %v1220 = vsel %vm1167, %v1165, 0
          %vm1222 = vcmask 1043456
          %v1224 = vsel %vm1222, %v1166, 0
          %1226 = vmatpush.msra.mxu0 0.0
          %1227 = vmatpush.msra.mxu0 0.0
          %1228 = vmatpush.msra.mxu0 0.0
          %1229 = vmatpush.msra.mxu0 0.0
          %1230 = vmatpush.msra.mxu0 0.0
          %1231 = vmatpush.msra.mxu0 0.0
          %1232 = vmatpush.msra.mxu0 0.0
          %1233 = vmatpush.msra.mxu0 0.0
          %1234 = vmatpush.msra.mxu0 0.0
          %1235 = vmatpush.msra.mxu0 0.0
          %1236 = vmatpush.msra.mxu0 0.0
          %1237 = vmatpush.msra.mxu0 0.0
          %1238 = vmatpush.msra.mxu0 0.0
          %1239 = vmatpush.msra.mxu0 0.0
          %1240 = vmatpush.msra.mxu0 0.0
          %1241 = vmatpush.msra.mxu0 %v1224
          %1242 = vmatmul.f32.gmra.mxu0 %v1169
          %v1243 = vpop.f32.mrf.mxu0
          %v1244 = vadd.f32 0.0, %v1243
          %1245 = vmatmul.f32.gmra.mxu0 %v1172
          %v1246 = vpop.f32.mrf.mxu0
          %v1247 = vadd.f32 0.0, %v1246
          %1248 = vmatmul.f32.gmra.mxu0 %v1175
          %v1249 = vpop.f32.mrf.mxu0
          %v1250 = vadd.f32 0.0, %v1249
          %1251 = vmatmul.f32.gmra.mxu0 %v1178
          %v1252 = vpop.f32.mrf.mxu0
          %v1253 = vadd.f32 0.0, %v1252
          %1254 = vmatmul.f32.gmra.mxu0 %v1181
          %v1255 = vpop.f32.mrf.mxu0
          %v1256 = vadd.f32 0.0, %v1255
          %1257 = vmatmul.f32.gmra.mxu0 %v1184
          %v1258 = vpop.f32.mrf.mxu0
          %v1259 = vadd.f32 0.0, %v1258
          %1260 = vmatmul.f32.gmra.mxu0 %v1187
          %v1261 = vpop.f32.mrf.mxu0
          %v1262 = vadd.f32 0.0, %v1261
          %1263 = vmatmul.f32.gmra.mxu0 %v1190
          %v1264 = vpop.f32.mrf.mxu0
          %v1265 = vadd.f32 0.0, %v1264
          %1266 = vmatmul.f32.gmra.mxu0 %v1193
          %v1267 = vpop.f32.mrf.mxu0
          %v1268 = vadd.f32 0.0, %v1267
          %1269 = vmatmul.f32.gmra.mxu0 %v1196
          %v1270 = vpop.f32.mrf.mxu0
          %v1271 = vadd.f32 0.0, %v1270
          %1272 = vmatmul.f32.gmra.mxu0 %v1199
          %v1273 = vpop.f32.mrf.mxu0
          %v1274 = vadd.f32 0.0, %v1273
          %1275 = vmatmul.f32.gmra.mxu0 %v1202
          %v1276 = vpop.f32.mrf.mxu0
          %v1277 = vadd.f32 0.0, %v1276
          %1278 = vmatmul.f32.gmra.mxu0 %v1205
          %v1279 = vpop.f32.mrf.mxu0
          %v1280 = vadd.f32 0.0, %v1279
          %1281 = vmatmul.f32.gmra.mxu0 %v1208
          %v1282 = vpop.f32.mrf.mxu0
          %v1283 = vadd.f32 0.0, %v1282
          %1284 = vmatmul.f32.gmra.mxu0 %v1211
          %v1285 = vpop.f32.mrf.mxu0
          %v1286 = vadd.f32 0.0, %v1285
          %1287 = vmatmul.f32.gmra.mxu0 %v1214
          %v1288 = vpop.f32.mrf.mxu0
          %v1289 = vadd.f32 0.0, %v1288
          %1290 = vmatmul.f32.gmra.mxu0 %v1217
          %v1291 = vpop.f32.mrf.mxu0
          %v1292 = vadd.f32 0.0, %v1291
          %1293 = vmatmul.f32.gmra.mxu0 %v1220
          %v1294 = vpop.f32.mrf.mxu0
          %v1295 = vadd.f32 0.0, %v1294
          %1296 = vdwg.mxu0
          %v1297 = vadd.f32 %v1130, %v1244
          %v1298 = vadd.f32 %v1131, %v1247
          %v1299 = vadd.f32 %v1132, %v1250
          %v1300 = vadd.f32 %v1133, %v1253
          %v1301 = vadd.f32 %v1134, %v1256
          %v1302 = vadd.f32 %v1135, %v1259
          %v1303 = vadd.f32 %v1136, %v1262
          %v1304 = vadd.f32 %v1137, %v1265
          %v1305 = vadd.f32 %v1138, %v1268
          %v1306 = vadd.f32 %v1139, %v1271
          %v1307 = vadd.f32 %v1140, %v1274
          %v1308 = vadd.f32 %v1141, %v1277
          %v1309 = vadd.f32 %v1142, %v1280
          %v1310 = vadd.f32 %v1143, %v1283
          %v1311 = vadd.f32 %v1144, %v1286
          %v1312 = vadd.f32 %v1145, %v1289
          %v1313 = vadd.f32 %v1146, %v1292
          %v1314 = vadd.f32 %v1147, %v1295
          %vm1315 = vcmask 64512
          %1316 = vst.msk [vmem:[#allocation2] sm:$0xff] %vm1315, %v1297
          %1317 = vst.msk [vmem:[#allocation2 + $0x8] sm:$0xff] %vm1315, %v1298
          %1318 = vst.msk [vmem:[#allocation2 + $0x10] sm:$0xff] %vm1315, %v1299
          %1319 = vst.msk [vmem:[#allocation2 + $0x18] sm:$0xff] %vm1315, %v1300
          %1320 = vst.msk [vmem:[#allocation2 + $0x20] sm:$0xff] %vm1315, %v1301
          %1321 = vst.msk [vmem:[#allocation2 + $0x28] sm:$0xff] %vm1315, %v1302
          %1322 = vst.msk [vmem:[#allocation2 + $0x30] sm:$0xff] %vm1315, %v1303
          %1323 = vst.msk [vmem:[#allocation2 + $0x38] sm:$0xff] %vm1315, %v1304
          %1324 = vst.msk [vmem:[#allocation2 + $0x40] sm:$0xff] %vm1315, %v1305
          %1325 = vst.msk [vmem:[#allocation2 + $0x48] sm:$0xff] %vm1315, %v1306
          %1326 = vst.msk [vmem:[#allocation2 + $0x50] sm:$0xff] %vm1315, %v1307
          %1327 = vst.msk [vmem:[#allocation2 + $0x58] sm:$0xff] %vm1315, %v1308
          %1328 = vst.msk [vmem:[#allocation2 + $0x60] sm:$0xff] %vm1315, %v1309
          %1329 = vst.msk [vmem:[#allocation2 + $0x68] sm:$0xff] %vm1315, %v1310
          %1330 = vst.msk [vmem:[#allocation2 + $0x70] sm:$0xff] %vm1315, %v1311
          %1331 = vst.msk [vmem:[#allocation2 + $0x78] sm:$0xff] %vm1315, %v1312
          %1332 = vst.msk [vmem:[#allocation2 + $0x80] sm:$0xff] %vm1315, %v1313
          %1333 = vst.msk [vmem:[#allocation2 + $0x88] sm:$0xff] %vm1315, %v1314
        $region60: #{tpu_custom_call.1} parent=39 // pred_fallthru
          _
        %p1334 = scmp.eq.s32.totalorder %s26, 5
        // Predicated region
        $region61: #{tpu_custom_call.1} parent=39 // pred_check
          %p1335 = pneg %p1334
        $region62: #{tpu_custom_call.1} parent=39 // pred_check_branch
          %1337 = sbr.rel (%p1335) target = $region64
        $region63: #{tpu_custom_call.1} parent=39 // pred_region
          %v1338 = vld [vmem:[#allocation2] sm:$0xff]
          %v1339 = vld [vmem:[#allocation2 + $0x8] sm:$0xff]
          %v1340 = vld [vmem:[#allocation2 + $0x10] sm:$0xff]
          %v1341 = vld [vmem:[#allocation2 + $0x18] sm:$0xff]
          %v1342 = vld [vmem:[#allocation2 + $0x20] sm:$0xff]
          %v1343 = vld [vmem:[#allocation2 + $0x28] sm:$0xff]
          %v1344 = vld [vmem:[#allocation2 + $0x30] sm:$0xff]
          %v1345 = vld [vmem:[#allocation2 + $0x38] sm:$0xff]
          %v1346 = vld [vmem:[#allocation2 + $0x40] sm:$0xff]
          %v1347 = vld [vmem:[#allocation2 + $0x48] sm:$0xff]
          %v1348 = vld [vmem:[#allocation2 + $0x50] sm:$0xff]
          %v1349 = vld [vmem:[#allocation2 + $0x58] sm:$0xff]
          %v1350 = vld [vmem:[#allocation2 + $0x60] sm:$0xff]
          %v1351 = vld [vmem:[#allocation2 + $0x68] sm:$0xff]
          %v1352 = vld [vmem:[#allocation2 + $0x70] sm:$0xff]
          %v1353 = vld [vmem:[#allocation2 + $0x78] sm:$0xff]
          %v1354 = vld [vmem:[#allocation2 + $0x80] sm:$0xff]
          %v1355 = vld [vmem:[#allocation2 + $0x88] sm:$0xff]
          %v1356 = vld [vmem:[%s270 + $0x14] sm:$0xff]
          %v1357 = vld [vmem:[%s270 + $0x1c] sm:$0xff]
          %v1358 = vld [vmem:[%s270 + $0x24] sm:$0xff]
          %v1359 = vld [vmem:[%s270 + $0x2c] sm:$0xff]
          %v1360 = vld [vmem:[%s270 + $0x34] sm:$0xff]
          %v1361 = vld [vmem:[%s270 + $0x3c] sm:$0xff]
          %v1362 = vld [vmem:[%s270 + $0x44] sm:$0xff]
          %v1363 = vld [vmem:[%s270 + $0x4c] sm:$0xff]
          %v1364 = vld [vmem:[%s270 + $0x54] sm:$0xff]
          %v1365 = vld [vmem:[%s270 + $0x5c] sm:$0xff]
          %v1366 = vld [vmem:[%s270 + $0x64] sm:$0xff]
          %v1367 = vld [vmem:[%s270 + $0x6c] sm:$0xff]
          %v1368 = vld [vmem:[%s270 + $0x74] sm:$0xff]
          %v1369 = vld [vmem:[%s270 + $0x7c] sm:$0xff]
          %v1370 = vld [vmem:[%s270 + $0x84] sm:$0xff]
          %v1371 = vld [vmem:[%s270 + $0x8c] sm:$0xff]
          %v1372 = vld [vmem:[%s270 + $0x94] sm:$0xff]
          %v1373 = vld [vmem:[%s270 + $0x9c] sm:$0xff]
          %v1374 = vld [vmem:[%s274] sm:$0xf]
          %vm1375 = vcmask 31744
          %v1377 = vsel %vm1375, %v1356, 0
          %v1380 = vsel %vm1375, %v1357, 0
          %v1383 = vsel %vm1375, %v1358, 0
          %v1386 = vsel %vm1375, %v1359, 0
          %v1389 = vsel %vm1375, %v1360, 0
          %v1392 = vsel %vm1375, %v1361, 0
          %v1395 = vsel %vm1375, %v1362, 0
          %v1398 = vsel %vm1375, %v1363, 0
          %v1401 = vsel %vm1375, %v1364, 0
          %v1404 = vsel %vm1375, %v1365, 0
          %v1407 = vsel %vm1375, %v1366, 0
          %v1410 = vsel %vm1375, %v1367, 0
          %v1413 = vsel %vm1375, %v1368, 0
          %v1416 = vsel %vm1375, %v1369, 0
          %v1419 = vsel %vm1375, %v1370, 0
          %v1422 = vsel %vm1375, %v1371, 0
          %v1425 = vsel %vm1375, %v1372, 0
          %v1428 = vsel %vm1375, %v1373, 0
          %vm1430 = vcmask 1043456
          %v1432 = vsel %vm1430, %v1374, 0
          %1434 = vmatpush.msra.mxu0 0.0
          %1435 = vmatpush.msra.mxu0 0.0
          %1436 = vmatpush.msra.mxu0 0.0
          %1437 = vmatpush.msra.mxu0 0.0
          %1438 = vmatpush.msra.mxu0 0.0
          %1439 = vmatpush.msra.mxu0 0.0
          %1440 = vmatpush.msra.mxu0 0.0
          %1441 = vmatpush.msra.mxu0 0.0
          %1442 = vmatpush.msra.mxu0 0.0
          %1443 = vmatpush.msra.mxu0 0.0
          %1444 = vmatpush.msra.mxu0 0.0
          %1445 = vmatpush.msra.mxu0 0.0
          %1446 = vmatpush.msra.mxu0 0.0
          %1447 = vmatpush.msra.mxu0 0.0
          %1448 = vmatpush.msra.mxu0 0.0
          %1449 = vmatpush.msra.mxu0 %v1432
          %1450 = vmatmul.f32.gmra.mxu0 %v1377
          %v1451 = vpop.f32.mrf.mxu0
          %v1452 = vadd.f32 0.0, %v1451
          %1453 = vmatmul.f32.gmra.mxu0 %v1380
          %v1454 = vpop.f32.mrf.mxu0
          %v1455 = vadd.f32 0.0, %v1454
          %1456 = vmatmul.f32.gmra.mxu0 %v1383
          %v1457 = vpop.f32.mrf.mxu0
          %v1458 = vadd.f32 0.0, %v1457
          %1459 = vmatmul.f32.gmra.mxu0 %v1386
          %v1460 = vpop.f32.mrf.mxu0
          %v1461 = vadd.f32 0.0, %v1460
          %1462 = vmatmul.f32.gmra.mxu0 %v1389
          %v1463 = vpop.f32.mrf.mxu0
          %v1464 = vadd.f32 0.0, %v1463
          %1465 = vmatmul.f32.gmra.mxu0 %v1392
          %v1466 = vpop.f32.mrf.mxu0
          %v1467 = vadd.f32 0.0, %v1466
          %1468 = vmatmul.f32.gmra.mxu0 %v1395
          %v1469 = vpop.f32.mrf.mxu0
          %v1470 = vadd.f32 0.0, %v1469
          %1471 = vmatmul.f32.gmra.mxu0 %v1398
          %v1472 = vpop.f32.mrf.mxu0
          %v1473 = vadd.f32 0.0, %v1472
          %1474 = vmatmul.f32.gmra.mxu0 %v1401
          %v1475 = vpop.f32.mrf.mxu0
          %v1476 = vadd.f32 0.0, %v1475
          %1477 = vmatmul.f32.gmra.mxu0 %v1404
          %v1478 = vpop.f32.mrf.mxu0
          %v1479 = vadd.f32 0.0, %v1478
          %1480 = vmatmul.f32.gmra.mxu0 %v1407
          %v1481 = vpop.f32.mrf.mxu0
          %v1482 = vadd.f32 0.0, %v1481
          %1483 = vmatmul.f32.gmra.mxu0 %v1410
          %v1484 = vpop.f32.mrf.mxu0
          %v1485 = vadd.f32 0.0, %v1484
          %1486 = vmatmul.f32.gmra.mxu0 %v1413
          %v1487 = vpop.f32.mrf.mxu0
          %v1488 = vadd.f32 0.0, %v1487
          %1489 = vmatmul.f32.gmra.mxu0 %v1416
          %v1490 = vpop.f32.mrf.mxu0
          %v1491 = vadd.f32 0.0, %v1490
          %1492 = vmatmul.f32.gmra.mxu0 %v1419
          %v1493 = vpop.f32.mrf.mxu0
          %v1494 = vadd.f32 0.0, %v1493
          %1495 = vmatmul.f32.gmra.mxu0 %v1422
          %v1496 = vpop.f32.mrf.mxu0
          %v1497 = vadd.f32 0.0, %v1496
          %1498 = vmatmul.f32.gmra.mxu0 %v1425
          %v1499 = vpop.f32.mrf.mxu0
          %v1500 = vadd.f32 0.0, %v1499
          %1501 = vmatmul.f32.gmra.mxu0 %v1428
          %v1502 = vpop.f32.mrf.mxu0
          %v1503 = vadd.f32 0.0, %v1502
          %1504 = vdwg.mxu0
          %v1505 = vadd.f32 %v1338, %v1452
          %v1506 = vadd.f32 %v1339, %v1455
          %v1507 = vadd.f32 %v1340, %v1458
          %v1508 = vadd.f32 %v1341, %v1461
          %v1509 = vadd.f32 %v1342, %v1464
          %v1510 = vadd.f32 %v1343, %v1467
          %v1511 = vadd.f32 %v1344, %v1470
          %v1512 = vadd.f32 %v1345, %v1473
          %v1513 = vadd.f32 %v1346, %v1476
          %v1514 = vadd.f32 %v1347, %v1479
          %v1515 = vadd.f32 %v1348, %v1482
          %v1516 = vadd.f32 %v1349, %v1485
          %v1517 = vadd.f32 %v1350, %v1488
          %v1518 = vadd.f32 %v1351, %v1491
          %v1519 = vadd.f32 %v1352, %v1494
          %v1520 = vadd.f32 %v1353, %v1497
          %v1521 = vadd.f32 %v1354, %v1500
          %v1522 = vadd.f32 %v1355, %v1503
          %vm1523 = vcmask 64512
          %1524 = vst.msk [vmem:[#allocation2] sm:$0xff] %vm1523, %v1505
          %1525 = vst.msk [vmem:[#allocation2 + $0x8] sm:$0xff] %vm1523, %v1506
          %1526 = vst.msk [vmem:[#allocation2 + $0x10] sm:$0xff] %vm1523, %v1507
          %1527 = vst.msk [vmem:[#allocation2 + $0x18] sm:$0xff] %vm1523, %v1508
          %1528 = vst.msk [vmem:[#allocation2 + $0x20] sm:$0xff] %vm1523, %v1509
          %1529 = vst.msk [vmem:[#allocation2 + $0x28] sm:$0xff] %vm1523, %v1510
          %1530 = vst.msk [vmem:[#allocation2 + $0x30] sm:$0xff] %vm1523, %v1511
          %1531 = vst.msk [vmem:[#allocation2 + $0x38] sm:$0xff] %vm1523, %v1512
          %1532 = vst.msk [vmem:[#allocation2 + $0x40] sm:$0xff] %vm1523, %v1513
          %1533 = vst.msk [vmem:[#allocation2 + $0x48] sm:$0xff] %vm1523, %v1514
          %1534 = vst.msk [vmem:[#allocation2 + $0x50] sm:$0xff] %vm1523, %v1515
          %1535 = vst.msk [vmem:[#allocation2 + $0x58] sm:$0xff] %vm1523, %v1516
          %1536 = vst.msk [vmem:[#allocation2 + $0x60] sm:$0xff] %vm1523, %v1517
          %1537 = vst.msk [vmem:[#allocation2 + $0x68] sm:$0xff] %vm1523, %v1518
          %1538 = vst.msk [vmem:[#allocation2 + $0x70] sm:$0xff] %vm1523, %v1519
          %1539 = vst.msk [vmem:[#allocation2 + $0x78] sm:$0xff] %vm1523, %v1520
          %1540 = vst.msk [vmem:[#allocation2 + $0x80] sm:$0xff] %vm1523, %v1521
          %1541 = vst.msk [vmem:[#allocation2 + $0x88] sm:$0xff] %vm1523, %v1522
        $region64: #{tpu_custom_call.1} parent=39 // pred_fallthru
          _
        %p1542 = scmp.eq.s32.totalorder %s26, 6
        // Predicated region
        $region65: #{tpu_custom_call.1} parent=39 // pred_check
          %p1543 = pneg %p1542
        $region66: #{tpu_custom_call.1} parent=39 // pred_check_branch
          %1545 = sbr.rel (%p1543) target = $region68
        $region67: #{tpu_custom_call.1} parent=39 // pred_region
          %v1546 = vld [vmem:[#allocation2] sm:$0xff]
          %v1547 = vld [vmem:[#allocation2 + $0x8] sm:$0xff]
          %v1548 = vld [vmem:[#allocation2 + $0x10] sm:$0xff]
          %v1549 = vld [vmem:[#allocation2 + $0x18] sm:$0xff]
          %v1550 = vld [vmem:[#allocation2 + $0x20] sm:$0xff]
          %v1551 = vld [vmem:[#allocation2 + $0x28] sm:$0xff]
          %v1552 = vld [vmem:[#allocation2 + $0x30] sm:$0xff]
          %v1553 = vld [vmem:[#allocation2 + $0x38] sm:$0xff]
          %v1554 = vld [vmem:[#allocation2 + $0x40] sm:$0xff]
          %v1555 = vld [vmem:[#allocation2 + $0x48] sm:$0xff]
          %v1556 = vld [vmem:[#allocation2 + $0x50] sm:$0xff]
          %v1557 = vld [vmem:[#allocation2 + $0x58] sm:$0xff]
          %v1558 = vld [vmem:[#allocation2 + $0x60] sm:$0xff]
          %v1559 = vld [vmem:[#allocation2 + $0x68] sm:$0xff]
          %v1560 = vld [vmem:[#allocation2 + $0x70] sm:$0xff]
          %v1561 = vld [vmem:[#allocation2 + $0x78] sm:$0xff]
          %v1562 = vld [vmem:[#allocation2 + $0x80] sm:$0xff]
          %v1563 = vld [vmem:[#allocation2 + $0x88] sm:$0xff]
          %v1564 = vld [vmem:[%s270 + $0x24] sm:$0xff]
          %v1565 = vld [vmem:[%s270 + $0x2c] sm:$0xff]
          %v1566 = vld [vmem:[%s270 + $0x34] sm:$0xff]
          %v1567 = vld [vmem:[%s270 + $0x3c] sm:$0xff]
          %v1568 = vld [vmem:[%s270 + $0x44] sm:$0xff]
          %v1569 = vld [vmem:[%s270 + $0x4c] sm:$0xff]
          %v1570 = vld [vmem:[%s270 + $0x54] sm:$0xff]
          %v1571 = vld [vmem:[%s270 + $0x5c] sm:$0xff]
          %v1572 = vld [vmem:[%s270 + $0x64] sm:$0xff]
          %v1573 = vld [vmem:[%s270 + $0x6c] sm:$0xff]
          %v1574 = vld [vmem:[%s270 + $0x74] sm:$0xff]
          %v1575 = vld [vmem:[%s270 + $0x7c] sm:$0xff]
          %v1576 = vld [vmem:[%s270 + $0x84] sm:$0xff]
          %v1577 = vld [vmem:[%s270 + $0x8c] sm:$0xff]
          %v1578 = vld [vmem:[%s270 + $0x94] sm:$0xff]
          %v1579 = vld [vmem:[%s270 + $0x9c] sm:$0xff]
          %v1580 = vld [vmem:[%s270 + $0xa4] sm:$0xff]
          %v1581 = vld [vmem:[%s270 + $0xac] sm:$0xff]
          %v1582 = vld [vmem:[%s274] sm:$0xf]
          %vm1583 = vcmask 31744
          %v1585 = vsel %vm1583, %v1564, 0
          %v1588 = vsel %vm1583, %v1565, 0
          %v1591 = vsel %vm1583, %v1566, 0
          %v1594 = vsel %vm1583, %v1567, 0
          %v1597 = vsel %vm1583, %v1568, 0
          %v1600 = vsel %vm1583, %v1569, 0
          %v1603 = vsel %vm1583, %v1570, 0
          %v1606 = vsel %vm1583, %v1571, 0
          %v1609 = vsel %vm1583, %v1572, 0
          %v1612 = vsel %vm1583, %v1573, 0
          %v1615 = vsel %vm1583, %v1574, 0
          %v1618 = vsel %vm1583, %v1575, 0
          %v1621 = vsel %vm1583, %v1576, 0
          %v1624 = vsel %vm1583, %v1577, 0
          %v1627 = vsel %vm1583, %v1578, 0
          %v1630 = vsel %vm1583, %v1579, 0
          %v1633 = vsel %vm1583, %v1580, 0
          %v1636 = vsel %vm1583, %v1581, 0
          %vm1638 = vcmask 1043456
          %v1640 = vsel %vm1638, %v1582, 0
          %1642 = vmatpush.msra.mxu0 0.0
          %1643 = vmatpush.msra.mxu0 0.0
          %1644 = vmatpush.msra.mxu0 0.0
          %1645 = vmatpush.msra.mxu0 0.0
          %1646 = vmatpush.msra.mxu0 0.0
          %1647 = vmatpush.msra.mxu0 0.0
          %1648 = vmatpush.msra.mxu0 0.0
          %1649 = vmatpush.msra.mxu0 0.0
          %1650 = vmatpush.msra.mxu0 0.0
          %1651 = vmatpush.msra.mxu0 0.0
          %1652 = vmatpush.msra.mxu0 0.0
          %1653 = vmatpush.msra.mxu0 0.0
          %1654 = vmatpush.msra.mxu0 0.0
          %1655 = vmatpush.msra.mxu0 0.0
          %1656 = vmatpush.msra.mxu0 0.0
          %1657 = vmatpush.msra.mxu0 %v1640
          %1658 = vmatmul.f32.gmra.mxu0 %v1585
          %v1659 = vpop.f32.mrf.mxu0
          %v1660 = vadd.f32 0.0, %v1659
          %1661 = vmatmul.f32.gmra.mxu0 %v1588
          %v1662 = vpop.f32.mrf.mxu0
          %v1663 = vadd.f32 0.0, %v1662
          %1664 = vmatmul.f32.gmra.mxu0 %v1591
          %v1665 = vpop.f32.mrf.mxu0
          %v1666 = vadd.f32 0.0, %v1665
          %1667 = vmatmul.f32.gmra.mxu0 %v1594
          %v1668 = vpop.f32.mrf.mxu0
          %v1669 = vadd.f32 0.0, %v1668
          %1670 = vmatmul.f32.gmra.mxu0 %v1597
          %v1671 = vpop.f32.mrf.mxu0
          %v1672 = vadd.f32 0.0, %v1671
          %1673 = vmatmul.f32.gmra.mxu0 %v1600
          %v1674 = vpop.f32.mrf.mxu0
          %v1675 = vadd.f32 0.0, %v1674
          %1676 = vmatmul.f32.gmra.mxu0 %v1603
          %v1677 = vpop.f32.mrf.mxu0
          %v1678 = vadd.f32 0.0, %v1677
          %1679 = vmatmul.f32.gmra.mxu0 %v1606
          %v1680 = vpop.f32.mrf.mxu0
          %v1681 = vadd.f32 0.0, %v1680
          %1682 = vmatmul.f32.gmra.mxu0 %v1609
          %v1683 = vpop.f32.mrf.mxu0
          %v1684 = vadd.f32 0.0, %v1683
          %1685 = vmatmul.f32.gmra.mxu0 %v1612
          %v1686 = vpop.f32.mrf.mxu0
          %v1687 = vadd.f32 0.0, %v1686
          %1688 = vmatmul.f32.gmra.mxu0 %v1615
          %v1689 = vpop.f32.mrf.mxu0
          %v1690 = vadd.f32 0.0, %v1689
          %1691 = vmatmul.f32.gmra.mxu0 %v1618
          %v1692 = vpop.f32.mrf.mxu0
          %v1693 = vadd.f32 0.0, %v1692
          %1694 = vmatmul.f32.gmra.mxu0 %v1621
          %v1695 = vpop.f32.mrf.mxu0
          %v1696 = vadd.f32 0.0, %v1695
          %1697 = vmatmul.f32.gmra.mxu0 %v1624
          %v1698 = vpop.f32.mrf.mxu0
          %v1699 = vadd.f32 0.0, %v1698
          %1700 = vmatmul.f32.gmra.mxu0 %v1627
          %v1701 = vpop.f32.mrf.mxu0
          %v1702 = vadd.f32 0.0, %v1701
          %1703 = vmatmul.f32.gmra.mxu0 %v1630
          %v1704 = vpop.f32.mrf.mxu0
          %v1705 = vadd.f32 0.0, %v1704
          %1706 = vmatmul.f32.gmra.mxu0 %v1633
          %v1707 = vpop.f32.mrf.mxu0
          %v1708 = vadd.f32 0.0, %v1707
          %1709 = vmatmul.f32.gmra.mxu0 %v1636
          %v1710 = vpop.f32.mrf.mxu0
          %v1711 = vadd.f32 0.0, %v1710
          %1712 = vdwg.mxu0
          %v1713 = vadd.f32 %v1546, %v1660
          %v1714 = vadd.f32 %v1547, %v1663
          %v1715 = vadd.f32 %v1548, %v1666
          %v1716 = vadd.f32 %v1549, %v1669
          %v1717 = vadd.f32 %v1550, %v1672
          %v1718 = vadd.f32 %v1551, %v1675
          %v1719 = vadd.f32 %v1552, %v1678
          %v1720 = vadd.f32 %v1553, %v1681
          %v1721 = vadd.f32 %v1554, %v1684
          %v1722 = vadd.f32 %v1555, %v1687
          %v1723 = vadd.f32 %v1556, %v1690
          %v1724 = vadd.f32 %v1557, %v1693
          %v1725 = vadd.f32 %v1558, %v1696
          %v1726 = vadd.f32 %v1559, %v1699
          %v1727 = vadd.f32 %v1560, %v1702
          %v1728 = vadd.f32 %v1561, %v1705
          %v1729 = vadd.f32 %v1562, %v1708
          %v1730 = vadd.f32 %v1563, %v1711
          %vm1731 = vcmask 64512
          %1732 = vst.msk [vmem:[#allocation2] sm:$0xff] %vm1731, %v1713
          %1733 = vst.msk [vmem:[#allocation2 + $0x8] sm:$0xff] %vm1731, %v1714
          %1734 = vst.msk [vmem:[#allocation2 + $0x10] sm:$0xff] %vm1731, %v1715
          %1735 = vst.msk [vmem:[#allocation2 + $0x18] sm:$0xff] %vm1731, %v1716
          %1736 = vst.msk [vmem:[#allocation2 + $0x20] sm:$0xff] %vm1731, %v1717
          %1737 = vst.msk [vmem:[#allocation2 + $0x28] sm:$0xff] %vm1731, %v1718
          %1738 = vst.msk [vmem:[#allocation2 + $0x30] sm:$0xff] %vm1731, %v1719
          %1739 = vst.msk [vmem:[#allocation2 + $0x38] sm:$0xff] %vm1731, %v1720
          %1740 = vst.msk [vmem:[#allocation2 + $0x40] sm:$0xff] %vm1731, %v1721
          %1741 = vst.msk [vmem:[#allocation2 + $0x48] sm:$0xff] %vm1731, %v1722
          %1742 = vst.msk [vmem:[#allocation2 + $0x50] sm:$0xff] %vm1731, %v1723
          %1743 = vst.msk [vmem:[#allocation2 + $0x58] sm:$0xff] %vm1731, %v1724
          %1744 = vst.msk [vmem:[#allocation2 + $0x60] sm:$0xff] %vm1731, %v1725
          %1745 = vst.msk [vmem:[#allocation2 + $0x68] sm:$0xff] %vm1731, %v1726
          %1746 = vst.msk [vmem:[#allocation2 + $0x70] sm:$0xff] %vm1731, %v1727
          %1747 = vst.msk [vmem:[#allocation2 + $0x78] sm:$0xff] %vm1731, %v1728
          %1748 = vst.msk [vmem:[#allocation2 + $0x80] sm:$0xff] %vm1731, %v1729
          %1749 = vst.msk [vmem:[#allocation2 + $0x88] sm:$0xff] %vm1731, %v1730
        $region68: #{tpu_custom_call.1} parent=39 // pred_fallthru
          _
        %p1750 = scmp.eq.s32.totalorder %s26, 7
        // Predicated region
        $region69: #{tpu_custom_call.1} parent=39 // pred_check
          %p1751 = pneg %p1750
        $region70: #{tpu_custom_call.1} parent=39 // pred_check_branch
          %1753 = sbr.rel (%p1751) target = $region72
        $region71: #{tpu_custom_call.1} parent=39 // pred_region
          %v1754 = vld [vmem:[#allocation2] sm:$0xff]
          %v1755 = vld [vmem:[#allocation2 + $0x8] sm:$0xff]
          %v1756 = vld [vmem:[#allocation2 + $0x10] sm:$0xff]
          %v1757 = vld [vmem:[#allocation2 + $0x18] sm:$0xff]
          %v1758 = vld [vmem:[#allocation2 + $0x20] sm:$0xff]
          %v1759 = vld [vmem:[#allocation2 + $0x28] sm:$0xff]
          %v1760 = vld [vmem:[#allocation2 + $0x30] sm:$0xff]
          %v1761 = vld [vmem:[#allocation2 + $0x38] sm:$0xff]
          %v1762 = vld [vmem:[#allocation2 + $0x40] sm:$0xff]
          %v1763 = vld [vmem:[#allocation2 + $0x48] sm:$0xff]
          %v1764 = vld [vmem:[#allocation2 + $0x50] sm:$0xff]
          %v1765 = vld [vmem:[#allocation2 + $0x58] sm:$0xff]
          %v1766 = vld [vmem:[#allocation2 + $0x60] sm:$0xff]
          %v1767 = vld [vmem:[#allocation2 + $0x68] sm:$0xff]
          %v1768 = vld [vmem:[#allocation2 + $0x70] sm:$0xff]
          %v1769 = vld [vmem:[#allocation2 + $0x78] sm:$0xff]
          %v1770 = vld [vmem:[#allocation2 + $0x80] sm:$0xff]
          %v1771 = vld [vmem:[#allocation2 + $0x88] sm:$0xff]
          %v1772 = vld [vmem:[%s270 + $0x25] sm:$0xff]
          %v1773 = vld [vmem:[%s270 + $0x2d] sm:$0xff]
          %v1774 = vld [vmem:[%s270 + $0x35] sm:$0xff]
          %v1775 = vld [vmem:[%s270 + $0x3d] sm:$0xff]
          %v1776 = vld [vmem:[%s270 + $0x45] sm:$0xff]
          %v1777 = vld [vmem:[%s270 + $0x4d] sm:$0xff]
          %v1778 = vld [vmem:[%s270 + $0x55] sm:$0xff]
          %v1779 = vld [vmem:[%s270 + $0x5d] sm:$0xff]
          %v1780 = vld [vmem:[%s270 + $0x65] sm:$0xff]
          %v1781 = vld [vmem:[%s270 + $0x6d] sm:$0xff]
          %v1782 = vld [vmem:[%s270 + $0x75] sm:$0xff]
          %v1783 = vld [vmem:[%s270 + $0x7d] sm:$0xff]
          %v1784 = vld [vmem:[%s270 + $0x85] sm:$0xff]
          %v1785 = vld [vmem:[%s270 + $0x8d] sm:$0xff]
          %v1786 = vld [vmem:[%s270 + $0x95] sm:$0xff]
          %v1787 = vld [vmem:[%s270 + $0x9d] sm:$0xff]
          %v1788 = vld [vmem:[%s270 + $0xa5] sm:$0xff]
          %v1789 = vld [vmem:[%s270 + $0xad] sm:$0xff]
          %v1790 = vld [vmem:[%s274] sm:$0xf]
          %vm1791 = vcmask 31744
          %v1793 = vsel %vm1791, %v1772, 0
          %v1796 = vsel %vm1791, %v1773, 0
          %v1799 = vsel %vm1791, %v1774, 0
          %v1802 = vsel %vm1791, %v1775, 0
          %v1805 = vsel %vm1791, %v1776, 0
          %v1808 = vsel %vm1791, %v1777, 0
          %v1811 = vsel %vm1791, %v1778, 0
          %v1814 = vsel %vm1791, %v1779, 0
          %v1817 = vsel %vm1791, %v1780, 0
          %v1820 = vsel %vm1791, %v1781, 0
          %v1823 = vsel %vm1791, %v1782, 0
          %v1826 = vsel %vm1791, %v1783, 0
          %v1829 = vsel %vm1791, %v1784, 0
          %v1832 = vsel %vm1791, %v1785, 0
          %v1835 = vsel %vm1791, %v1786, 0
          %v1838 = vsel %vm1791, %v1787, 0
          %v1841 = vsel %vm1791, %v1788, 0
          %v1844 = vsel %vm1791, %v1789, 0
          %vm1846 = vcmask 1043456
          %v1848 = vsel %vm1846, %v1790, 0
          %1850 = vmatpush.msra.mxu0 0.0
          %1851 = vmatpush.msra.mxu0 0.0
          %1852 = vmatpush.msra.mxu0 0.0
          %1853 = vmatpush.msra.mxu0 0.0
          %1854 = vmatpush.msra.mxu0 0.0
          %1855 = vmatpush.msra.mxu0 0.0
          %1856 = vmatpush.msra.mxu0 0.0
          %1857 = vmatpush.msra.mxu0 0.0
          %1858 = vmatpush.msra.mxu0 0.0
          %1859 = vmatpush.msra.mxu0 0.0
          %1860 = vmatpush.msra.mxu0 0.0
          %1861 = vmatpush.msra.mxu0 0.0
          %1862 = vmatpush.msra.mxu0 0.0
          %1863 = vmatpush.msra.mxu0 0.0
          %1864 = vmatpush.msra.mxu0 0.0
          %1865 = vmatpush.msra.mxu0 %v1848
          %1866 = vmatmul.f32.gmra.mxu0 %v1793
          %v1867 = vpop.f32.mrf.mxu0
          %v1868 = vadd.f32 0.0, %v1867
          %1869 = vmatmul.f32.gmra.mxu0 %v1796
          %v1870 = vpop.f32.mrf.mxu0
          %v1871 = vadd.f32 0.0, %v1870
          %1872 = vmatmul.f32.gmra.mxu0 %v1799
          %v1873 = vpop.f32.mrf.mxu0
          %v1874 = vadd.f32 0.0, %v1873
          %1875 = vmatmul.f32.gmra.mxu0 %v1802
          %v1876 = vpop.f32.mrf.mxu0
          %v1877 = vadd.f32 0.0, %v1876
          %1878 = vmatmul.f32.gmra.mxu0 %v1805
          %v1879 = vpop.f32.mrf.mxu0
          %v1880 = vadd.f32 0.0, %v1879
          %1881 = vmatmul.f32.gmra.mxu0 %v1808
          %v1882 = vpop.f32.mrf.mxu0
          %v1883 = vadd.f32 0.0, %v1882
          %1884 = vmatmul.f32.gmra.mxu0 %v1811
          %v1885 = vpop.f32.mrf.mxu0
          %v1886 = vadd.f32 0.0, %v1885
          %1887 = vmatmul.f32.gmra.mxu0 %v1814
          %v1888 = vpop.f32.mrf.mxu0
          %v1889 = vadd.f32 0.0, %v1888
          %1890 = vmatmul.f32.gmra.mxu0 %v1817
          %v1891 = vpop.f32.mrf.mxu0
          %v1892 = vadd.f32 0.0, %v1891
          %1893 = vmatmul.f32.gmra.mxu0 %v1820
          %v1894 = vpop.f32.mrf.mxu0
          %v1895 = vadd.f32 0.0, %v1894
          %1896 = vmatmul.f32.gmra.mxu0 %v1823
          %v1897 = vpop.f32.mrf.mxu0
          %v1898 = vadd.f32 0.0, %v1897
          %1899 = vmatmul.f32.gmra.mxu0 %v1826
          %v1900 = vpop.f32.mrf.mxu0
          %v1901 = vadd.f32 0.0, %v1900
          %1902 = vmatmul.f32.gmra.mxu0 %v1829
          %v1903 = vpop.f32.mrf.mxu0
          %v1904 = vadd.f32 0.0, %v1903
          %1905 = vmatmul.f32.gmra.mxu0 %v1832
          %v1906 = vpop.f32.mrf.mxu0
          %v1907 = vadd.f32 0.0, %v1906
          %1908 = vmatmul.f32.gmra.mxu0 %v1835
          %v1909 = vpop.f32.mrf.mxu0
          %v1910 = vadd.f32 0.0, %v1909
          %1911 = vmatmul.f32.gmra.mxu0 %v1838
          %v1912 = vpop.f32.mrf.mxu0
          %v1913 = vadd.f32 0.0, %v1912
          %1914 = vmatmul.f32.gmra.mxu0 %v1841
          %v1915 = vpop.f32.mrf.mxu0
          %v1916 = vadd.f32 0.0, %v1915
          %1917 = vmatmul.f32.gmra.mxu0 %v1844
          %v1918 = vpop.f32.mrf.mxu0
          %v1919 = vadd.f32 0.0, %v1918
          %1920 = vdwg.mxu0
          %v1921 = vadd.f32 %v1754, %v1868
          %v1922 = vadd.f32 %v1755, %v1871
          %v1923 = vadd.f32 %v1756, %v1874
          %v1924 = vadd.f32 %v1757, %v1877
          %v1925 = vadd.f32 %v1758, %v1880
          %v1926 = vadd.f32 %v1759, %v1883
          %v1927 = vadd.f32 %v1760, %v1886
          %v1928 = vadd.f32 %v1761, %v1889
          %v1929 = vadd.f32 %v1762, %v1892
          %v1930 = vadd.f32 %v1763, %v1895
          %v1931 = vadd.f32 %v1764, %v1898
          %v1932 = vadd.f32 %v1765, %v1901
          %v1933 = vadd.f32 %v1766, %v1904
          %v1934 = vadd.f32 %v1767, %v1907
          %v1935 = vadd.f32 %v1768, %v1910
          %v1936 = vadd.f32 %v1769, %v1913
          %v1937 = vadd.f32 %v1770, %v1916
          %v1938 = vadd.f32 %v1771, %v1919
          %vm1939 = vcmask 64512
          %1940 = vst.msk [vmem:[#allocation2] sm:$0xff] %vm1939, %v1921
          %1941 = vst.msk [vmem:[#allocation2 + $0x8] sm:$0xff] %vm1939, %v1922
          %1942 = vst.msk [vmem:[#allocation2 + $0x10] sm:$0xff] %vm1939, %v1923
          %1943 = vst.msk [vmem:[#allocation2 + $0x18] sm:$0xff] %vm1939, %v1924
          %1944 = vst.msk [vmem:[#allocation2 + $0x20] sm:$0xff] %vm1939, %v1925
          %1945 = vst.msk [vmem:[#allocation2 + $0x28] sm:$0xff] %vm1939, %v1926
          %1946 = vst.msk [vmem:[#allocation2 + $0x30] sm:$0xff] %vm1939, %v1927
          %1947 = vst.msk [vmem:[#allocation2 + $0x38] sm:$0xff] %vm1939, %v1928
          %1948 = vst.msk [vmem:[#allocation2 + $0x40] sm:$0xff] %vm1939, %v1929
          %1949 = vst.msk [vmem:[#allocation2 + $0x48] sm:$0xff] %vm1939, %v1930
          %1950 = vst.msk [vmem:[#allocation2 + $0x50] sm:$0xff] %vm1939, %v1931
          %1951 = vst.msk [vmem:[#allocation2 + $0x58] sm:$0xff] %vm1939, %v1932
          %1952 = vst.msk [vmem:[#allocation2 + $0x60] sm:$0xff] %vm1939, %v1933
          %1953 = vst.msk [vmem:[#allocation2 + $0x68] sm:$0xff] %vm1939, %v1934
          %1954 = vst.msk [vmem:[#allocation2 + $0x70] sm:$0xff] %vm1939, %v1935
          %1955 = vst.msk [vmem:[#allocation2 + $0x78] sm:$0xff] %vm1939, %v1936
          %1956 = vst.msk [vmem:[#allocation2 + $0x80] sm:$0xff] %vm1939, %v1937
          %1957 = vst.msk [vmem:[#allocation2 + $0x88] sm:$0xff] %vm1939, %v1938
        $region72: #{tpu_custom_call.1} parent=39 // pred_fallthru
          _
        %p1958 = scmp.eq.s32.totalorder %s26, 8
        // Predicated region
        $region73: #{tpu_custom_call.1} parent=39 // pred_check
          %p1959 = pneg %p1958
        $region74: #{tpu_custom_call.1} parent=39 // pred_check_branch
          %1961 = sbr.rel (%p1959) target = $region76
        $region75: #{tpu_custom_call.1} parent=39 // pred_region
          %v1962 = vld [vmem:[#allocation2] sm:$0xff]
          %v1963 = vld [vmem:[#allocation2 + $0x8] sm:$0xff]
          %v1964 = vld [vmem:[#allocation2 + $0x10] sm:$0xff]
          %v1965 = vld [vmem:[#allocation2 + $0x18] sm:$0xff]
          %v1966 = vld [vmem:[#allocation2 + $0x20] sm:$0xff]
          %v1967 = vld [vmem:[#allocation2 + $0x28] sm:$0xff]
          %v1968 = vld [vmem:[#allocation2 + $0x30] sm:$0xff]
          %v1969 = vld [vmem:[#allocation2 + $0x38] sm:$0xff]
          %v1970 = vld [vmem:[#allocation2 + $0x40] sm:$0xff]
          %v1971 = vld [vmem:[#allocation2 + $0x48] sm:$0xff]
          %v1972 = vld [vmem:[#allocation2 + $0x50] sm:$0xff]
          %v1973 = vld [vmem:[#allocation2 + $0x58] sm:$0xff]
          %v1974 = vld [vmem:[#allocation2 + $0x60] sm:$0xff]
          %v1975 = vld [vmem:[#allocation2 + $0x68] sm:$0xff]
          %v1976 = vld [vmem:[#allocation2 + $0x70] sm:$0xff]
          %v1977 = vld [vmem:[#allocation2 + $0x78] sm:$0xff]
          %v1978 = vld [vmem:[#allocation2 + $0x80] sm:$0xff]
          %v1979 = vld [vmem:[#allocation2 + $0x88] sm:$0xff]
          %v1980 = vld [vmem:[%s270 + $0x26] sm:$0xff]
          %v1981 = vld [vmem:[%s270 + $0x2e] sm:$0xff]
          %v1982 = vld [vmem:[%s270 + $0x36] sm:$0xff]
          %v1983 = vld [vmem:[%s270 + $0x3e] sm:$0xff]
          %v1984 = vld [vmem:[%s270 + $0x46] sm:$0xff]
          %v1985 = vld [vmem:[%s270 + $0x4e] sm:$0xff]
          %v1986 = vld [vmem:[%s270 + $0x56] sm:$0xff]
          %v1987 = vld [vmem:[%s270 + $0x5e] sm:$0xff]
          %v1988 = vld [vmem:[%s270 + $0x66] sm:$0xff]
          %v1989 = vld [vmem:[%s270 + $0x6e] sm:$0xff]
          %v1990 = vld [vmem:[%s270 + $0x76] sm:$0xff]
          %v1991 = vld [vmem:[%s270 + $0x7e] sm:$0xff]
          %v1992 = vld [vmem:[%s270 + $0x86] sm:$0xff]
          %v1993 = vld [vmem:[%s270 + $0x8e] sm:$0xff]
          %v1994 = vld [vmem:[%s270 + $0x96] sm:$0xff]
          %v1995 = vld [vmem:[%s270 + $0x9e] sm:$0xff]
          %v1996 = vld [vmem:[%s270 + $0xa6] sm:$0xff]
          %v1997 = vld [vmem:[%s270 + $0xae] sm:$0xff]
          %v1998 = vld [vmem:[%s274] sm:$0xf]
          %vm1999 = vcmask 31744
          %v2001 = vsel %vm1999, %v1980, 0
          %v2004 = vsel %vm1999, %v1981, 0
          %v2007 = vsel %vm1999, %v1982, 0
          %v2010 = vsel %vm1999, %v1983, 0
          %v2013 = vsel %vm1999, %v1984, 0
          %v2016 = vsel %vm1999, %v1985, 0
          %v2019 = vsel %vm1999, %v1986, 0
          %v2022 = vsel %vm1999, %v1987, 0
          %v2025 = vsel %vm1999, %v1988, 0
          %v2028 = vsel %vm1999, %v1989, 0
          %v2031 = vsel %vm1999, %v1990, 0
          %v2034 = vsel %vm1999, %v1991, 0
          %v2037 = vsel %vm1999, %v1992, 0
          %v2040 = vsel %vm1999, %v1993, 0
          %v2043 = vsel %vm1999, %v1994, 0
          %v2046 = vsel %vm1999, %v1995, 0
          %v2049 = vsel %vm1999, %v1996, 0
          %v2052 = vsel %vm1999, %v1997, 0
          %vm2054 = vcmask 1043456
          %v2056 = vsel %vm2054, %v1998, 0
          %2058 = vmatpush.msra.mxu0 0.0
          %2059 = vmatpush.msra.mxu0 0.0
          %2060 = vmatpush.msra.mxu0 0.0
          %2061 = vmatpush.msra.mxu0 0.0
          %2062 = vmatpush.msra.mxu0 0.0
          %2063 = vmatpush.msra.mxu0 0.0
          %2064 = vmatpush.msra.mxu0 0.0
          %2065 = vmatpush.msra.mxu0 0.0
          %2066 = vmatpush.msra.mxu0 0.0
          %2067 = vmatpush.msra.mxu0 0.0
          %2068 = vmatpush.msra.mxu0 0.0
          %2069 = vmatpush.msra.mxu0 0.0
          %2070 = vmatpush.msra.mxu0 0.0
          %2071 = vmatpush.msra.mxu0 0.0
          %2072 = vmatpush.msra.mxu0 0.0
          %2073 = vmatpush.msra.mxu0 %v2056
          %2074 = vmatmul.f32.gmra.mxu0 %v2001
          %v2075 = vpop.f32.mrf.mxu0
          %v2076 = vadd.f32 0.0, %v2075
          %2077 = vmatmul.f32.gmra.mxu0 %v2004
          %v2078 = vpop.f32.mrf.mxu0
          %v2079 = vadd.f32 0.0, %v2078
          %2080 = vmatmul.f32.gmra.mxu0 %v2007
          %v2081 = vpop.f32.mrf.mxu0
          %v2082 = vadd.f32 0.0, %v2081
          %2083 = vmatmul.f32.gmra.mxu0 %v2010
          %v2084 = vpop.f32.mrf.mxu0
          %v2085 = vadd.f32 0.0, %v2084
          %2086 = vmatmul.f32.gmra.mxu0 %v2013
          %v2087 = vpop.f32.mrf.mxu0
          %v2088 = vadd.f32 0.0, %v2087
          %2089 = vmatmul.f32.gmra.mxu0 %v2016
          %v2090 = vpop.f32.mrf.mxu0
          %v2091 = vadd.f32 0.0, %v2090
          %2092 = vmatmul.f32.gmra.mxu0 %v2019
          %v2093 = vpop.f32.mrf.mxu0
          %v2094 = vadd.f32 0.0, %v2093
          %2095 = vmatmul.f32.gmra.mxu0 %v2022
          %v2096 = vpop.f32.mrf.mxu0
          %v2097 = vadd.f32 0.0, %v2096
          %2098 = vmatmul.f32.gmra.mxu0 %v2025
          %v2099 = vpop.f32.mrf.mxu0
          %v2100 = vadd.f32 0.0, %v2099
          %2101 = vmatmul.f32.gmra.mxu0 %v2028
          %v2102 = vpop.f32.mrf.mxu0
          %v2103 = vadd.f32 0.0, %v2102
          %2104 = vmatmul.f32.gmra.mxu0 %v2031
          %v2105 = vpop.f32.mrf.mxu0
          %v2106 = vadd.f32 0.0, %v2105
          %2107 = vmatmul.f32.gmra.mxu0 %v2034
          %v2108 = vpop.f32.mrf.mxu0
          %v2109 = vadd.f32 0.0, %v2108
          %2110 = vmatmul.f32.gmra.mxu0 %v2037
          %v2111 = vpop.f32.mrf.mxu0
          %v2112 = vadd.f32 0.0, %v2111
          %2113 = vmatmul.f32.gmra.mxu0 %v2040
          %v2114 = vpop.f32.mrf.mxu0
          %v2115 = vadd.f32 0.0, %v2114
          %2116 = vmatmul.f32.gmra.mxu0 %v2043
          %v2117 = vpop.f32.mrf.mxu0
          %v2118 = vadd.f32 0.0, %v2117
          %2119 = vmatmul.f32.gmra.mxu0 %v2046
          %v2120 = vpop.f32.mrf.mxu0
          %v2121 = vadd.f32 0.0, %v2120
          %2122 = vmatmul.f32.gmra.mxu0 %v2049
          %v2123 = vpop.f32.mrf.mxu0
          %v2124 = vadd.f32 0.0, %v2123
          %2125 = vmatmul.f32.gmra.mxu0 %v2052
          %v2126 = vpop.f32.mrf.mxu0
          %v2127 = vadd.f32 0.0, %v2126
          %2128 = vdwg.mxu0
          %v2129 = vadd.f32 %v1962, %v2076
          %v2130 = vadd.f32 %v1963, %v2079
          %v2131 = vadd.f32 %v1964, %v2082
          %v2132 = vadd.f32 %v1965, %v2085
          %v2133 = vadd.f32 %v1966, %v2088
          %v2134 = vadd.f32 %v1967, %v2091
          %v2135 = vadd.f32 %v1968, %v2094
          %v2136 = vadd.f32 %v1969, %v2097
          %v2137 = vadd.f32 %v1970, %v2100
          %v2138 = vadd.f32 %v1971, %v2103
          %v2139 = vadd.f32 %v1972, %v2106
          %v2140 = vadd.f32 %v1973, %v2109
          %v2141 = vadd.f32 %v1974, %v2112
          %v2142 = vadd.f32 %v1975, %v2115
          %v2143 = vadd.f32 %v1976, %v2118
          %v2144 = vadd.f32 %v1977, %v2121
          %v2145 = vadd.f32 %v1978, %v2124
          %v2146 = vadd.f32 %v1979, %v2127
          %vm2147 = vcmask 64512
          %2148 = vst.msk [vmem:[#allocation2] sm:$0xff] %vm2147, %v2129
          %2149 = vst.msk [vmem:[#allocation2 + $0x8] sm:$0xff] %vm2147, %v2130
          %2150 = vst.msk [vmem:[#allocation2 + $0x10] sm:$0xff] %vm2147, %v2131
          %2151 = vst.msk [vmem:[#allocation2 + $0x18] sm:$0xff] %vm2147, %v2132
          %2152 = vst.msk [vmem:[#allocation2 + $0x20] sm:$0xff] %vm2147, %v2133
          %2153 = vst.msk [vmem:[#allocation2 + $0x28] sm:$0xff] %vm2147, %v2134
          %2154 = vst.msk [vmem:[#allocation2 + $0x30] sm:$0xff] %vm2147, %v2135
          %2155 = vst.msk [vmem:[#allocation2 + $0x38] sm:$0xff] %vm2147, %v2136
          %2156 = vst.msk [vmem:[#allocation2 + $0x40] sm:$0xff] %vm2147, %v2137
          %2157 = vst.msk [vmem:[#allocation2 + $0x48] sm:$0xff] %vm2147, %v2138
          %2158 = vst.msk [vmem:[#allocation2 + $0x50] sm:$0xff] %vm2147, %v2139
          %2159 = vst.msk [vmem:[#allocation2 + $0x58] sm:$0xff] %vm2147, %v2140
          %2160 = vst.msk [vmem:[#allocation2 + $0x60] sm:$0xff] %vm2147, %v2141
          %2161 = vst.msk [vmem:[#allocation2 + $0x68] sm:$0xff] %vm2147, %v2142
          %2162 = vst.msk [vmem:[#allocation2 + $0x70] sm:$0xff] %vm2147, %v2143
          %2163 = vst.msk [vmem:[#allocation2 + $0x78] sm:$0xff] %vm2147, %v2144
          %2164 = vst.msk [vmem:[#allocation2 + $0x80] sm:$0xff] %vm2147, %v2145
          %2165 = vst.msk [vmem:[#allocation2 + $0x88] sm:$0xff] %vm2147, %v2146
          %v2166 = vld [vmem:[#allocation2] sm:$0xff]
          %v2167 = vld [vmem:[#allocation2 + $0x8] sm:$0xff]
          %v2168 = vld [vmem:[#allocation2 + $0x10] sm:$0xff]
          %v2169 = vld [vmem:[#allocation2 + $0x18] sm:$0xff]
          %v2170 = vld [vmem:[#allocation2 + $0x20] sm:$0xff]
          %v2171 = vld [vmem:[#allocation2 + $0x28] sm:$0xff]
          %v2172 = vld [vmem:[#allocation2 + $0x30] sm:$0xff]
          %v2173 = vld [vmem:[#allocation2 + $0x38] sm:$0xff]
          %v2174 = vld [vmem:[#allocation2 + $0x40] sm:$0xff]
          %v2175 = vld [vmem:[#allocation2 + $0x48] sm:$0xff]
          %v2176 = vld [vmem:[#allocation2 + $0x50] sm:$0xff]
          %v2177 = vld [vmem:[#allocation2 + $0x58] sm:$0xff]
          %v2178 = vld [vmem:[#allocation2 + $0x60] sm:$0xff]
          %v2179 = vld [vmem:[#allocation2 + $0x68] sm:$0xff]
          %v2180 = vld [vmem:[#allocation2 + $0x70] sm:$0xff]
          %v2181 = vld [vmem:[#allocation2 + $0x78] sm:$0xff]
          %v2182 = vld [vmem:[#allocation2 + $0x80] sm:$0xff]
          %v2183 = vld [vmem:[#allocation2 + $0x88] sm:$0xff]
          %v2184 = vld [vmem:[%s2] sm:$0x1]
          %v2186 = vperm.slane %v2184, 0
          %v2188 = vadd.f32 %v2166, %v2186
          %v2189 = vadd.f32 %v2167, %v2186
          %v2190 = vadd.f32 %v2168, %v2186
          %v2191 = vadd.f32 %v2169, %v2186
          %v2192 = vadd.f32 %v2170, %v2186
          %v2193 = vadd.f32 %v2171, %v2186
          %v2194 = vadd.f32 %v2172, %v2186
          %v2195 = vadd.f32 %v2173, %v2186
          %v2196 = vadd.f32 %v2174, %v2186
          %v2197 = vadd.f32 %v2175, %v2186
          %v2198 = vadd.f32 %v2176, %v2186
          %v2199 = vadd.f32 %v2177, %v2186
          %v2200 = vadd.f32 %v2178, %v2186
          %v2201 = vadd.f32 %v2179, %v2186
          %v2202 = vadd.f32 %v2180, %v2186
          %v2203 = vadd.f32 %v2181, %v2186
          %v2204 = vadd.f32 %v2182, %v2186
          %v2205 = vadd.f32 %v2183, %v2186
          %v2206 = vmul.f32 %v2188, 0.1
          %v2207 = vmul.f32 %v2189, 0.1
          %v2208 = vmul.f32 %v2190, 0.1
          %v2209 = vmul.f32 %v2191, 0.1
          %v2210 = vmul.f32 %v2192, 0.1
          %v2211 = vmul.f32 %v2193, 0.1
          %v2212 = vmul.f32 %v2194, 0.1
          %v2213 = vmul.f32 %v2195, 0.1
          %v2214 = vmul.f32 %v2196, 0.1
          %v2215 = vmul.f32 %v2197, 0.1
          %v2216 = vmul.f32 %v2198, 0.1
          %v2217 = vmul.f32 %v2199, 0.1
          %v2218 = vmul.f32 %v2200, 0.1
          %v2219 = vmul.f32 %v2201, 0.1
          %v2220 = vmul.f32 %v2202, 0.1
          %v2221 = vmul.f32 %v2203, 0.1
          %v2222 = vmul.f32 %v2204, 0.1
          %v2223 = vmul.f32 %v2205, 0.1
          %v2224 = vmax.f32 %v2188, %v2206
          %v2225 = vmax.f32 %v2189, %v2207
          %v2226 = vmax.f32 %v2190, %v2208
          %v2227 = vmax.f32 %v2191, %v2209
          %v2228 = vmax.f32 %v2192, %v2210
          %v2229 = vmax.f32 %v2193, %v2211
          %v2230 = vmax.f32 %v2194, %v2212
          %v2231 = vmax.f32 %v2195, %v2213
          %v2232 = vmax.f32 %v2196, %v2214
          %v2233 = vmax.f32 %v2197, %v2215
          %v2234 = vmax.f32 %v2198, %v2216
          %v2235 = vmax.f32 %v2199, %v2217
          %v2236 = vmax.f32 %v2200, %v2218
          %v2237 = vmax.f32 %v2201, %v2219
          %v2238 = vmax.f32 %v2202, %v2220
          %v2239 = vmax.f32 %v2203, %v2221
          %v2240 = vmax.f32 %v2204, %v2222
          %v2241 = vmax.f32 %v2205, %v2223
          %v2242 = vld [vmem:[%s3] sm:$0xff]
          %v2243 = vld [vmem:[%s4] sm:$0x1]
          %v2245 = vperm.slane %v2243, 0
          %v2248 = vsel %vm2147, %v2224, 0
          %v2251 = vsel %vm2147, %v2225, 0
          %v2254 = vsel %vm2147, %v2226, 0
          %v2257 = vsel %vm2147, %v2227, 0
          %v2260 = vsel %vm2147, %v2228, 0
          %v2263 = vsel %vm2147, %v2229, 0
          %v2266 = vsel %vm2147, %v2230, 0
          %v2269 = vsel %vm2147, %v2231, 0
          %v2272 = vsel %vm2147, %v2232, 0
          %v2275 = vsel %vm2147, %v2233, 0
          %v2278 = vsel %vm2147, %v2234, 0
          %v2281 = vsel %vm2147, %v2235, 0
          %v2284 = vsel %vm2147, %v2236, 0
          %v2287 = vsel %vm2147, %v2237, 0
          %v2290 = vsel %vm2147, %v2238, 0
          %v2293 = vsel %vm2147, %v2239, 0
          %v2296 = vsel %vm2147, %v2240, 0
          %v2299 = vsel %vm2147, %v2241, 0
          %2301 = vmatpush.msra.mxu0 0.0
          %2302 = vmatpush.msra.mxu0 0.0
          %2303 = vmatpush.msra.mxu0 0.0
          %2304 = vmatpush.msra.mxu0 0.0
          %2305 = vmatpush.msra.mxu0 0.0
          %2306 = vmatpush.msra.mxu0 0.0
          %2307 = vmatpush.msra.mxu0 0.0
          %2308 = vmatpush.msra.mxu0 0.0
          %2309 = vmatpush.msra.mxu0 0.0
          %2310 = vmatpush.msra.mxu0 0.0
          %2311 = vmatpush.msra.mxu0 0.0
          %2312 = vmatpush.msra.mxu0 0.0
          %2313 = vmatpush.msra.mxu0 0.0
          %2314 = vmatpush.msra.mxu0 0.0
          %2315 = vmatpush.msra.mxu0 0.0
          %2316 = vmatpush.msra.mxu0 %v2242
          %2317 = vmatmul.f32.gmra.mxu0 %v2248
          %v2318 = vpop.f32.mrf.mxu0
          %v2319 = vadd.f32 %v2245, %v2318
          %2320 = vmatmul.f32.gmra.mxu0 %v2251
          %v2321 = vpop.f32.mrf.mxu0
          %v2322 = vadd.f32 %v2245, %v2321
          %2323 = vmatmul.f32.gmra.mxu0 %v2254
          %v2324 = vpop.f32.mrf.mxu0
          %v2325 = vadd.f32 %v2245, %v2324
          %2326 = vmatmul.f32.gmra.mxu0 %v2257
          %v2327 = vpop.f32.mrf.mxu0
          %v2328 = vadd.f32 %v2245, %v2327
          %2329 = vmatmul.f32.gmra.mxu0 %v2260
          %v2330 = vpop.f32.mrf.mxu0
          %v2331 = vadd.f32 %v2245, %v2330
          %2332 = vmatmul.f32.gmra.mxu0 %v2263
          %v2333 = vpop.f32.mrf.mxu0
          %v2334 = vadd.f32 %v2245, %v2333
          %2335 = vmatmul.f32.gmra.mxu0 %v2266
          %v2336 = vpop.f32.mrf.mxu0
          %v2337 = vadd.f32 %v2245, %v2336
          %2338 = vmatmul.f32.gmra.mxu0 %v2269
          %v2339 = vpop.f32.mrf.mxu0
          %v2340 = vadd.f32 %v2245, %v2339
          %2341 = vmatmul.f32.gmra.mxu0 %v2272
          %v2342 = vpop.f32.mrf.mxu0
          %v2343 = vadd.f32 %v2245, %v2342
          %2344 = vmatmul.f32.gmra.mxu0 %v2275
          %v2345 = vpop.f32.mrf.mxu0
          %v2346 = vadd.f32 %v2245, %v2345
          %2347 = vmatmul.f32.gmra.mxu0 %v2278
          %v2348 = vpop.f32.mrf.mxu0
          %v2349 = vadd.f32 %v2245, %v2348
          %2350 = vmatmul.f32.gmra.mxu0 %v2281
          %v2351 = vpop.f32.mrf.mxu0
          %v2352 = vadd.f32 %v2245, %v2351
          %2353 = vmatmul.f32.gmra.mxu0 %v2284
          %v2354 = vpop.f32.mrf.mxu0
          %v2355 = vadd.f32 %v2245, %v2354
          %2356 = vmatmul.f32.gmra.mxu0 %v2287
          %v2357 = vpop.f32.mrf.mxu0
          %v2358 = vadd.f32 %v2245, %v2357
          %2359 = vmatmul.f32.gmra.mxu0 %v2290
          %v2360 = vpop.f32.mrf.mxu0
          %v2361 = vadd.f32 %v2245, %v2360
          %2362 = vmatmul.f32.gmra.mxu0 %v2293
          %v2363 = vpop.f32.mrf.mxu0
          %v2364 = vadd.f32 %v2245, %v2363
          %2365 = vmatmul.f32.gmra.mxu0 %v2296
          %v2366 = vpop.f32.mrf.mxu0
          %v2367 = vadd.f32 %v2245, %v2366
          %2368 = vmatmul.f32.gmra.mxu0 %v2299
          %v2369 = vpop.f32.mrf.mxu0
          %v2370 = vadd.f32 %v2245, %v2369
          %2371 = vdwg.mxu0
          %2372 = vst [vmem:[%s261] sm:$0xff] %v2319
          %2373 = vst [vmem:[%s261 + $0x8] sm:$0xff] %v2322
          %2374 = vst [vmem:[%s261 + $0x10] sm:$0xff] %v2325
          %2375 = vst [vmem:[%s261 + $0x18] sm:$0xff] %v2328
          %2376 = vst [vmem:[%s261 + $0x20] sm:$0xff] %v2331
          %2377 = vst [vmem:[%s261 + $0x28] sm:$0xff] %v2334
          %2378 = vst [vmem:[%s261 + $0x30] sm:$0xff] %v2337
          %2379 = vst [vmem:[%s261 + $0x38] sm:$0xff] %v2340
          %2380 = vst [vmem:[%s261 + $0x40] sm:$0xff] %v2343
          %2381 = vst [vmem:[%s261 + $0x48] sm:$0xff] %v2346
          %2382 = vst [vmem:[%s261 + $0x50] sm:$0xff] %v2349
          %2383 = vst [vmem:[%s261 + $0x58] sm:$0xff] %v2352
          %2384 = vst [vmem:[%s261 + $0x60] sm:$0xff] %v2355
          %2385 = vst [vmem:[%s261 + $0x68] sm:$0xff] %v2358
          %2386 = vst [vmem:[%s261 + $0x70] sm:$0xff] %v2361
          %2387 = vst [vmem:[%s261 + $0x78] sm:$0xff] %v2364
          %2388 = vst [vmem:[%s261 + $0x80] sm:$0xff] %v2367
          %2389 = vst [vmem:[%s261 + $0x88] sm:$0xff] %v2370
        $region76: #{tpu_custom_call.1} parent=39 // pred_fallthru
          _
        %s2390 = sand.u32 %s165, 1
        %s2391 = scalar_lea.sflag [#allocation4], %s2390
        %s2392 = sand.u32 %s165, 1
        %s2393 = smul.addr %s2392, 144
        %s2394 = scalar_lea.vmem [#allocation3], %s2393
        // Predicated region
        $region77: #{tpu_custom_call.1} parent=39 // pred_check
          %p2395 = pneg %p175
        $region78: #{tpu_custom_call.1} parent=39 // pred_check_branch
          %2397 = sbr.rel (%p2395) target = $region80
        $region79: #{tpu_custom_call.1} parent=39 // pred_region
          %s2398 = smul.u32 18, %s25
          %2400 = vsyncadd %s2391, 0
          %s2401 = smul.addr %s24, 36
          %s2402 = sadd.s32 %s2398, %s2401
          %s2403 = smul.addr %s2402, 8
          %s2404 = scalar_lea.hbm %s5, %s2403
          %s2405 = sshll.u32 %s2394, 4
          %s2406 = int_to_ptr.vmem [resolvable:$true] %s2405
          %s2407 = sshll.u32 %s2404, 4
          %s2408 = int_to_ptr.hbm [resolvable:$true] %s2407
          %2413 = dma.vmem_to_hbm [thread:$0]  %s2406, 2304, %s2408, %s2391, 128, 128, 8
        $region80: #{tpu_custom_call.1} parent=39 // pred_fallthru
          _
      $region40: #{tpu_custom_call.1} parent=5 // pred_fallthru
        _
      %p2414 = scmp.le.s32.totalorder 2, %s14
      // Predicated region
      $region81: #{tpu_custom_call.1} parent=5 // pred_check
        %p2415 = pneg %p2414
      $region82: #{tpu_custom_call.1} parent=5 // pred_check_branch
        %2417 = sbr.rel (%p2415) target = $region84
      $region83: #{tpu_custom_call.1} parent=5 // pred_region
        %s2418 = ssub.s32 %s14, 2
        // Predicated region
        $region85: #{tpu_custom_call.1} parent=83 // pred_check
          %p2419 = pneg %p181
        $region86: #{tpu_custom_call.1} parent=83 // pred_check_branch
          %2421 = sbr.rel (%p2419) target = $region88
        $region87: #{tpu_custom_call.1} parent=83 // pred_region
          %s2422 = sand.u32 %s166, 1
          %s2423 = scalar_lea.sflag [#allocation4], %s2422
          %s2424 = sand.u32 %s166, 1
          %s2425 = smul.addr %s2424, 144
          %s2426 = scalar_lea.vmem [#allocation3], %s2425
          %2428 = dma.done %s2423, 2304
        $region88: #{tpu_custom_call.1} parent=83 // pred_fallthru
          _
      $region84: #{tpu_custom_call.1} parent=5 // pred_fallthru
        _
    $region6: #{tpu_custom_call.1} parent=1 // loop_footer
      %s18 = sadd.s32 1, %s14
    $region7: #{tpu_custom_call.1} parent=1 // loop_footer_branch
      %13 = sbr.rel target = $region3
    $region8: #{tpu_custom_call.1} parent=1 // loop_exit
      _
    %2429 = vsyncpa [#allocation4], 1
    %s2430 = scalar_lea.sflag [#allocation4], 1
    %2431 = vsyncpa %s2430, 1

// kernel: tpu_custom_call.1
$region0: #{tpu_custom_call.1}
  #allocation0 [shape = 'u32[]', space=smem, size = 0x4, offset = 0x4, fixed_abs, tag = 'smem constant byte address 0x4 - core index']
  #allocation1 [shape = 'u32[72,128]{1,0:T(1,128)}', space=vmem, size = 0x9000, scoped, tag = 'internal scratch']
  #allocation2 [shape = 'f32[144,8]{1,0:T(8,128)}', space=vmem, size = 0x12000, scoped, tag = 'scratch operand']
  %s0 = inlined_call_operand.vmem [shape: f32[2,2,198,4], index: 0, kind: input, shape index: {}]
  %s1 = inlined_call_operand.vmem [shape: f32[9,4,8], index: 1, kind: input, shape index: {}]
  %s2 = inlined_call_operand.vmem [shape: f32[1,8], index: 2, kind: input, shape index: {}]
  %s3 = inlined_call_operand.vmem [shape: f32[8,128], index: 3, kind: input, shape index: {}]
  %s4 = inlined_call_operand.vmem [shape: f32[1,128], index: 4, kind: input, shape index: {}]
  %s5 = inlined_call_operand.hbm [shape: f32[2,288,128], index: 5, kind: output, shape index: {}]
  %s6 = sld [smem:[#allocation0]]
  $region89: #{tpu_custom_call.1} parent=0
    _
  %s8 = ssub.s32 1, %s6
  %s9 = scalar_select 0, %s8, %s6
  $region1: #{tpu_custom_call.1} parent=0
    #allocation3 [shape = 'u8[147456]{0}', space=vmem, size = 0x24000, scoped, tag = 'output window, operand 0']
    #allocation4 [shape = 's32[2]{0}', space=sflag, size = 0x8, scoped, tag = 'scoped memory for tpu_custom_call.1']
    %10 = vsyncpa [#allocation4], 0
    %s11 = scalar_lea.sflag [#allocation4], 1
    %12 = vsyncpa %s11, 0
    loop: start=0, step=1, limit=38
    $region2: #{tpu_custom_call.1} parent=1 // loop_pre_header
      _
    $region3: #{tpu_custom_call.1} parent=1 // loop_header
      %s14 = sphi 0, %s18
      %p15 = scmp.ge.s32.totalorder %s14, 38
      %s21 = sphi 0, %s40
      %s22 = sphi 0, %s36
      %s23 = sphi 0, %s32
      %s24 = sphi 0, %s21
      %s25 = sphi 0, %s22
      %s26 = sphi 0, %s23
      %s27 = sphi 0, %s24
      %s28 = sphi 0, %s25
      %s29 = sphi 0, %s26
      %s45 = sphi 0, %s47
      %s48 = sphi 0, %s45
      %s49 = sphi 0, %s48
      %s65 = sphi 0, %s49
      %s71 = sphi 0, %s73
      %s74 = sphi 0, %s71
      %s75 = sphi 0, %s74
      %s91 = sphi 0, %s75
      %s95 = sphi 0, %s95
      %s97 = sphi 0, %s95
      %s98 = sphi 0, %s97
      %s112 = sphi 0, %s98
      %s116 = sphi 0, %s116
      %s118 = sphi 0, %s116
      %s119 = sphi 0, %s118
      %s133 = sphi 0, %s119
      %s137 = sphi 0, %s137
      %s139 = sphi 0, %s137
      %s140 = sphi 0, %s139
      %s154 = sphi 0, %s140
      %s162 = sphi 0, %s164
      %s165 = sphi 0, %s162
      %s166 = sphi 0, %s165
      %s182 = sphi 0, %s166
    $region4: #{tpu_custom_call.1} parent=1 // loop_header_branch
      %17 = sbr.rel (%p15) target = $region8
    $region5: #{tpu_custom_call.1} parent=1 // loop_body
      %s19 = ssub.s32 %s14, 1
      %s20 = ssub.s32 %s14, 2
      %s30 = sadd.s32 1, %s23
      %p31 = scmp.ge.s32.totalorder %s30, 9
      %s32 = scalar_select %p31, 0, %s30
      %s33 = sadd.s32 1, %s22
      %s34 = scalar_select %p31, %s33, %s22
      %p35 = scmp.ge.s32.totalorder %s34, 2
      %s36 = scalar_select %p35, 0, %s34
      %s37 = sadd.s32 1, %s21
      %s38 = scalar_select %p35, %s37, %s21
      %p39 = scmp.ge.s32.totalorder %s38, 2
      %s40 = scalar_select %p39, 0, %s38
      %s41 = ssub.s32 %s21, %s40
      %s42 = ssub.s32 %s22, %s36
      %s43 = sor.u32 %s41, %s42
      %p44 = scmp.eq.s32.totalorder %s43, 0
      %s46 = sadd.s32 %s45, 1
      %s47 = scalar_select %p44, %s45, %s46
      %p50 = pneg %p44
      %p51 = scmp.eq.s32.totalorder %s14, 35
      %p52 = por %p50, %p51
      %p53 = scmp.ne.s32.totalorder %s45, %s48
      %p54 = scmp.eq.s32.totalorder %s14, 0
      %p55 = por %p53, %p54
      %p56 = scmp.ne.s32.totalorder %s45, %s48
      %p57 = scmp.eq.s32.totalorder %s19, 35
      %p58 = por %p56, %p57
      %p59 = scmp.ne.s32.totalorder %s48, %s49
      %p60 = scmp.eq.s32.totalorder %s19, 0
      %p61 = por %p59, %p60
      %p62 = scmp.ne.s32.totalorder %s48, %s49
      %p63 = scmp.eq.s32.totalorder %s20, 35
      %p64 = por %p62, %p63
      %p66 = scmp.ne.s32.totalorder %s49, %s65
      %p67 = scmp.eq.s32.totalorder %s20, 0
      %p68 = por %p66, %p67
      %s69 = ssub.s32 %s23, %s32
      %p70 = scmp.eq.s32.totalorder %s69, 0
      %s72 = sadd.s32 %s71, 1
      %s73 = scalar_select %p70, %s71, %s72
      %p76 = pneg %p70
      %p77 = scmp.eq.s32.totalorder %s14, 35
      %p78 = por %p76, %p77
      %p79 = scmp.ne.s32.totalorder %s71, %s74
      %p80 = scmp.eq.s32.totalorder %s14, 0
      %p81 = por %p79, %p80
      %p82 = scmp.ne.s32.totalorder %s71, %s74
      %p83 = scmp.eq.s32.totalorder %s19, 35
      %p84 = por %p82, %p83
      %p85 = scmp.ne.s32.totalorder %s74, %s75
      %p86 = scmp.eq.s32.totalorder %s19, 0
      %p87 = por %p85, %p86
      %p88 = scmp.ne.s32.totalorder %s74, %s75
      %p89 = scmp.eq.s32.totalorder %s20, 35
      %p90 = por %p88, %p89
      %p92 = scmp.ne.s32.totalorder %s75, %s91
      %p93 = scmp.eq.s32.totalorder %s20, 0
      %p94 = por %p92, %p93
      %s96 = sadd.s32 %s95, 1
      %p99 = scmp.eq.s32.totalorder %s14, 35
      %p100 = scmp.ne.s32.totalorder %s95, %s97
      %p101 = scmp.eq.s32.totalorder %s14, 0
      %p102 = por %p100, %p101
      %p103 = scmp.ne.s32.totalorder %s95, %s97
      %p104 = scmp.eq.s32.totalorder %s19, 35
      %p105 = por %p103, %p104
      %p106 = scmp.ne.s32.totalorder %s97, %s98
      %p107 = scmp.eq.s32.totalorder %s19, 0
      %p108 = por %p106, %p107
      %p109 = scmp.ne.s32.totalorder %s97, %s98
      %p110 = scmp.eq.s32.totalorder %s20, 35
      %p111 = por %p109, %p110
      %p113 = scmp.ne.s32.totalorder %s98, %s112
      %p114 = scmp.eq.s32.totalorder %s20, 0
      %p115 = por %p113, %p114
      %s117 = sadd.s32 %s116, 1
      %p120 = scmp.eq.s32.totalorder %s14, 35
      %p121 = scmp.ne.s32.totalorder %s116, %s118
      %p122 = scmp.eq.s32.totalorder %s14, 0
      %p123 = por %p121, %p122
      %p124 = scmp.ne.s32.totalorder %s116, %s118
      %p125 = scmp.eq.s32.totalorder %s19, 35
      %p126 = por %p124, %p125
      %p127 = scmp.ne.s32.totalorder %s118, %s119
      %p128 = scmp.eq.s32.totalorder %s19, 0
      %p129 = por %p127, %p128
      %p130 = scmp.ne.s32.totalorder %s118, %s119
      %p131 = scmp.eq.s32.totalorder %s20, 35
      %p132 = por %p130, %p131
      %p134 = scmp.ne.s32.totalorder %s119, %s133
      %p135 = scmp.eq.s32.totalorder %s20, 0
      %p136 = por %p134, %p135
      %s138 = sadd.s32 %s137, 1
      %p141 = scmp.eq.s32.totalorder %s14, 35
      %p142 = scmp.ne.s32.totalorder %s137, %s139
      %p143 = scmp.eq.s32.totalorder %s14, 0
      %p144 = por %p142, %p143
      %p145 = scmp.ne.s32.totalorder %s137, %s139
      %p146 = scmp.eq.s32.totalorder %s19, 35
      %p147 = por %p145, %p146
      %p148 = scmp.ne.s32.totalorder %s139, %s140
      %p149 = scmp.eq.s32.totalorder %s19, 0
      %p150 = por %p148, %p149
      %p151 = scmp.ne.s32.totalorder %s139, %s140
      %p152 = scmp.eq.s32.totalorder %s20, 35
      %p153 = por %p151, %p152
      %p155 = scmp.ne.s32.totalorder %s140, %s154
      %p156 = scmp.eq.s32.totalorder %s20, 0
      %p157 = por %p155, %p156
      %s158 = ssub.s32 %s21, %s40
      %s159 = ssub.s32 %s22, %s36
      %s160 = sor.u32 %s158, %s159
      %p161 = scmp.eq.s32.totalorder %s160, 0
      %s163 = sadd.s32 %s162, 1
      %s164 = scalar_select %p161, %s162, %s163
      %p167 = pneg %p161
      %p168 = scmp.eq.s32.totalorder %s14, 35
      %p169 = por %p167, %p168
      %p170 = scmp.ne.s32.totalorder %s162, %s165
      %p171 = scmp.eq.s32.totalorder %s14, 0
      %p172 = por %p170, %p171
      %p173 = scmp.ne.s32.totalorder %s162, %s165
      %p174 = scmp.eq.s32.totalorder %s19, 35
      %p175 = por %p173, %p174
      %p176 = scmp.ne.s32.totalorder %s165, %s166
      %p177 = scmp.eq.s32.totalorder %s19, 0
      %p178 = por %p176, %p177
      %p179 = scmp.ne.s32.totalorder %s165, %s166
      %p180 = scmp.eq.s32.totalorder %s20, 35
      %p181 = por %p179, %p180
      %p183 = scmp.ne.s32.totalorder %s166, %s182
      %p184 = scmp.eq.s32.totalorder %s20, 0
      %p185 = por %p183, %p184
      %p186 = scmp.le.s32.totalorder 1, %s14
      %p187 = scmp.lt.s32.totalorder %s14, 37
      %p188 = pnand %p186, %p187
      %p189 = pneg %p188
      // Predicated region
      $region9: #{tpu_custom_call.1} parent=5 // pred_check
        _
      $region10: #{tpu_custom_call.1} parent=5 // pred_check_branch
        %191 = sbr.rel (%p188) target = $region12
      $region11: #{tpu_custom_call.1} parent=5 // pred_region
        %s192 = ssub.s32 %s14, 1
        // Predicated region
        $region13: #{tpu_custom_call.1} parent=11 // pred_check
          %p193 = pneg %p108
        $region14: #{tpu_custom_call.1} parent=11 // pred_check_branch
          %195 = sbr.rel (%p193) target = $region16
        $region15: #{tpu_custom_call.1} parent=11 // pred_region
          _
        $region16: #{tpu_custom_call.1} parent=11 // pred_fallthru
          _
        // Predicated region
        $region17: #{tpu_custom_call.1} parent=11 // pred_check
          %p196 = pneg %p129
        $region18: #{tpu_custom_call.1} parent=11 // pred_check_branch
          %198 = sbr.rel (%p196) target = $region20
        $region19: #{tpu_custom_call.1} parent=11 // pred_region
          _
        $region20: #{tpu_custom_call.1} parent=11 // pred_fallthru
          _
        // Predicated region
        $region21: #{tpu_custom_call.1} parent=11 // pred_check
          %p199 = pneg %p150
        $region22: #{tpu_custom_call.1} parent=11 // pred_check_branch
          %201 = sbr.rel (%p199) target = $region24
        $region23: #{tpu_custom_call.1} parent=11 // pred_region
          _
        $region24: #{tpu_custom_call.1} parent=11 // pred_fallthru
          _
      $region12: #{tpu_custom_call.1} parent=5 // pred_fallthru
        _
      %p202 = scmp.lt.s32.totalorder %s14, 36
      // Predicated region
      $region25: #{tpu_custom_call.1} parent=5 // pred_check
        %p203 = pneg %p202
      $region26: #{tpu_custom_call.1} parent=5 // pred_check_branch
        %205 = sbr.rel (%p203) target = $region28
      $region27: #{tpu_custom_call.1} parent=5 // pred_region
        // Predicated region
        $region29: #{tpu_custom_call.1} parent=27 // pred_check
          %p206 = pneg %p55
        $region30: #{tpu_custom_call.1} parent=27 // pred_check_branch
          %208 = sbr.rel (%p206) target = $region32
        $region31: #{tpu_custom_call.1} parent=27 // pred_region
          %p209 = scmp.lt.s32.totalorder %s21, 1
          %s210 = scalar_select %p209, %s21, 1
          %p211 = scmp.lt.s32.totalorder %s22, 1
          %s212 = scalar_select %p211, %s22, 1
          %s213 = smul.addr %s212, 25
          %s214 = smul.addr %s210, 50
          %s215 = sadd.s32 %s213, %s214
          %s216 = smul.addr %s215, 8
          %s217 = scalar_lea.vmem %s0, %s216
        $region32: #{tpu_custom_call.1} parent=27 // pred_fallthru
          _
        // Predicated region
        $region33: #{tpu_custom_call.1} parent=27 // pred_check
          %p218 = pneg %p81
        $region34: #{tpu_custom_call.1} parent=27 // pred_check_branch
          %220 = sbr.rel (%p218) target = $region36
        $region35: #{tpu_custom_call.1} parent=27 // pred_region
          %p221 = scmp.lt.s32.totalorder %s23, 8
          %s222 = scalar_select %p221, %s23, 8
          %s223 = smul.addr %s222, 4
          %s224 = scalar_lea.vmem %s1, %s223
        $region36: #{tpu_custom_call.1} parent=27 // pred_fallthru
          _
      $region28: #{tpu_custom_call.1} parent=5 // pred_fallthru
        _
      %p225 = scmp.le.s32.totalorder 1, %s14
      %p226 = scmp.lt.s32.totalorder %s14, 37
      %p227 = pnand %p225, %p226
      %p228 = pneg %p227
      // Predicated region
      $region37: #{tpu_custom_call.1} parent=5 // pred_check
        _
      $region38: #{tpu_custom_call.1} parent=5 // pred_check_branch
        %230 = sbr.rel (%p227) target = $region40
      $region39: #{tpu_custom_call.1} parent=5 // pred_region
        %s231 = ssub.s32 %s14, 1
        %p232 = scmp.lt.s32.totalorder %s24, 1
        %s233 = scalar_select %p232, %s24, 1
        %p234 = scmp.lt.s32.totalorder %s25, 1
        %s235 = scalar_select %p234, %s25, 1
        %s236 = smul.addr %s235, 25
        %s237 = smul.addr %s233, 50
        %s238 = sadd.s32 %s236, %s237
        %s239 = smul.addr %s238, 8
        %s240 = scalar_lea.vmem %s0, %s239
        %p241 = pneg %p61
        %p242 = pneg %p58
        %p243 = scmp.lt.s32.totalorder %s26, 8
        %s244 = scalar_select %p243, %s26, 8
        %s245 = smul.addr %s244, 4
        %s246 = scalar_lea.vmem %s1, %s245
        %p247 = pneg %p87
        %p248 = pneg %p84
        %p249 = pneg %p108
        %p250 = pneg %p105
        %p251 = pneg %p129
        %p252 = pneg %p126
        %p253 = pneg %p150
        %p254 = pneg %p147
        %p255 = pneg %p178
        %p256 = pneg %p175
        %s257 = sand.u32 %s165, 1
        %s258 = scalar_lea.sflag [#allocation4], %s257
        %s259 = sand.u32 %s165, 1
        %s260 = smul.addr %s259, 144
        %s261 = scalar_lea.vmem [#allocation3], %s260
        %p262 = scmp.lt.s32.totalorder %s24, 1
        %s263 = scalar_select %p262, %s24, 1
        %p264 = scmp.lt.s32.totalorder %s25, 1
        %s265 = scalar_select %p264, %s25, 1
        %s266 = smul.addr %s265, 25
        %s267 = smul.addr %s263, 50
        %s268 = sadd.s32 %s266, %s267
        %s269 = smul.addr %s268, 8
        %s270 = scalar_lea.vmem %s0, %s269
        %p271 = scmp.lt.s32.totalorder %s26, 8
        %s272 = scalar_select %p271, %s26, 8
        %s273 = smul.addr %s272, 4
        %s274 = scalar_lea.vmem %s1, %s273
        %s275 = smul.u32 18, %s25
        %p276 = scmp.eq.s32.totalorder %s26, 0
        // Predicated region
        $region41: #{tpu_custom_call.1} parent=39 // pred_check
          %p277 = pneg %p276
        $region42: #{tpu_custom_call.1} parent=39 // pred_check_branch
          %279 = sbr.rel (%p277) target = $region44
        $region43: #{tpu_custom_call.1} parent=39 // pred_region
          %vm280 = vcmask 64512
          %281 = vst.msk [vmem:[#allocation2] sm:$0xff] %vm280, 0.0
          %282 = vst.msk [vmem:[#allocation2 + $0x8] sm:$0xff] %vm280, 0.0
          %283 = vst.msk [vmem:[#allocation2 + $0x10] sm:$0xff] %vm280, 0.0
          %284 = vst.msk [vmem:[#allocation2 + $0x18] sm:$0xff] %vm280, 0.0
          %285 = vst.msk [vmem:[#allocation2 + $0x20] sm:$0xff] %vm280, 0.0
          %286 = vst.msk [vmem:[#allocation2 + $0x28] sm:$0xff] %vm280, 0.0
          %287 = vst.msk [vmem:[#allocation2 + $0x30] sm:$0xff] %vm280, 0.0
          %288 = vst.msk [vmem:[#allocation2 + $0x38] sm:$0xff] %vm280, 0.0
          %289 = vst.msk [vmem:[#allocation2 + $0x40] sm:$0xff] %vm280, 0.0
          %290 = vst.msk [vmem:[#allocation2 + $0x48] sm:$0xff] %vm280, 0.0
          %291 = vst.msk [vmem:[#allocation2 + $0x50] sm:$0xff] %vm280, 0.0
          %292 = vst.msk [vmem:[#allocation2 + $0x58] sm:$0xff] %vm280, 0.0
          %293 = vst.msk [vmem:[#allocation2 + $0x60] sm:$0xff] %vm280, 0.0
          %294 = vst.msk [vmem:[#allocation2 + $0x68] sm:$0xff] %vm280, 0.0
          %295 = vst.msk [vmem:[#allocation2 + $0x70] sm:$0xff] %vm280, 0.0
          %296 = vst.msk [vmem:[#allocation2 + $0x78] sm:$0xff] %vm280, 0.0
          %297 = vst.msk [vmem:[#allocation2 + $0x80] sm:$0xff] %vm280, 0.0
          %298 = vst.msk [vmem:[#allocation2 + $0x88] sm:$0xff] %vm280, 0.0
          %v299 = vld [vmem:[#allocation2] sm:$0xff]
          %v300 = vld [vmem:[#allocation2 + $0x8] sm:$0xff]
          %v301 = vld [vmem:[#allocation2 + $0x10] sm:$0xff]
          %v302 = vld [vmem:[#allocation2 + $0x18] sm:$0xff]
          %v303 = vld [vmem:[#allocation2 + $0x20] sm:$0xff]
          %v304 = vld [vmem:[#allocation2 + $0x28] sm:$0xff]
          %v305 = vld [vmem:[#allocation2 + $0x30] sm:$0xff]
          %v306 = vld [vmem:[#allocation2 + $0x38] sm:$0xff]
          %v307 = vld [vmem:[#allocation2 + $0x40] sm:$0xff]
          %v308 = vld [vmem:[#allocation2 + $0x48] sm:$0xff]
          %v309 = vld [vmem:[#allocation2 + $0x50] sm:$0xff]
          %v310 = vld [vmem:[#allocation2 + $0x58] sm:$0xff]
          %v311 = vld [vmem:[#allocation2 + $0x60] sm:$0xff]
          %v312 = vld [vmem:[#allocation2 + $0x68] sm:$0xff]
          %v313 = vld [vmem:[#allocation2 + $0x70] sm:$0xff]
          %v314 = vld [vmem:[#allocation2 + $0x78] sm:$0xff]
          %v315 = vld [vmem:[#allocation2 + $0x80] sm:$0xff]
          %v316 = vld [vmem:[#allocation2 + $0x88] sm:$0xff]
          %v317 = vld [vmem:[%s270] sm:$0xff]
          %v318 = vld [vmem:[%s270 + $0x8] sm:$0xff]
          %v319 = vld [vmem:[%s270 + $0x10] sm:$0xff]
          %v320 = vld [vmem:[%s270 + $0x18] sm:$0xff]
          %v321 = vld [vmem:[%s270 + $0x20] sm:$0xff]
          %v322 = vld [vmem:[%s270 + $0x28] sm:$0xff]
          %v323 = vld [vmem:[%s270 + $0x30] sm:$0xff]
          %v324 = vld [vmem:[%s270 + $0x38] sm:$0xff]
          %v325 = vld [vmem:[%s270 + $0x40] sm:$0xff]
          %v326 = vld [vmem:[%s270 + $0x48] sm:$0xff]
          %v327 = vld [vmem:[%s270 + $0x50] sm:$0xff]
          %v328 = vld [vmem:[%s270 + $0x58] sm:$0xff]
          %v329 = vld [vmem:[%s270 + $0x60] sm:$0xff]
          %v330 = vld [vmem:[%s270 + $0x68] sm:$0xff]
          %v331 = vld [vmem:[%s270 + $0x70] sm:$0xff]
          %v332 = vld [vmem:[%s270 + $0x78] sm:$0xff]
          %v333 = vld [vmem:[%s270 + $0x80] sm:$0xff]
          %v334 = vld [vmem:[%s270 + $0x88] sm:$0xff]
          %v335 = vld [vmem:[%s274] sm:$0xf]
          %vm336 = vcmask 31744
          %v338 = vsel %vm336, %v317, 0
          %v341 = vsel %vm336, %v318, 0
          %v344 = vsel %vm336, %v319, 0
          %v347 = vsel %vm336, %v320, 0
          %v350 = vsel %vm336, %v321, 0
          %v353 = vsel %vm336, %v322, 0
          %v356 = vsel %vm336, %v323, 0
          %v359 = vsel %vm336, %v324, 0
          %v362 = vsel %vm336, %v325, 0
          %v365 = vsel %vm336, %v326, 0
          %v368 = vsel %vm336, %v327, 0
          %v371 = vsel %vm336, %v328, 0
          %v374 = vsel %vm336, %v329, 0
          %v377 = vsel %vm336, %v330, 0
          %v380 = vsel %vm336, %v331, 0
          %v383 = vsel %vm336, %v332, 0
          %v386 = vsel %vm336, %v333, 0
          %v389 = vsel %vm336, %v334, 0
          %vm391 = vcmask 1043456
          %v393 = vsel %vm391, %v335, 0
          %395 = vmatpush.msra.mxu0 0.0
          %396 = vmatpush.msra.mxu0 0.0
          %397 = vmatpush.msra.mxu0 0.0
          %398 = vmatpush.msra.mxu0 0.0
          %399 = vmatpush.msra.mxu0 0.0
          %400 = vmatpush.msra.mxu0 0.0
          %401 = vmatpush.msra.mxu0 0.0
          %402 = vmatpush.msra.mxu0 0.0
          %403 = vmatpush.msra.mxu0 0.0
          %404 = vmatpush.msra.mxu0 0.0
          %405 = vmatpush.msra.mxu0 0.0
          %406 = vmatpush.msra.mxu0 0.0
          %407 = vmatpush.msra.mxu0 0.0
          %408 = vmatpush.msra.mxu0 0.0
          %409 = vmatpush.msra.mxu0 0.0
          %410 = vmatpush.msra.mxu0 %v393
          %411 = vmatmul.f32.gmra.mxu0 %v338
          %v412 = vpop.f32.mrf.mxu0
          %v413 = vadd.f32 0.0, %v412
          %414 = vmatmul.f32.gmra.mxu0 %v341
          %v415 = vpop.f32.mrf.mxu0
          %v416 = vadd.f32 0.0, %v415
          %417 = vmatmul.f32.gmra.mxu0 %v344
          %v418 = vpop.f32.mrf.mxu0
          %v419 = vadd.f32 0.0, %v418
          %420 = vmatmul.f32.gmra.mxu0 %v347
          %v421 = vpop.f32.mrf.mxu0
          %v422 = vadd.f32 0.0, %v421
          %423 = vmatmul.f32.gmra.mxu0 %v350
          %v424 = vpop.f32.mrf.mxu0
          %v425 = vadd.f32 0.0, %v424
          %426 = vmatmul.f32.gmra.mxu0 %v353
          %v427 = vpop.f32.mrf.mxu0
          %v428 = vadd.f32 0.0, %v427
          %429 = vmatmul.f32.gmra.mxu0 %v356
          %v430 = vpop.f32.mrf.mxu0
          %v431 = vadd.f32 0.0, %v430
          %432 = vmatmul.f32.gmra.mxu0 %v359
          %v433 = vpop.f32.mrf.mxu0
          %v434 = vadd.f32 0.0, %v433
          %435 = vmatmul.f32.gmra.mxu0 %v362
          %v436 = vpop.f32.mrf.mxu0
          %v437 = vadd.f32 0.0, %v436
          %438 = vmatmul.f32.gmra.mxu0 %v365
          %v439 = vpop.f32.mrf.mxu0
          %v440 = vadd.f32 0.0, %v439
          %441 = vmatmul.f32.gmra.mxu0 %v368
          %v442 = vpop.f32.mrf.mxu0
          %v443 = vadd.f32 0.0, %v442
          %444 = vmatmul.f32.gmra.mxu0 %v371
          %v445 = vpop.f32.mrf.mxu0
          %v446 = vadd.f32 0.0, %v445
          %447 = vmatmul.f32.gmra.mxu0 %v374
          %v448 = vpop.f32.mrf.mxu0
          %v449 = vadd.f32 0.0, %v448
          %450 = vmatmul.f32.gmra.mxu0 %v377
          %v451 = vpop.f32.mrf.mxu0
          %v452 = vadd.f32 0.0, %v451
          %453 = vmatmul.f32.gmra.mxu0 %v380
          %v454 = vpop.f32.mrf.mxu0
          %v455 = vadd.f32 0.0, %v454
          %456 = vmatmul.f32.gmra.mxu0 %v383
          %v457 = vpop.f32.mrf.mxu0
          %v458 = vadd.f32 0.0, %v457
          %459 = vmatmul.f32.gmra.mxu0 %v386
          %v460 = vpop.f32.mrf.mxu0
          %v461 = vadd.f32 0.0, %v460
          %462 = vmatmul.f32.gmra.mxu0 %v389
          %v463 = vpop.f32.mrf.mxu0
          %v464 = vadd.f32 0.0, %v463
          %465 = vdwg.mxu0
          %v466 = vadd.f32 %v299, %v413
          %v467 = vadd.f32 %v300, %v416
          %v468 = vadd.f32 %v301, %v419
          %v469 = vadd.f32 %v302, %v422
          %v470 = vadd.f32 %v303, %v425
          %v471 = vadd.f32 %v304, %v428
          %v472 = vadd.f32 %v305, %v431
          %v473 = vadd.f32 %v306, %v434
          %v474 = vadd.f32 %v307, %v437
          %v475 = vadd.f32 %v308, %v440
          %v476 = vadd.f32 %v309, %v443
          %v477 = vadd.f32 %v310, %v446
          %v478 = vadd.f32 %v311, %v449
          %v479 = vadd.f32 %v312, %v452
          %v480 = vadd.f32 %v313, %v455
          %v481 = vadd.f32 %v314, %v458
          %v482 = vadd.f32 %v315, %v461
          %v483 = vadd.f32 %v316, %v464
          %484 = vst.msk [vmem:[#allocation2] sm:$0xff] %vm280, %v466
          %485 = vst.msk [vmem:[#allocation2 + $0x8] sm:$0xff] %vm280, %v467
          %486 = vst.msk [vmem:[#allocation2 + $0x10] sm:$0xff] %vm280, %v468
          %487 = vst.msk [vmem:[#allocation2 + $0x18] sm:$0xff] %vm280, %v469
          %488 = vst.msk [vmem:[#allocation2 + $0x20] sm:$0xff] %vm280, %v470
          %489 = vst.msk [vmem:[#allocation2 + $0x28] sm:$0xff] %vm280, %v471
          %490 = vst.msk [vmem:[#allocation2 + $0x30] sm:$0xff] %vm280, %v472
          %491 = vst.msk [vmem:[#allocation2 + $0x38] sm:$0xff] %vm280, %v473
          %492 = vst.msk [vmem:[#allocation2 + $0x40] sm:$0xff] %vm280, %v474
          %493 = vst.msk [vmem:[#allocation2 + $0x48] sm:$0xff] %vm280, %v475
          %494 = vst.msk [vmem:[#allocation2 + $0x50] sm:$0xff] %vm280, %v476
          %495 = vst.msk [vmem:[#allocation2 + $0x58] sm:$0xff] %vm280, %v477
          %496 = vst.msk [vmem:[#allocation2 + $0x60] sm:$0xff] %vm280, %v478
          %497 = vst.msk [vmem:[#allocation2 + $0x68] sm:$0xff] %vm280, %v479
          %498 = vst.msk [vmem:[#allocation2 + $0x70] sm:$0xff] %vm280, %v480
          %499 = vst.msk [vmem:[#allocation2 + $0x78] sm:$0xff] %vm280, %v481
          %500 = vst.msk [vmem:[#allocation2 + $0x80] sm:$0xff] %vm280, %v482
          %501 = vst.msk [vmem:[#allocation2 + $0x88] sm:$0xff] %vm280, %v483
        $region44: #{tpu_custom_call.1} parent=39 // pred_fallthru
          _
        %p502 = scmp.eq.s32.totalorder %s26, 1
        // Predicated region
        $region45: #{tpu_custom_call.1} parent=39 // pred_check
          %p503 = pneg %p502
        $region46: #{tpu_custom_call.1} parent=39 // pred_check_branch
          %505 = sbr.rel (%p503) target = $region48
        $region47: #{tpu_custom_call.1} parent=39 // pred_region
          %v506 = vld [vmem:[#allocation2] sm:$0xff]
          %v507 = vld [vmem:[#allocation2 + $0x8] sm:$0xff]
          %v508 = vld [vmem:[#allocation2 + $0x10] sm:$0xff]
          %v509 = vld [vmem:[#allocation2 + $0x18] sm:$0xff]
          %v510 = vld [vmem:[#allocation2 + $0x20] sm:$0xff]
          %v511 = vld [vmem:[#allocation2 + $0x28] sm:$0xff]
          %v512 = vld [vmem:[#allocation2 + $0x30] sm:$0xff]
          %v513 = vld [vmem:[#allocation2 + $0x38] sm:$0xff]
          %v514 = vld [vmem:[#allocation2 + $0x40] sm:$0xff]
          %v515 = vld [vmem:[#allocation2 + $0x48] sm:$0xff]
          %v516 = vld [vmem:[#allocation2 + $0x50] sm:$0xff]
          %v517 = vld [vmem:[#allocation2 + $0x58] sm:$0xff]
          %v518 = vld [vmem:[#allocation2 + $0x60] sm:$0xff]
          %v519 = vld [vmem:[#allocation2 + $0x68] sm:$0xff]
          %v520 = vld [vmem:[#allocation2 + $0x70] sm:$0xff]
          %v521 = vld [vmem:[#allocation2 + $0x78] sm:$0xff]
          %v522 = vld [vmem:[#allocation2 + $0x80] sm:$0xff]
          %v523 = vld [vmem:[#allocation2 + $0x88] sm:$0xff]
          %v524 = vld [vmem:[%s270 + $0x1] sm:$0xff]
          %v525 = vld [vmem:[%s270 + $0x9] sm:$0xff]
          %v526 = vld [vmem:[%s270 + $0x11] sm:$0xff]
          %v527 = vld [vmem:[%s270 + $0x19] sm:$0xff]
          %v528 = vld [vmem:[%s270 + $0x21] sm:$0xff]
          %v529 = vld [vmem:[%s270 + $0x29] sm:$0xff]
          %v530 = vld [vmem:[%s270 + $0x31] sm:$0xff]
          %v531 = vld [vmem:[%s270 + $0x39] sm:$0xff]
          %v532 = vld [vmem:[%s270 + $0x41] sm:$0xff]
          %v533 = vld [vmem:[%s270 + $0x49] sm:$0xff]
          %v534 = vld [vmem:[%s270 + $0x51] sm:$0xff]
          %v535 = vld [vmem:[%s270 + $0x59] sm:$0xff]
          %v536 = vld [vmem:[%s270 + $0x61] sm:$0xff]
          %v537 = vld [vmem:[%s270 + $0x69] sm:$0xff]
          %v538 = vld [vmem:[%s270 + $0x71] sm:$0xff]
          %v539 = vld [vmem:[%s270 + $0x79] sm:$0xff]
          %v540 = vld [vmem:[%s270 + $0x81] sm:$0xff]
          %v541 = vld [vmem:[%s270 + $0x89] sm:$0xff]
          %v542 = vld [vmem:[%s274] sm:$0xf]
          %vm543 = vcmask 31744
          %v545 = vsel %vm543, %v524, 0
          %v548 = vsel %vm543, %v525, 0
          %v551 = vsel %vm543, %v526, 0
          %v554 = vsel %vm543, %v527, 0
          %v557 = vsel %vm543, %v528, 0
          %v560 = vsel %vm543, %v529, 0
          %v563 = vsel %vm543, %v530, 0
          %v566 = vsel %vm543, %v531, 0
          %v569 = vsel %vm543, %v532, 0
          %v572 = vsel %vm543, %v533, 0
          %v575 = vsel %vm543, %v534, 0
          %v578 = vsel %vm543, %v535, 0
          %v581 = vsel %vm543, %v536, 0
          %v584 = vsel %vm543, %v537, 0
          %v587 = vsel %vm543, %v538, 0
          %v590 = vsel %vm543, %v539, 0
          %v593 = vsel %vm543, %v540, 0
          %v596 = vsel %vm543, %v541, 0
          %vm598 = vcmask 1043456
          %v600 = vsel %vm598, %v542, 0
          %602 = vmatpush.msra.mxu0 0.0
          %603 = vmatpush.msra.mxu0 0.0
          %604 = vmatpush.msra.mxu0 0.0
          %605 = vmatpush.msra.mxu0 0.0
          %606 = vmatpush.msra.mxu0 0.0
          %607 = vmatpush.msra.mxu0 0.0
          %608 = vmatpush.msra.mxu0 0.0
          %609 = vmatpush.msra.mxu0 0.0
          %610 = vmatpush.msra.mxu0 0.0
          %611 = vmatpush.msra.mxu0 0.0
          %612 = vmatpush.msra.mxu0 0.0
          %613 = vmatpush.msra.mxu0 0.0
          %614 = vmatpush.msra.mxu0 0.0
          %615 = vmatpush.msra.mxu0 0.0
          %616 = vmatpush.msra.mxu0 0.0
          %617 = vmatpush.msra.mxu0 %v600
          %618 = vmatmul.f32.gmra.mxu0 %v545
          %v619 = vpop.f32.mrf.mxu0
          %v620 = vadd.f32 0.0, %v619
          %621 = vmatmul.f32.gmra.mxu0 %v548
          %v622 = vpop.f32.mrf.mxu0
          %v623 = vadd.f32 0.0, %v622
          %624 = vmatmul.f32.gmra.mxu0 %v551
          %v625 = vpop.f32.mrf.mxu0
          %v626 = vadd.f32 0.0, %v625
          %627 = vmatmul.f32.gmra.mxu0 %v554
          %v628 = vpop.f32.mrf.mxu0
          %v629 = vadd.f32 0.0, %v628
          %630 = vmatmul.f32.gmra.mxu0 %v557
          %v631 = vpop.f32.mrf.mxu0
          %v632 = vadd.f32 0.0, %v631
          %633 = vmatmul.f32.gmra.mxu0 %v560
          %v634 = vpop.f32.mrf.mxu0
          %v635 = vadd.f32 0.0, %v634
          %636 = vmatmul.f32.gmra.mxu0 %v563
          %v637 = vpop.f32.mrf.mxu0
          %v638 = vadd.f32 0.0, %v637
          %639 = vmatmul.f32.gmra.mxu0 %v566
          %v640 = vpop.f32.mrf.mxu0
          %v641 = vadd.f32 0.0, %v640
          %642 = vmatmul.f32.gmra.mxu0 %v569
          %v643 = vpop.f32.mrf.mxu0
          %v644 = vadd.f32 0.0, %v643
          %645 = vmatmul.f32.gmra.mxu0 %v572
          %v646 = vpop.f32.mrf.mxu0
          %v647 = vadd.f32 0.0, %v646
          %648 = vmatmul.f32.gmra.mxu0 %v575
          %v649 = vpop.f32.mrf.mxu0
          %v650 = vadd.f32 0.0, %v649
          %651 = vmatmul.f32.gmra.mxu0 %v578
          %v652 = vpop.f32.mrf.mxu0
          %v653 = vadd.f32 0.0, %v652
          %654 = vmatmul.f32.gmra.mxu0 %v581
          %v655 = vpop.f32.mrf.mxu0
          %v656 = vadd.f32 0.0, %v655
          %657 = vmatmul.f32.gmra.mxu0 %v584
          %v658 = vpop.f32.mrf.mxu0
          %v659 = vadd.f32 0.0, %v658
          %660 = vmatmul.f32.gmra.mxu0 %v587
          %v661 = vpop.f32.mrf.mxu0
          %v662 = vadd.f32 0.0, %v661
          %663 = vmatmul.f32.gmra.mxu0 %v590
          %v664 = vpop.f32.mrf.mxu0
          %v665 = vadd.f32 0.0, %v664
          %666 = vmatmul.f32.gmra.mxu0 %v593
          %v667 = vpop.f32.mrf.mxu0
          %v668 = vadd.f32 0.0, %v667
          %669 = vmatmul.f32.gmra.mxu0 %v596
          %v670 = vpop.f32.mrf.mxu0
          %v671 = vadd.f32 0.0, %v670
          %672 = vdwg.mxu0
          %v673 = vadd.f32 %v506, %v620
          %v674 = vadd.f32 %v507, %v623
          %v675 = vadd.f32 %v508, %v626
          %v676 = vadd.f32 %v509, %v629
          %v677 = vadd.f32 %v510, %v632
          %v678 = vadd.f32 %v511, %v635
          %v679 = vadd.f32 %v512, %v638
          %v680 = vadd.f32 %v513, %v641
          %v681 = vadd.f32 %v514, %v644
          %v682 = vadd.f32 %v515, %v647
          %v683 = vadd.f32 %v516, %v650
          %v684 = vadd.f32 %v517, %v653
          %v685 = vadd.f32 %v518, %v656
          %v686 = vadd.f32 %v519, %v659
          %v687 = vadd.f32 %v520, %v662
          %v688 = vadd.f32 %v521, %v665
          %v689 = vadd.f32 %v522, %v668
          %v690 = vadd.f32 %v523, %v671
          %vm691 = vcmask 64512
          %692 = vst.msk [vmem:[#allocation2] sm:$0xff] %vm691, %v673
          %693 = vst.msk [vmem:[#allocation2 + $0x8] sm:$0xff] %vm691, %v674
          %694 = vst.msk [vmem:[#allocation2 + $0x10] sm:$0xff] %vm691, %v675
          %695 = vst.msk [vmem:[#allocation2 + $0x18] sm:$0xff] %vm691, %v676
          %696 = vst.msk [vmem:[#allocation2 + $0x20] sm:$0xff] %vm691, %v677
          %697 = vst.msk [vmem:[#allocation2 + $0x28] sm:$0xff] %vm691, %v678
          %698 = vst.msk [vmem:[#allocation2 + $0x30] sm:$0xff] %vm691, %v679
          %699 = vst.msk [vmem:[#allocation2 + $0x38] sm:$0xff] %vm691, %v680
          %700 = vst.msk [vmem:[#allocation2 + $0x40] sm:$0xff] %vm691, %v681
          %701 = vst.msk [vmem:[#allocation2 + $0x48] sm:$0xff] %vm691, %v682
          %702 = vst.msk [vmem:[#allocation2 + $0x50] sm:$0xff] %vm691, %v683
          %703 = vst.msk [vmem:[#allocation2 + $0x58] sm:$0xff] %vm691, %v684
          %704 = vst.msk [vmem:[#allocation2 + $0x60] sm:$0xff] %vm691, %v685
          %705 = vst.msk [vmem:[#allocation2 + $0x68] sm:$0xff] %vm691, %v686
          %706 = vst.msk [vmem:[#allocation2 + $0x70] sm:$0xff] %vm691, %v687
          %707 = vst.msk [vmem:[#allocation2 + $0x78] sm:$0xff] %vm691, %v688
          %708 = vst.msk [vmem:[#allocation2 + $0x80] sm:$0xff] %vm691, %v689
          %709 = vst.msk [vmem:[#allocation2 + $0x88] sm:$0xff] %vm691, %v690
        $region48: #{tpu_custom_call.1} parent=39 // pred_fallthru
          _
        %p710 = scmp.eq.s32.totalorder %s26, 2
        // Predicated region
        $region49: #{tpu_custom_call.1} parent=39 // pred_check
          %p711 = pneg %p710
        $region50: #{tpu_custom_call.1} parent=39 // pred_check_branch
          %713 = sbr.rel (%p711) target = $region52
        $region51: #{tpu_custom_call.1} parent=39 // pred_region
          %v714 = vld [vmem:[#allocation2] sm:$0xff]
          %v715 = vld [vmem:[#allocation2 + $0x8] sm:$0xff]
          %v716 = vld [vmem:[#allocation2 + $0x10] sm:$0xff]
          %v717 = vld [vmem:[#allocation2 + $0x18] sm:$0xff]
          %v718 = vld [vmem:[#allocation2 + $0x20] sm:$0xff]
          %v719 = vld [vmem:[#allocation2 + $0x28] sm:$0xff]
          %v720 = vld [vmem:[#allocation2 + $0x30] sm:$0xff]
          %v721 = vld [vmem:[#allocation2 + $0x38] sm:$0xff]
          %v722 = vld [vmem:[#allocation2 + $0x40] sm:$0xff]
          %v723 = vld [vmem:[#allocation2 + $0x48] sm:$0xff]
          %v724 = vld [vmem:[#allocation2 + $0x50] sm:$0xff]
          %v725 = vld [vmem:[#allocation2 + $0x58] sm:$0xff]
          %v726 = vld [vmem:[#allocation2 + $0x60] sm:$0xff]
          %v727 = vld [vmem:[#allocation2 + $0x68] sm:$0xff]
          %v728 = vld [vmem:[#allocation2 + $0x70] sm:$0xff]
          %v729 = vld [vmem:[#allocation2 + $0x78] sm:$0xff]
          %v730 = vld [vmem:[#allocation2 + $0x80] sm:$0xff]
          %v731 = vld [vmem:[#allocation2 + $0x88] sm:$0xff]
          %v732 = vld [vmem:[%s270 + $0x2] sm:$0xff]
          %v733 = vld [vmem:[%s270 + $0xa] sm:$0xff]
          %v734 = vld [vmem:[%s270 + $0x12] sm:$0xff]
          %v735 = vld [vmem:[%s270 + $0x1a] sm:$0xff]
          %v736 = vld [vmem:[%s270 + $0x22] sm:$0xff]
          %v737 = vld [vmem:[%s270 + $0x2a] sm:$0xff]
          %v738 = vld [vmem:[%s270 + $0x32] sm:$0xff]
          %v739 = vld [vmem:[%s270 + $0x3a] sm:$0xff]
          %v740 = vld [vmem:[%s270 + $0x42] sm:$0xff]
          %v741 = vld [vmem:[%s270 + $0x4a] sm:$0xff]
          %v742 = vld [vmem:[%s270 + $0x52] sm:$0xff]
          %v743 = vld [vmem:[%s270 + $0x5a] sm:$0xff]
          %v744 = vld [vmem:[%s270 + $0x62] sm:$0xff]
          %v745 = vld [vmem:[%s270 + $0x6a] sm:$0xff]
          %v746 = vld [vmem:[%s270 + $0x72] sm:$0xff]
          %v747 = vld [vmem:[%s270 + $0x7a] sm:$0xff]
          %v748 = vld [vmem:[%s270 + $0x82] sm:$0xff]
          %v749 = vld [vmem:[%s270 + $0x8a] sm:$0xff]
          %v750 = vld [vmem:[%s274] sm:$0xf]
          %vm751 = vcmask 31744
          %v753 = vsel %vm751, %v732, 0
          %v756 = vsel %vm751, %v733, 0
          %v759 = vsel %vm751, %v734, 0
          %v762 = vsel %vm751, %v735, 0
          %v765 = vsel %vm751, %v736, 0
          %v768 = vsel %vm751, %v737, 0
          %v771 = vsel %vm751, %v738, 0
          %v774 = vsel %vm751, %v739, 0
          %v777 = vsel %vm751, %v740, 0
          %v780 = vsel %vm751, %v741, 0
          %v783 = vsel %vm751, %v742, 0
          %v786 = vsel %vm751, %v743, 0
          %v789 = vsel %vm751, %v744, 0
          %v792 = vsel %vm751, %v745, 0
          %v795 = vsel %vm751, %v746, 0
          %v798 = vsel %vm751, %v747, 0
          %v801 = vsel %vm751, %v748, 0
          %v804 = vsel %vm751, %v749, 0
          %vm806 = vcmask 1043456
          %v808 = vsel %vm806, %v750, 0
          %810 = vmatpush.msra.mxu0 0.0
          %811 = vmatpush.msra.mxu0 0.0
          %812 = vmatpush.msra.mxu0 0.0
          %813 = vmatpush.msra.mxu0 0.0
          %814 = vmatpush.msra.mxu0 0.0
          %815 = vmatpush.msra.mxu0 0.0
          %816 = vmatpush.msra.mxu0 0.0
          %817 = vmatpush.msra.mxu0 0.0
          %818 = vmatpush.msra.mxu0 0.0
          %819 = vmatpush.msra.mxu0 0.0
          %820 = vmatpush.msra.mxu0 0.0
          %821 = vmatpush.msra.mxu0 0.0
          %822 = vmatpush.msra.mxu0 0.0
          %823 = vmatpush.msra.mxu0 0.0
          %824 = vmatpush.msra.mxu0 0.0
          %825 = vmatpush.msra.mxu0 %v808
          %826 = vmatmul.f32.gmra.mxu0 %v753
          %v827 = vpop.f32.mrf.mxu0
          %v828 = vadd.f32 0.0, %v827
          %829 = vmatmul.f32.gmra.mxu0 %v756
          %v830 = vpop.f32.mrf.mxu0
          %v831 = vadd.f32 0.0, %v830
          %832 = vmatmul.f32.gmra.mxu0 %v759
          %v833 = vpop.f32.mrf.mxu0
          %v834 = vadd.f32 0.0, %v833
          %835 = vmatmul.f32.gmra.mxu0 %v762
          %v836 = vpop.f32.mrf.mxu0
          %v837 = vadd.f32 0.0, %v836
          %838 = vmatmul.f32.gmra.mxu0 %v765
          %v839 = vpop.f32.mrf.mxu0
          %v840 = vadd.f32 0.0, %v839
          %841 = vmatmul.f32.gmra.mxu0 %v768
          %v842 = vpop.f32.mrf.mxu0
          %v843 = vadd.f32 0.0, %v842
          %844 = vmatmul.f32.gmra.mxu0 %v771
          %v845 = vpop.f32.mrf.mxu0
          %v846 = vadd.f32 0.0, %v845
          %847 = vmatmul.f32.gmra.mxu0 %v774
          %v848 = vpop.f32.mrf.mxu0
          %v849 = vadd.f32 0.0, %v848
          %850 = vmatmul.f32.gmra.mxu0 %v777
          %v851 = vpop.f32.mrf.mxu0
          %v852 = vadd.f32 0.0, %v851
          %853 = vmatmul.f32.gmra.mxu0 %v780
          %v854 = vpop.f32.mrf.mxu0
          %v855 = vadd.f32 0.0, %v854
          %856 = vmatmul.f32.gmra.mxu0 %v783
          %v857 = vpop.f32.mrf.mxu0
          %v858 = vadd.f32 0.0, %v857
          %859 = vmatmul.f32.gmra.mxu0 %v786
          %v860 = vpop.f32.mrf.mxu0
          %v861 = vadd.f32 0.0, %v860
          %862 = vmatmul.f32.gmra.mxu0 %v789
          %v863 = vpop.f32.mrf.mxu0
          %v864 = vadd.f32 0.0, %v863
          %865 = vmatmul.f32.gmra.mxu0 %v792
          %v866 = vpop.f32.mrf.mxu0
          %v867 = vadd.f32 0.0, %v866
          %868 = vmatmul.f32.gmra.mxu0 %v795
          %v869 = vpop.f32.mrf.mxu0
          %v870 = vadd.f32 0.0, %v869
          %871 = vmatmul.f32.gmra.mxu0 %v798
          %v872 = vpop.f32.mrf.mxu0
          %v873 = vadd.f32 0.0, %v872
          %874 = vmatmul.f32.gmra.mxu0 %v801
          %v875 = vpop.f32.mrf.mxu0
          %v876 = vadd.f32 0.0, %v875
          %877 = vmatmul.f32.gmra.mxu0 %v804
          %v878 = vpop.f32.mrf.mxu0
          %v879 = vadd.f32 0.0, %v878
          %880 = vdwg.mxu0
          %v881 = vadd.f32 %v714, %v828
          %v882 = vadd.f32 %v715, %v831
          %v883 = vadd.f32 %v716, %v834
          %v884 = vadd.f32 %v717, %v837
          %v885 = vadd.f32 %v718, %v840
          %v886 = vadd.f32 %v719, %v843
          %v887 = vadd.f32 %v720, %v846
          %v888 = vadd.f32 %v721, %v849
          %v889 = vadd.f32 %v722, %v852
          %v890 = vadd.f32 %v723, %v855
          %v891 = vadd.f32 %v724, %v858
          %v892 = vadd.f32 %v725, %v861
          %v893 = vadd.f32 %v726, %v864
          %v894 = vadd.f32 %v727, %v867
          %v895 = vadd.f32 %v728, %v870
          %v896 = vadd.f32 %v729, %v873
          %v897 = vadd.f32 %v730, %v876
          %v898 = vadd.f32 %v731, %v879
          %vm899 = vcmask 64512
          %900 = vst.msk [vmem:[#allocation2] sm:$0xff] %vm899, %v881
          %901 = vst.msk [vmem:[#allocation2 + $0x8] sm:$0xff] %vm899, %v882
          %902 = vst.msk [vmem:[#allocation2 + $0x10] sm:$0xff] %vm899, %v883
          %903 = vst.msk [vmem:[#allocation2 + $0x18] sm:$0xff] %vm899, %v884
          %904 = vst.msk [vmem:[#allocation2 + $0x20] sm:$0xff] %vm899, %v885
          %905 = vst.msk [vmem:[#allocation2 + $0x28] sm:$0xff] %vm899, %v886
          %906 = vst.msk [vmem:[#allocation2 + $0x30] sm:$0xff] %vm899, %v887
          %907 = vst.msk [vmem:[#allocation2 + $0x38] sm:$0xff] %vm899, %v888
          %908 = vst.msk [vmem:[#allocation2 + $0x40] sm:$0xff] %vm899, %v889
          %909 = vst.msk [vmem:[#allocation2 + $0x48] sm:$0xff] %vm899, %v890
          %910 = vst.msk [vmem:[#allocation2 + $0x50] sm:$0xff] %vm899, %v891
          %911 = vst.msk [vmem:[#allocation2 + $0x58] sm:$0xff] %vm899, %v892
          %912 = vst.msk [vmem:[#allocation2 + $0x60] sm:$0xff] %vm899, %v893
          %913 = vst.msk [vmem:[#allocation2 + $0x68] sm:$0xff] %vm899, %v894
          %914 = vst.msk [vmem:[#allocation2 + $0x70] sm:$0xff] %vm899, %v895
          %915 = vst.msk [vmem:[#allocation2 + $0x78] sm:$0xff] %vm899, %v896
          %916 = vst.msk [vmem:[#allocation2 + $0x80] sm:$0xff] %vm899, %v897
          %917 = vst.msk [vmem:[#allocation2 + $0x88] sm:$0xff] %vm899, %v898
        $region52: #{tpu_custom_call.1} parent=39 // pred_fallthru
          _
        %p918 = scmp.eq.s32.totalorder %s26, 3
        // Predicated region
        $region53: #{tpu_custom_call.1} parent=39 // pred_check
          %p919 = pneg %p918
        $region54: #{tpu_custom_call.1} parent=39 // pred_check_branch
          %921 = sbr.rel (%p919) target = $region56
        $region55: #{tpu_custom_call.1} parent=39 // pred_region
          %v922 = vld [vmem:[#allocation2] sm:$0xff]
          %v923 = vld [vmem:[#allocation2 + $0x8] sm:$0xff]
          %v924 = vld [vmem:[#allocation2 + $0x10] sm:$0xff]
          %v925 = vld [vmem:[#allocation2 + $0x18] sm:$0xff]
          %v926 = vld [vmem:[#allocation2 + $0x20] sm:$0xff]
          %v927 = vld [vmem:[#allocation2 + $0x28] sm:$0xff]
          %v928 = vld [vmem:[#allocation2 + $0x30] sm:$0xff]
          %v929 = vld [vmem:[#allocation2 + $0x38] sm:$0xff]
          %v930 = vld [vmem:[#allocation2 + $0x40] sm:$0xff]
          %v931 = vld [vmem:[#allocation2 + $0x48] sm:$0xff]
          %v932 = vld [vmem:[#allocation2 + $0x50] sm:$0xff]
          %v933 = vld [vmem:[#allocation2 + $0x58] sm:$0xff]
          %v934 = vld [vmem:[#allocation2 + $0x60] sm:$0xff]
          %v935 = vld [vmem:[#allocation2 + $0x68] sm:$0xff]
          %v936 = vld [vmem:[#allocation2 + $0x70] sm:$0xff]
          %v937 = vld [vmem:[#allocation2 + $0x78] sm:$0xff]
          %v938 = vld [vmem:[#allocation2 + $0x80] sm:$0xff]
          %v939 = vld [vmem:[#allocation2 + $0x88] sm:$0xff]
          %v940 = vld [vmem:[%s270 + $0x12] sm:$0xff]
          %v941 = vld [vmem:[%s270 + $0x1a] sm:$0xff]
          %v942 = vld [vmem:[%s270 + $0x22] sm:$0xff]
          %v943 = vld [vmem:[%s270 + $0x2a] sm:$0xff]
          %v944 = vld [vmem:[%s270 + $0x32] sm:$0xff]
          %v945 = vld [vmem:[%s270 + $0x3a] sm:$0xff]
          %v946 = vld [vmem:[%s270 + $0x42] sm:$0xff]
          %v947 = vld [vmem:[%s270 + $0x4a] sm:$0xff]
          %v948 = vld [vmem:[%s270 + $0x52] sm:$0xff]
          %v949 = vld [vmem:[%s270 + $0x5a] sm:$0xff]
          %v950 = vld [vmem:[%s270 + $0x62] sm:$0xff]
          %v951 = vld [vmem:[%s270 + $0x6a] sm:$0xff]
          %v952 = vld [vmem:[%s270 + $0x72] sm:$0xff]
          %v953 = vld [vmem:[%s270 + $0x7a] sm:$0xff]
          %v954 = vld [vmem:[%s270 + $0x82] sm:$0xff]
          %v955 = vld [vmem:[%s270 + $0x8a] sm:$0xff]
          %v956 = vld [vmem:[%s270 + $0x92] sm:$0xff]
          %v957 = vld [vmem:[%s270 + $0x9a] sm:$0xff]
          %v958 = vld [vmem:[%s274] sm:$0xf]
          %vm959 = vcmask 31744
          %v961 = vsel %vm959, %v940, 0
          %v964 = vsel %vm959, %v941, 0
          %v967 = vsel %vm959, %v942, 0
          %v970 = vsel %vm959, %v943, 0
          %v973 = vsel %vm959, %v944, 0
          %v976 = vsel %vm959, %v945, 0
          %v979 = vsel %vm959, %v946, 0
          %v982 = vsel %vm959, %v947, 0
          %v985 = vsel %vm959, %v948, 0
          %v988 = vsel %vm959, %v949, 0
          %v991 = vsel %vm959, %v950, 0
          %v994 = vsel %vm959, %v951, 0
          %v997 = vsel %vm959, %v952, 0
          %v1000 = vsel %vm959, %v953, 0
          %v1003 = vsel %vm959, %v954, 0
          %v1006 = vsel %vm959, %v955, 0
          %v1009 = vsel %vm959, %v956, 0
          %v1012 = vsel %vm959, %v957, 0
          %vm1014 = vcmask 1043456
          %v1016 = vsel %vm1014, %v958, 0
          %1018 = vmatpush.msra.mxu0 0.0
          %1019 = vmatpush.msra.mxu0 0.0
          %1020 = vmatpush.msra.mxu0 0.0
          %1021 = vmatpush.msra.mxu0 0.0
          %1022 = vmatpush.msra.mxu0 0.0
          %1023 = vmatpush.msra.mxu0 0.0
          %1024 = vmatpush.msra.mxu0 0.0
          %1025 = vmatpush.msra.mxu0 0.0
          %1026 = vmatpush.msra.mxu0 0.0
          %1027 = vmatpush.msra.mxu0 0.0
          %1028 = vmatpush.msra.mxu0 0.0
          %1029 = vmatpush.msra.mxu0 0.0
          %1030 = vmatpush.msra.mxu0 0.0
          %1031 = vmatpush.msra.mxu0 0.0
          %1032 = vmatpush.msra.mxu0 0.0
          %1033 = vmatpush.msra.mxu0 %v1016
          %1034 = vmatmul.f32.gmra.mxu0 %v961
          %v1035 = vpop.f32.mrf.mxu0
          %v1036 = vadd.f32 0.0, %v1035
          %1037 = vmatmul.f32.gmra.mxu0 %v964
          %v1038 = vpop.f32.mrf.mxu0
          %v1039 = vadd.f32 0.0, %v1038
          %1040 = vmatmul.f32.gmra.mxu0 %v967
          %v1041 = vpop.f32.mrf.mxu0
          %v1042 = vadd.f32 0.0, %v1041
          %1043 = vmatmul.f32.gmra.mxu0 %v970
          %v1044 = vpop.f32.mrf.mxu0
          %v1045 = vadd.f32 0.0, %v1044
          %1046 = vmatmul.f32.gmra.mxu0 %v973
          %v1047 = vpop.f32.mrf.mxu0
          %v1048 = vadd.f32 0.0, %v1047
          %1049 = vmatmul.f32.gmra.mxu0 %v976
          %v1050 = vpop.f32.mrf.mxu0
          %v1051 = vadd.f32 0.0, %v1050
          %1052 = vmatmul.f32.gmra.mxu0 %v979
          %v1053 = vpop.f32.mrf.mxu0
          %v1054 = vadd.f32 0.0, %v1053
          %1055 = vmatmul.f32.gmra.mxu0 %v982
          %v1056 = vpop.f32.mrf.mxu0
          %v1057 = vadd.f32 0.0, %v1056
          %1058 = vmatmul.f32.gmra.mxu0 %v985
          %v1059 = vpop.f32.mrf.mxu0
          %v1060 = vadd.f32 0.0, %v1059
          %1061 = vmatmul.f32.gmra.mxu0 %v988
          %v1062 = vpop.f32.mrf.mxu0
          %v1063 = vadd.f32 0.0, %v1062
          %1064 = vmatmul.f32.gmra.mxu0 %v991
          %v1065 = vpop.f32.mrf.mxu0
          %v1066 = vadd.f32 0.0, %v1065
          %1067 = vmatmul.f32.gmra.mxu0 %v994
          %v1068 = vpop.f32.mrf.mxu0
          %v1069 = vadd.f32 0.0, %v1068
          %1070 = vmatmul.f32.gmra.mxu0 %v997
          %v1071 = vpop.f32.mrf.mxu0
          %v1072 = vadd.f32 0.0, %v1071
          %1073 = vmatmul.f32.gmra.mxu0 %v1000
          %v1074 = vpop.f32.mrf.mxu0
          %v1075 = vadd.f32 0.0, %v1074
          %1076 = vmatmul.f32.gmra.mxu0 %v1003
          %v1077 = vpop.f32.mrf.mxu0
          %v1078 = vadd.f32 0.0, %v1077
          %1079 = vmatmul.f32.gmra.mxu0 %v1006
          %v1080 = vpop.f32.mrf.mxu0
          %v1081 = vadd.f32 0.0, %v1080
          %1082 = vmatmul.f32.gmra.mxu0 %v1009
          %v1083 = vpop.f32.mrf.mxu0
          %v1084 = vadd.f32 0.0, %v1083
          %1085 = vmatmul.f32.gmra.mxu0 %v1012
          %v1086 = vpop.f32.mrf.mxu0
          %v1087 = vadd.f32 0.0, %v1086
          %1088 = vdwg.mxu0
          %v1089 = vadd.f32 %v922, %v1036
          %v1090 = vadd.f32 %v923, %v1039
          %v1091 = vadd.f32 %v924, %v1042
          %v1092 = vadd.f32 %v925, %v1045
          %v1093 = vadd.f32 %v926, %v1048
          %v1094 = vadd.f32 %v927, %v1051
          %v1095 = vadd.f32 %v928, %v1054
          %v1096 = vadd.f32 %v929, %v1057
          %v1097 = vadd.f32 %v930, %v1060
          %v1098 = vadd.f32 %v931, %v1063
          %v1099 = vadd.f32 %v932, %v1066
          %v1100 = vadd.f32 %v933, %v1069
          %v1101 = vadd.f32 %v934, %v1072
          %v1102 = vadd.f32 %v935, %v1075
          %v1103 = vadd.f32 %v936, %v1078
          %v1104 = vadd.f32 %v937, %v1081
          %v1105 = vadd.f32 %v938, %v1084
          %v1106 = vadd.f32 %v939, %v1087
          %vm1107 = vcmask 64512
          %1108 = vst.msk [vmem:[#allocation2] sm:$0xff] %vm1107, %v1089
          %1109 = vst.msk [vmem:[#allocation2 + $0x8] sm:$0xff] %vm1107, %v1090
          %1110 = vst.msk [vmem:[#allocation2 + $0x10] sm:$0xff] %vm1107, %v1091
          %1111 = vst.msk [vmem:[#allocation2 + $0x18] sm:$0xff] %vm1107, %v1092
          %1112 = vst.msk [vmem:[#allocation2 + $0x20] sm:$0xff] %vm1107, %v1093
          %1113 = vst.msk [vmem:[#allocation2 + $0x28] sm:$0xff] %vm1107, %v1094
          %1114 = vst.msk [vmem:[#allocation2 + $0x30] sm:$0xff] %vm1107, %v1095
          %1115 = vst.msk [vmem:[#allocation2 + $0x38] sm:$0xff] %vm1107, %v1096
          %1116 = vst.msk [vmem:[#allocation2 + $0x40] sm:$0xff] %vm1107, %v1097
          %1117 = vst.msk [vmem:[#allocation2 + $0x48] sm:$0xff] %vm1107, %v1098
          %1118 = vst.msk [vmem:[#allocation2 + $0x50] sm:$0xff] %vm1107, %v1099
          %1119 = vst.msk [vmem:[#allocation2 + $0x58] sm:$0xff] %vm1107, %v1100
          %1120 = vst.msk [vmem:[#allocation2 + $0x60] sm:$0xff] %vm1107, %v1101
          %1121 = vst.msk [vmem:[#allocation2 + $0x68] sm:$0xff] %vm1107, %v1102
          %1122 = vst.msk [vmem:[#allocation2 + $0x70] sm:$0xff] %vm1107, %v1103
          %1123 = vst.msk [vmem:[#allocation2 + $0x78] sm:$0xff] %vm1107, %v1104
          %1124 = vst.msk [vmem:[#allocation2 + $0x80] sm:$0xff] %vm1107, %v1105
          %1125 = vst.msk [vmem:[#allocation2 + $0x88] sm:$0xff] %vm1107, %v1106
        $region56: #{tpu_custom_call.1} parent=39 // pred_fallthru
          _
        %p1126 = scmp.eq.s32.totalorder %s26, 4
        // Predicated region
        $region57: #{tpu_custom_call.1} parent=39 // pred_check
          %p1127 = pneg %p1126
        $region58: #{tpu_custom_call.1} parent=39 // pred_check_branch
          %1129 = sbr.rel (%p1127) target = $region60
        $region59: #{tpu_custom_call.1} parent=39 // pred_region
          %v1130 = vld [vmem:[#allocation2] sm:$0xff]
          %v1131 = vld [vmem:[#allocation2 + $0x8] sm:$0xff]
          %v1132 = vld [vmem:[#allocation2 + $0x10] sm:$0xff]
          %v1133 = vld [vmem:[#allocation2 + $0x18] sm:$0xff]
          %v1134 = vld [vmem:[#allocation2 + $0x20] sm:$0xff]
          %v1135 = vld [vmem:[#allocation2 + $0x28] sm:$0xff]
          %v1136 = vld [vmem:[#allocation2 + $0x30] sm:$0xff]
          %v1137 = vld [vmem:[#allocation2 + $0x38] sm:$0xff]
          %v1138 = vld [vmem:[#allocation2 + $0x40] sm:$0xff]
          %v1139 = vld [vmem:[#allocation2 + $0x48] sm:$0xff]
          %v1140 = vld [vmem:[#allocation2 + $0x50] sm:$0xff]
          %v1141 = vld [vmem:[#allocation2 + $0x58] sm:$0xff]
          %v1142 = vld [vmem:[#allocation2 + $0x60] sm:$0xff]
          %v1143 = vld [vmem:[#allocation2 + $0x68] sm:$0xff]
          %v1144 = vld [vmem:[#allocation2 + $0x70] sm:$0xff]
          %v1145 = vld [vmem:[#allocation2 + $0x78] sm:$0xff]
          %v1146 = vld [vmem:[#allocation2 + $0x80] sm:$0xff]
          %v1147 = vld [vmem:[#allocation2 + $0x88] sm:$0xff]
          %v1148 = vld [vmem:[%s270 + $0x13] sm:$0xff]
          %v1149 = vld [vmem:[%s270 + $0x1b] sm:$0xff]
          %v1150 = vld [vmem:[%s270 + $0x23] sm:$0xff]
          %v1151 = vld [vmem:[%s270 + $0x2b] sm:$0xff]
          %v1152 = vld [vmem:[%s270 + $0x33] sm:$0xff]
          %v1153 = vld [vmem:[%s270 + $0x3b] sm:$0xff]
          %v1154 = vld [vmem:[%s270 + $0x43] sm:$0xff]
          %v1155 = vld [vmem:[%s270 + $0x4b] sm:$0xff]
          %v1156 = vld [vmem:[%s270 + $0x53] sm:$0xff]
          %v1157 = vld [vmem:[%s270 + $0x5b] sm:$0xff]
          %v1158 = vld [vmem:[%s270 + $0x63] sm:$0xff]
          %v1159 = vld [vmem:[%s270 + $0x6b] sm:$0xff]
          %v1160 = vld [vmem:[%s270 + $0x73] sm:$0xff]
          %v1161 = vld [vmem:[%s270 + $0x7b] sm:$0xff]
          %v1162 = vld [vmem:[%s270 + $0x83] sm:$0xff]
          %v1163 = vld [vmem:[%s270 + $0x8b] sm:$0xff]
          %v1164 = vld [vmem:[%s270 + $0x93] sm:$0xff]
          %v1165 = vld [vmem:[%s270 + $0x9b] sm:$0xff]
          %v1166 = vld [vmem:[%s274] sm:$0xf]
          %vm1167 = vcmask 31744
          %v1169 = vsel %vm1167, %v1148, 0
          %v1172 = vsel %vm1167, %v1149, 0
          %v1175 = vsel %vm1167, %v1150, 0
          %v1178 = vsel %vm1167, %v1151, 0
          %v1181 = vsel %vm1167, %v1152, 0
          %v1184 = vsel %vm1167, %v1153, 0
          %v1187 = vsel %vm1167, %v1154, 0
          %v1190 = vsel %vm1167, %v1155, 0
          %v1193 = vsel %vm1167, %v1156, 0
          %v1196 = vsel %vm1167, %v1157, 0
          %v1199 = vsel %vm1167, %v1158, 0
          %v1202 = vsel %vm1167, %v1159, 0
          %v1205 = vsel %vm1167, %v1160, 0
          %v1208 = vsel %vm1167, %v1161, 0
          %v1211 = vsel %vm1167, %v1162, 0
          %v1214 = vsel %vm1167, %v1163, 0
          %v1217 = vsel %vm1167, %v1164, 0
          %v1220 = vsel %vm1167, %v1165, 0
          %vm1222 = vcmask 1043456
          %v1224 = vsel %vm1222, %v1166, 0
          %1226 = vmatpush.msra.mxu0 0.0
          %1227 = vmatpush.msra.mxu0 0.0
          %1228 = vmatpush.msra.mxu0 0.0
          %1229 = vmatpush.msra.mxu0 0.0
          %1230 = vmatpush.msra.mxu0 0.0
          %1231 = vmatpush.msra.mxu0 0.0
          %1232 = vmatpush.msra.mxu0 0.0
          %1233 = vmatpush.msra.mxu0 0.0
          %1234 = vmatpush.msra.mxu0 0.0
          %1235 = vmatpush.msra.mxu0 0.0
          %1236 = vmatpush.msra.mxu0 0.0
          %1237 = vmatpush.msra.mxu0 0.0
          %1238 = vmatpush.msra.mxu0 0.0
          %1239 = vmatpush.msra.mxu0 0.0
          %1240 = vmatpush.msra.mxu0 0.0
          %1241 = vmatpush.msra.mxu0 %v1224
          %1242 = vmatmul.f32.gmra.mxu0 %v1169
          %v1243 = vpop.f32.mrf.mxu0
          %v1244 = vadd.f32 0.0, %v1243
          %1245 = vmatmul.f32.gmra.mxu0 %v1172
          %v1246 = vpop.f32.mrf.mxu0
          %v1247 = vadd.f32 0.0, %v1246
          %1248 = vmatmul.f32.gmra.mxu0 %v1175
          %v1249 = vpop.f32.mrf.mxu0
          %v1250 = vadd.f32 0.0, %v1249
          %1251 = vmatmul.f32.gmra.mxu0 %v1178
          %v1252 = vpop.f32.mrf.mxu0
          %v1253 = vadd.f32 0.0, %v1252
          %1254 = vmatmul.f32.gmra.mxu0 %v1181
          %v1255 = vpop.f32.mrf.mxu0
          %v1256 = vadd.f32 0.0, %v1255
          %1257 = vmatmul.f32.gmra.mxu0 %v1184
          %v1258 = vpop.f32.mrf.mxu0
          %v1259 = vadd.f32 0.0, %v1258
          %1260 = vmatmul.f32.gmra.mxu0 %v1187
          %v1261 = vpop.f32.mrf.mxu0
          %v1262 = vadd.f32 0.0, %v1261
          %1263 = vmatmul.f32.gmra.mxu0 %v1190
          %v1264 = vpop.f32.mrf.mxu0
          %v1265 = vadd.f32 0.0, %v1264
          %1266 = vmatmul.f32.gmra.mxu0 %v1193
          %v1267 = vpop.f32.mrf.mxu0
          %v1268 = vadd.f32 0.0, %v1267
          %1269 = vmatmul.f32.gmra.mxu0 %v1196
          %v1270 = vpop.f32.mrf.mxu0
          %v1271 = vadd.f32 0.0, %v1270
          %1272 = vmatmul.f32.gmra.mxu0 %v1199
          %v1273 = vpop.f32.mrf.mxu0
          %v1274 = vadd.f32 0.0, %v1273
          %1275 = vmatmul.f32.gmra.mxu0 %v1202
          %v1276 = vpop.f32.mrf.mxu0
          %v1277 = vadd.f32 0.0, %v1276
          %1278 = vmatmul.f32.gmra.mxu0 %v1205
          %v1279 = vpop.f32.mrf.mxu0
          %v1280 = vadd.f32 0.0, %v1279
          %1281 = vmatmul.f32.gmra.mxu0 %v1208
          %v1282 = vpop.f32.mrf.mxu0
          %v1283 = vadd.f32 0.0, %v1282
          %1284 = vmatmul.f32.gmra.mxu0 %v1211
          %v1285 = vpop.f32.mrf.mxu0
          %v1286 = vadd.f32 0.0, %v1285
          %1287 = vmatmul.f32.gmra.mxu0 %v1214
          %v1288 = vpop.f32.mrf.mxu0
          %v1289 = vadd.f32 0.0, %v1288
          %1290 = vmatmul.f32.gmra.mxu0 %v1217
          %v1291 = vpop.f32.mrf.mxu0
          %v1292 = vadd.f32 0.0, %v1291
          %1293 = vmatmul.f32.gmra.mxu0 %v1220
          %v1294 = vpop.f32.mrf.mxu0
          %v1295 = vadd.f32 0.0, %v1294
          %1296 = vdwg.mxu0
          %v1297 = vadd.f32 %v1130, %v1244
          %v1298 = vadd.f32 %v1131, %v1247
          %v1299 = vadd.f32 %v1132, %v1250
          %v1300 = vadd.f32 %v1133, %v1253
          %v1301 = vadd.f32 %v1134, %v1256
          %v1302 = vadd.f32 %v1135, %v1259
          %v1303 = vadd.f32 %v1136, %v1262
          %v1304 = vadd.f32 %v1137, %v1265
          %v1305 = vadd.f32 %v1138, %v1268
          %v1306 = vadd.f32 %v1139, %v1271
          %v1307 = vadd.f32 %v1140, %v1274
          %v1308 = vadd.f32 %v1141, %v1277
          %v1309 = vadd.f32 %v1142, %v1280
          %v1310 = vadd.f32 %v1143, %v1283
          %v1311 = vadd.f32 %v1144, %v1286
          %v1312 = vadd.f32 %v1145, %v1289
          %v1313 = vadd.f32 %v1146, %v1292
          %v1314 = vadd.f32 %v1147, %v1295
          %vm1315 = vcmask 64512
          %1316 = vst.msk [vmem:[#allocation2] sm:$0xff] %vm1315, %v1297
          %1317 = vst.msk [vmem:[#allocation2 + $0x8] sm:$0xff] %vm1315, %v1298
          %1318 = vst.msk [vmem:[#allocation2 + $0x10] sm:$0xff] %vm1315, %v1299
          %1319 = vst.msk [vmem:[#allocation2 + $0x18] sm:$0xff] %vm1315, %v1300
          %1320 = vst.msk [vmem:[#allocation2 + $0x20] sm:$0xff] %vm1315, %v1301
          %1321 = vst.msk [vmem:[#allocation2 + $0x28] sm:$0xff] %vm1315, %v1302
          %1322 = vst.msk [vmem:[#allocation2 + $0x30] sm:$0xff] %vm1315, %v1303
          %1323 = vst.msk [vmem:[#allocation2 + $0x38] sm:$0xff] %vm1315, %v1304
          %1324 = vst.msk [vmem:[#allocation2 + $0x40] sm:$0xff] %vm1315, %v1305
          %1325 = vst.msk [vmem:[#allocation2 + $0x48] sm:$0xff] %vm1315, %v1306
          %1326 = vst.msk [vmem:[#allocation2 + $0x50] sm:$0xff] %vm1315, %v1307
          %1327 = vst.msk [vmem:[#allocation2 + $0x58] sm:$0xff] %vm1315, %v1308
          %1328 = vst.msk [vmem:[#allocation2 + $0x60] sm:$0xff] %vm1315, %v1309
          %1329 = vst.msk [vmem:[#allocation2 + $0x68] sm:$0xff] %vm1315, %v1310
          %1330 = vst.msk [vmem:[#allocation2 + $0x70] sm:$0xff] %vm1315, %v1311
          %1331 = vst.msk [vmem:[#allocation2 + $0x78] sm:$0xff] %vm1315, %v1312
          %1332 = vst.msk [vmem:[#allocation2 + $0x80] sm:$0xff] %vm1315, %v1313
          %1333 = vst.msk [vmem:[#allocation2 + $0x88] sm:$0xff] %vm1315, %v1314
        $region60: #{tpu_custom_call.1} parent=39 // pred_fallthru
          _
        %p1334 = scmp.eq.s32.totalorder %s26, 5
        // Predicated region
        $region61: #{tpu_custom_call.1} parent=39 // pred_check
          %p1335 = pneg %p1334
        $region62: #{tpu_custom_call.1} parent=39 // pred_check_branch
          %1337 = sbr.rel (%p1335) target = $region64
        $region63: #{tpu_custom_call.1} parent=39 // pred_region
          %v1338 = vld [vmem:[#allocation2] sm:$0xff]
          %v1339 = vld [vmem:[#allocation2 + $0x8] sm:$0xff]
          %v1340 = vld [vmem:[#allocation2 + $0x10] sm:$0xff]
          %v1341 = vld [vmem:[#allocation2 + $0x18] sm:$0xff]
          %v1342 = vld [vmem:[#allocation2 + $0x20] sm:$0xff]
          %v1343 = vld [vmem:[#allocation2 + $0x28] sm:$0xff]
          %v1344 = vld [vmem:[#allocation2 + $0x30] sm:$0xff]
          %v1345 = vld [vmem:[#allocation2 + $0x38] sm:$0xff]
          %v1346 = vld [vmem:[#allocation2 + $0x40] sm:$0xff]
          %v1347 = vld [vmem:[#allocation2 + $0x48] sm:$0xff]
          %v1348 = vld [vmem:[#allocation2 + $0x50] sm:$0xff]
          %v1349 = vld [vmem:[#allocation2 + $0x58] sm:$0xff]
          %v1350 = vld [vmem:[#allocation2 + $0x60] sm:$0xff]
          %v1351 = vld [vmem:[#allocation2 + $0x68] sm:$0xff]
          %v1352 = vld [vmem:[#allocation2 + $0x70] sm:$0xff]
          %v1353 = vld [vmem:[#allocation2 + $0x78] sm:$0xff]
          %v1354 = vld [vmem:[#allocation2 + $0x80] sm:$0xff]
          %v1355 = vld [vmem:[#allocation2 + $0x88] sm:$0xff]
          %v1356 = vld [vmem:[%s270 + $0x14] sm:$0xff]
          %v1357 = vld [vmem:[%s270 + $0x1c] sm:$0xff]
          %v1358 = vld [vmem:[%s270 + $0x24] sm:$0xff]
          %v1359 = vld [vmem:[%s270 + $0x2c] sm:$0xff]
          %v1360 = vld [vmem:[%s270 + $0x34] sm:$0xff]
          %v1361 = vld [vmem:[%s270 + $0x3c] sm:$0xff]
          %v1362 = vld [vmem:[%s270 + $0x44] sm:$0xff]
          %v1363 = vld [vmem:[%s270 + $0x4c] sm:$0xff]
          %v1364 = vld [vmem:[%s270 + $0x54] sm:$0xff]
          %v1365 = vld [vmem:[%s270 + $0x5c] sm:$0xff]
          %v1366 = vld [vmem:[%s270 + $0x64] sm:$0xff]
          %v1367 = vld [vmem:[%s270 + $0x6c] sm:$0xff]
          %v1368 = vld [vmem:[%s270 + $0x74] sm:$0xff]
          %v1369 = vld [vmem:[%s270 + $0x7c] sm:$0xff]
          %v1370 = vld [vmem:[%s270 + $0x84] sm:$0xff]
          %v1371 = vld [vmem:[%s270 + $0x8c] sm:$0xff]
          %v1372 = vld [vmem:[%s270 + $0x94] sm:$0xff]
          %v1373 = vld [vmem:[%s270 + $0x9c] sm:$0xff]
          %v1374 = vld [vmem:[%s274] sm:$0xf]
          %vm1375 = vcmask 31744
          %v1377 = vsel %vm1375, %v1356, 0
          %v1380 = vsel %vm1375, %v1357, 0
          %v1383 = vsel %vm1375, %v1358, 0
          %v1386 = vsel %vm1375, %v1359, 0
          %v1389 = vsel %vm1375, %v1360, 0
          %v1392 = vsel %vm1375, %v1361, 0
          %v1395 = vsel %vm1375, %v1362, 0
          %v1398 = vsel %vm1375, %v1363, 0
          %v1401 = vsel %vm1375, %v1364, 0
          %v1404 = vsel %vm1375, %v1365, 0
          %v1407 = vsel %vm1375, %v1366, 0
          %v1410 = vsel %vm1375, %v1367, 0
          %v1413 = vsel %vm1375, %v1368, 0
          %v1416 = vsel %vm1375, %v1369, 0
          %v1419 = vsel %vm1375, %v1370, 0
          %v1422 = vsel %vm1375, %v1371, 0
          %v1425 = vsel %vm1375, %v1372, 0
          %v1428 = vsel %vm1375, %v1373, 0
          %vm1430 = vcmask 1043456
          %v1432 = vsel %vm1430, %v1374, 0
          %1434 = vmatpush.msra.mxu0 0.0
          %1435 = vmatpush.msra.mxu0 0.0
          %1436 = vmatpush.msra.mxu0 0.0
          %1437 = vmatpush.msra.mxu0 0.0
          %1438 = vmatpush.msra.mxu0 0.0
          %1439 = vmatpush.msra.mxu0 0.0
          %1440 = vmatpush.msra.mxu0 0.0
          %1441 = vmatpush.msra.mxu0 0.0
          %1442 = vmatpush.msra.mxu0 0.0
          %1443 = vmatpush.msra.mxu0 0.0
          %1444 = vmatpush.msra.mxu0 0.0
          %1445 = vmatpush.msra.mxu0 0.0
          %1446 = vmatpush.msra.mxu0 0.0
          %1447 = vmatpush.msra.mxu0 0.0
          %1448 = vmatpush.msra.mxu0 0.0
          %1449 = vmatpush.msra.mxu0 %v1432
          %1450 = vmatmul.f32.gmra.mxu0 %v1377
          %v1451 = vpop.f32.mrf.mxu0
          %v1452 = vadd.f32 0.0, %v1451
          %1453 = vmatmul.f32.gmra.mxu0 %v1380
          %v1454 = vpop.f32.mrf.mxu0
          %v1455 = vadd.f32 0.0, %v1454
          %1456 = vmatmul.f32.gmra.mxu0 %v1383
          %v1457 = vpop.f32.mrf.mxu0
          %v1458 = vadd.f32 0.0, %v1457
          %1459 = vmatmul.f32.gmra.mxu0 %v1386
          %v1460 = vpop.f32.mrf.mxu0
          %v1461 = vadd.f32 0.0, %v1460
          %1462 = vmatmul.f32.gmra.mxu0 %v1389
          %v1463 = vpop.f32.mrf.mxu0
          %v1464 = vadd.f32 0.0, %v1463
          %1465 = vmatmul.f32.gmra.mxu0 %v1392
          %v1466 = vpop.f32.mrf.mxu0
          %v1467 = vadd.f32 0.0, %v1466
          %1468 = vmatmul.f32.gmra.mxu0 %v1395
          %v1469 = vpop.f32.mrf.mxu0
          %v1470 = vadd.f32 0.0, %v1469
          %1471 = vmatmul.f32.gmra.mxu0 %v1398
          %v1472 = vpop.f32.mrf.mxu0
          %v1473 = vadd.f32 0.0, %v1472
          %1474 = vmatmul.f32.gmra.mxu0 %v1401
          %v1475 = vpop.f32.mrf.mxu0
          %v1476 = vadd.f32 0.0, %v1475
          %1477 = vmatmul.f32.gmra.mxu0 %v1404
          %v1478 = vpop.f32.mrf.mxu0
          %v1479 = vadd.f32 0.0, %v1478
          %1480 = vmatmul.f32.gmra.mxu0 %v1407
          %v1481 = vpop.f32.mrf.mxu0
          %v1482 = vadd.f32 0.0, %v1481
          %1483 = vmatmul.f32.gmra.mxu0 %v1410
          %v1484 = vpop.f32.mrf.mxu0
          %v1485 = vadd.f32 0.0, %v1484
          %1486 = vmatmul.f32.gmra.mxu0 %v1413
          %v1487 = vpop.f32.mrf.mxu0
          %v1488 = vadd.f32 0.0, %v1487
          %1489 = vmatmul.f32.gmra.mxu0 %v1416
          %v1490 = vpop.f32.mrf.mxu0
          %v1491 = vadd.f32 0.0, %v1490
          %1492 = vmatmul.f32.gmra.mxu0 %v1419
          %v1493 = vpop.f32.mrf.mxu0
          %v1494 = vadd.f32 0.0, %v1493
          %1495 = vmatmul.f32.gmra.mxu0 %v1422
          %v1496 = vpop.f32.mrf.mxu0
          %v1497 = vadd.f32 0.0, %v1496
          %1498 = vmatmul.f32.gmra.mxu0 %v1425
          %v1499 = vpop.f32.mrf.mxu0
          %v1500 = vadd.f32 0.0, %v1499
          %1501 = vmatmul.f32.gmra.mxu0 %v1428
          %v1502 = vpop.f32.mrf.mxu0
          %v1503 = vadd.f32 0.0, %v1502
          %1504 = vdwg.mxu0
          %v1505 = vadd.f32 %v1338, %v1452
          %v1506 = vadd.f32 %v1339, %v1455
          %v1507 = vadd.f32 %v1340, %v1458
          %v1508 = vadd.f32 %v1341, %v1461
          %v1509 = vadd.f32 %v1342, %v1464
          %v1510 = vadd.f32 %v1343, %v1467
          %v1511 = vadd.f32 %v1344, %v1470
          %v1512 = vadd.f32 %v1345, %v1473
          %v1513 = vadd.f32 %v1346, %v1476
          %v1514 = vadd.f32 %v1347, %v1479
          %v1515 = vadd.f32 %v1348, %v1482
          %v1516 = vadd.f32 %v1349, %v1485
          %v1517 = vadd.f32 %v1350, %v1488
          %v1518 = vadd.f32 %v1351, %v1491
          %v1519 = vadd.f32 %v1352, %v1494
          %v1520 = vadd.f32 %v1353, %v1497
          %v1521 = vadd.f32 %v1354, %v1500
          %v1522 = vadd.f32 %v1355, %v1503
          %vm1523 = vcmask 64512
          %1524 = vst.msk [vmem:[#allocation2] sm:$0xff] %vm1523, %v1505
          %1525 = vst.msk [vmem:[#allocation2 + $0x8] sm:$0xff] %vm1523, %v1506
          %1526 = vst.msk [vmem:[#allocation2 + $0x10] sm:$0xff] %vm1523, %v1507
          %1527 = vst.msk [vmem:[#allocation2 + $0x18] sm:$0xff] %vm1523, %v1508
          %1528 = vst.msk [vmem:[#allocation2 + $0x20] sm:$0xff] %vm1523, %v1509
          %1529 = vst.msk [vmem:[#allocation2 + $0x28] sm:$0xff] %vm1523, %v1510
          %1530 = vst.msk [vmem:[#allocation2 + $0x30] sm:$0xff] %vm1523, %v1511
          %1531 = vst.msk [vmem:[#allocation2 + $0x38] sm:$0xff] %vm1523, %v1512
          %1532 = vst.msk [vmem:[#allocation2 + $0x40] sm:$0xff] %vm1523, %v1513
          %1533 = vst.msk [vmem:[#allocation2 + $0x48] sm:$0xff] %vm1523, %v1514
          %1534 = vst.msk [vmem:[#allocation2 + $0x50] sm:$0xff] %vm1523, %v1515
          %1535 = vst.msk [vmem:[#allocation2 + $0x58] sm:$0xff] %vm1523, %v1516
          %1536 = vst.msk [vmem:[#allocation2 + $0x60] sm:$0xff] %vm1523, %v1517
          %1537 = vst.msk [vmem:[#allocation2 + $0x68] sm:$0xff] %vm1523, %v1518
          %1538 = vst.msk [vmem:[#allocation2 + $0x70] sm:$0xff] %vm1523, %v1519
          %1539 = vst.msk [vmem:[#allocation2 + $0x78] sm:$0xff] %vm1523, %v1520
          %1540 = vst.msk [vmem:[#allocation2 + $0x80] sm:$0xff] %vm1523, %v1521
          %1541 = vst.msk [vmem:[#allocation2 + $0x88] sm:$0xff] %vm1523, %v1522
        $region64: #{tpu_custom_call.1} parent=39 // pred_fallthru
          _
        %p1542 = scmp.eq.s32.totalorder %s26, 6
        // Predicated region
        $region65: #{tpu_custom_call.1} parent=39 // pred_check
          %p1543 = pneg %p1542
        $region66: #{tpu_custom_call.1} parent=39 // pred_check_branch
          %1545 = sbr.rel (%p1543) target = $region68
        $region67: #{tpu_custom_call.1} parent=39 // pred_region
          %v1546 = vld [vmem:[#allocation2] sm:$0xff]
          %v1547 = vld [vmem:[#allocation2 + $0x8] sm:$0xff]
          %v1548 = vld [vmem:[#allocation2 + $0x10] sm:$0xff]
          %v1549 = vld [vmem:[#allocation2 + $0x18] sm:$0xff]
          %v1550 = vld [vmem:[#allocation2 + $0x20] sm:$0xff]
          %v1551 = vld [vmem:[#allocation2 + $0x28] sm:$0xff]
          %v1552 = vld [vmem:[#allocation2 + $0x30] sm:$0xff]
          %v1553 = vld [vmem:[#allocation2 + $0x38] sm:$0xff]
          %v1554 = vld [vmem:[#allocation2 + $0x40] sm:$0xff]
          %v1555 = vld [vmem:[#allocation2 + $0x48] sm:$0xff]
          %v1556 = vld [vmem:[#allocation2 + $0x50] sm:$0xff]
          %v1557 = vld [vmem:[#allocation2 + $0x58] sm:$0xff]
          %v1558 = vld [vmem:[#allocation2 + $0x60] sm:$0xff]
          %v1559 = vld [vmem:[#allocation2 + $0x68] sm:$0xff]
          %v1560 = vld [vmem:[#allocation2 + $0x70] sm:$0xff]
          %v1561 = vld [vmem:[#allocation2 + $0x78] sm:$0xff]
          %v1562 = vld [vmem:[#allocation2 + $0x80] sm:$0xff]
          %v1563 = vld [vmem:[#allocation2 + $0x88] sm:$0xff]
          %v1564 = vld [vmem:[%s270 + $0x24] sm:$0xff]
          %v1565 = vld [vmem:[%s270 + $0x2c] sm:$0xff]
          %v1566 = vld [vmem:[%s270 + $0x34] sm:$0xff]
          %v1567 = vld [vmem:[%s270 + $0x3c] sm:$0xff]
          %v1568 = vld [vmem:[%s270 + $0x44] sm:$0xff]
          %v1569 = vld [vmem:[%s270 + $0x4c] sm:$0xff]
          %v1570 = vld [vmem:[%s270 + $0x54] sm:$0xff]
          %v1571 = vld [vmem:[%s270 + $0x5c] sm:$0xff]
          %v1572 = vld [vmem:[%s270 + $0x64] sm:$0xff]
          %v1573 = vld [vmem:[%s270 + $0x6c] sm:$0xff]
          %v1574 = vld [vmem:[%s270 + $0x74] sm:$0xff]
          %v1575 = vld [vmem:[%s270 + $0x7c] sm:$0xff]
          %v1576 = vld [vmem:[%s270 + $0x84] sm:$0xff]
          %v1577 = vld [vmem:[%s270 + $0x8c] sm:$0xff]
          %v1578 = vld [vmem:[%s270 + $0x94] sm:$0xff]
          %v1579 = vld [vmem:[%s270 + $0x9c] sm:$0xff]
          %v1580 = vld [vmem:[%s270 + $0xa4] sm:$0xff]
          %v1581 = vld [vmem:[%s270 + $0xac] sm:$0xff]
          %v1582 = vld [vmem:[%s274] sm:$0xf]
          %vm1583 = vcmask 31744
          %v1585 = vsel %vm1583, %v1564, 0
          %v1588 = vsel %vm1583, %v1565, 0
          %v1591 = vsel %vm1583, %v1566, 0
          %v1594 = vsel %vm1583, %v1567, 0
          %v1597 = vsel %vm1583, %v1568, 0
          %v1600 = vsel %vm1583, %v1569, 0
          %v1603 = vsel %vm1583, %v1570, 0
          %v1606 = vsel %vm1583, %v1571, 0
          %v1609 = vsel %vm1583, %v1572, 0
          %v1612 = vsel %vm1583, %v1573, 0
          %v1615 = vsel %vm1583, %v1574, 0
          %v1618 = vsel %vm1583, %v1575, 0
          %v1621 = vsel %vm1583, %v1576, 0
          %v1624 = vsel %vm1583, %v1577, 0
          %v1627 = vsel %vm1583, %v1578, 0
          %v1630 = vsel %vm1583, %v1579, 0
          %v1633 = vsel %vm1583, %v1580, 0
          %v1636 = vsel %vm1583, %v1581, 0
          %vm1638 = vcmask 1043456
          %v1640 = vsel %vm1638, %v1582, 0
          %1642 = vmatpush.msra.mxu0 0.0
          %1643 = vmatpush.msra.mxu0 0.0
          %1644 = vmatpush.msra.mxu0 0.0
          %1645 = vmatpush.msra.mxu0 0.0
          %1646 = vmatpush.msra.mxu0 0.0
          %1647 = vmatpush.msra.mxu0 0.0
          %1648 = vmatpush.msra.mxu0 0.0
          %1649 = vmatpush.msra.mxu0 0.0
          %1650 = vmatpush.msra.mxu0 0.0
          %1651 = vmatpush.msra.mxu0 0.0
          %1652 = vmatpush.msra.mxu0 0.0
          %1653 = vmatpush.msra.mxu0 0.0
          %1654 = vmatpush.msra.mxu0 0.0
          %1655 = vmatpush.msra.mxu0 0.0
          %1656 = vmatpush.msra.mxu0 0.0
          %1657 = vmatpush.msra.mxu0 %v1640
          %1658 = vmatmul.f32.gmra.mxu0 %v1585
          %v1659 = vpop.f32.mrf.mxu0
          %v1660 = vadd.f32 0.0, %v1659
          %1661 = vmatmul.f32.gmra.mxu0 %v1588
          %v1662 = vpop.f32.mrf.mxu0
          %v1663 = vadd.f32 0.0, %v1662
          %1664 = vmatmul.f32.gmra.mxu0 %v1591
          %v1665 = vpop.f32.mrf.mxu0
          %v1666 = vadd.f32 0.0, %v1665
          %1667 = vmatmul.f32.gmra.mxu0 %v1594
          %v1668 = vpop.f32.mrf.mxu0
          %v1669 = vadd.f32 0.0, %v1668
          %1670 = vmatmul.f32.gmra.mxu0 %v1597
          %v1671 = vpop.f32.mrf.mxu0
          %v1672 = vadd.f32 0.0, %v1671
          %1673 = vmatmul.f32.gmra.mxu0 %v1600
          %v1674 = vpop.f32.mrf.mxu0
          %v1675 = vadd.f32 0.0, %v1674
          %1676 = vmatmul.f32.gmra.mxu0 %v1603
          %v1677 = vpop.f32.mrf.mxu0
          %v1678 = vadd.f32 0.0, %v1677
          %1679 = vmatmul.f32.gmra.mxu0 %v1606
          %v1680 = vpop.f32.mrf.mxu0
          %v1681 = vadd.f32 0.0, %v1680
          %1682 = vmatmul.f32.gmra.mxu0 %v1609
          %v1683 = vpop.f32.mrf.mxu0
          %v1684 = vadd.f32 0.0, %v1683
          %1685 = vmatmul.f32.gmra.mxu0 %v1612
          %v1686 = vpop.f32.mrf.mxu0
          %v1687 = vadd.f32 0.0, %v1686
          %1688 = vmatmul.f32.gmra.mxu0 %v1615
          %v1689 = vpop.f32.mrf.mxu0
          %v1690 = vadd.f32 0.0, %v1689
          %1691 = vmatmul.f32.gmra.mxu0 %v1618
          %v1692 = vpop.f32.mrf.mxu0
          %v1693 = vadd.f32 0.0, %v1692
          %1694 = vmatmul.f32.gmra.mxu0 %v1621
          %v1695 = vpop.f32.mrf.mxu0
          %v1696 = vadd.f32 0.0, %v1695
          %1697 = vmatmul.f32.gmra.mxu0 %v1624
          %v1698 = vpop.f32.mrf.mxu0
          %v1699 = vadd.f32 0.0, %v1698
          %1700 = vmatmul.f32.gmra.mxu0 %v1627
          %v1701 = vpop.f32.mrf.mxu0
          %v1702 = vadd.f32 0.0, %v1701
          %1703 = vmatmul.f32.gmra.mxu0 %v1630
          %v1704 = vpop.f32.mrf.mxu0
          %v1705 = vadd.f32 0.0, %v1704
          %1706 = vmatmul.f32.gmra.mxu0 %v1633
          %v1707 = vpop.f32.mrf.mxu0
          %v1708 = vadd.f32 0.0, %v1707
          %1709 = vmatmul.f32.gmra.mxu0 %v1636
          %v1710 = vpop.f32.mrf.mxu0
          %v1711 = vadd.f32 0.0, %v1710
          %1712 = vdwg.mxu0
          %v1713 = vadd.f32 %v1546, %v1660
          %v1714 = vadd.f32 %v1547, %v1663
          %v1715 = vadd.f32 %v1548, %v1666
          %v1716 = vadd.f32 %v1549, %v1669
          %v1717 = vadd.f32 %v1550, %v1672
          %v1718 = vadd.f32 %v1551, %v1675
          %v1719 = vadd.f32 %v1552, %v1678
          %v1720 = vadd.f32 %v1553, %v1681
          %v1721 = vadd.f32 %v1554, %v1684
          %v1722 = vadd.f32 %v1555, %v1687
          %v1723 = vadd.f32 %v1556, %v1690
          %v1724 = vadd.f32 %v1557, %v1693
          %v1725 = vadd.f32 %v1558, %v1696
          %v1726 = vadd.f32 %v1559, %v1699
          %v1727 = vadd.f32 %v1560, %v1702
          %v1728 = vadd.f32 %v1561, %v1705
          %v1729 = vadd.f32 %v1562, %v1708
          %v1730 = vadd.f32 %v1563, %v1711
          %vm1731 = vcmask 64512
          %1732 = vst.msk [vmem:[#allocation2] sm:$0xff] %vm1731, %v1713
          %1733 = vst.msk [vmem:[#allocation2 + $0x8] sm:$0xff] %vm1731, %v1714
          %1734 = vst.msk [vmem:[#allocation2 + $0x10] sm:$0xff] %vm1731, %v1715
          %1735 = vst.msk [vmem:[#allocation2 + $0x18] sm:$0xff] %vm1731, %v1716
          %1736 = vst.msk [vmem:[#allocation2 + $0x20] sm:$0xff] %vm1731, %v1717
          %1737 = vst.msk [vmem:[#allocation2 + $0x28] sm:$0xff] %vm1731, %v1718
          %1738 = vst.msk [vmem:[#allocation2 + $0x30] sm:$0xff] %vm1731, %v1719
          %1739 = vst.msk [vmem:[#allocation2 + $0x38] sm:$0xff] %vm1731, %v1720
          %1740 = vst.msk [vmem:[#allocation2 + $0x40] sm:$0xff] %vm1731, %v1721
          %1741 = vst.msk [vmem:[#allocation2 + $0x48] sm:$0xff] %vm1731, %v1722
          %1742 = vst.msk [vmem:[#allocation2 + $0x50] sm:$0xff] %vm1731, %v1723
          %1743 = vst.msk [vmem:[#allocation2 + $0x58] sm:$0xff] %vm1731, %v1724
          %1744 = vst.msk [vmem:[#allocation2 + $0x60] sm:$0xff] %vm1731, %v1725
          %1745 = vst.msk [vmem:[#allocation2 + $0x68] sm:$0xff] %vm1731, %v1726
          %1746 = vst.msk [vmem:[#allocation2 + $0x70] sm:$0xff] %vm1731, %v1727
          %1747 = vst.msk [vmem:[#allocation2 + $0x78] sm:$0xff] %vm1731, %v1728
          %1748 = vst.msk [vmem:[#allocation2 + $0x80] sm:$0xff] %vm1731, %v1729
          %1749 = vst.msk [vmem:[#allocation2 + $0x88] sm:$0xff] %vm1731, %v1730
        $region68: #{tpu_custom_call.1} parent=39 // pred_fallthru
          _
        %p1750 = scmp.eq.s32.totalorder %s26, 7
        // Predicated region
        $region69: #{tpu_custom_call.1} parent=39 // pred_check
          %p1751 = pneg %p1750
        $region70: #{tpu_custom_call.1} parent=39 // pred_check_branch
          %1753 = sbr.rel (%p1751) target = $region72
        $region71: #{tpu_custom_call.1} parent=39 // pred_region
          %v1754 = vld [vmem:[#allocation2] sm:$0xff]
          %v1755 = vld [vmem:[#allocation2 + $0x8] sm:$0xff]
          %v1756 = vld [vmem:[#allocation2 + $0x10] sm:$0xff]
          %v1757 = vld [vmem:[#allocation2 + $0x18] sm:$0xff]
          %v1758 = vld [vmem:[#allocation2 + $0x20] sm:$0xff]
          %v1759 = vld [vmem:[#allocation2 + $0x28] sm:$0xff]
          %v1760 = vld [vmem:[#allocation2 + $0x30] sm:$0xff]
          %v1761 = vld [vmem:[#allocation2 + $0x38] sm:$0xff]
          %v1762 = vld [vmem:[#allocation2 + $0x40] sm:$0xff]
          %v1763 = vld [vmem:[#allocation2 + $0x48] sm:$0xff]
          %v1764 = vld [vmem:[#allocation2 + $0x50] sm:$0xff]
          %v1765 = vld [vmem:[#allocation2 + $0x58] sm:$0xff]
          %v1766 = vld [vmem:[#allocation2 + $0x60] sm:$0xff]
          %v1767 = vld [vmem:[#allocation2 + $0x68] sm:$0xff]
          %v1768 = vld [vmem:[#allocation2 + $0x70] sm:$0xff]
          %v1769 = vld [vmem:[#allocation2 + $0x78] sm:$0xff]
          %v1770 = vld [vmem:[#allocation2 + $0x80] sm:$0xff]
          %v1771 = vld [vmem:[#allocation2 + $0x88] sm:$0xff]
          %v1772 = vld [vmem:[%s270 + $0x25] sm:$0xff]
          %v1773 = vld [vmem:[%s270 + $0x2d] sm:$0xff]
          %v1774 = vld [vmem:[%s270 + $0x35] sm:$0xff]
          %v1775 = vld [vmem:[%s270 + $0x3d] sm:$0xff]
          %v1776 = vld [vmem:[%s270 + $0x45] sm:$0xff]
          %v1777 = vld [vmem:[%s270 + $0x4d] sm:$0xff]
          %v1778 = vld [vmem:[%s270 + $0x55] sm:$0xff]
          %v1779 = vld [vmem:[%s270 + $0x5d] sm:$0xff]
          %v1780 = vld [vmem:[%s270 + $0x65] sm:$0xff]
          %v1781 = vld [vmem:[%s270 + $0x6d] sm:$0xff]
          %v1782 = vld [vmem:[%s270 + $0x75] sm:$0xff]
          %v1783 = vld [vmem:[%s270 + $0x7d] sm:$0xff]
          %v1784 = vld [vmem:[%s270 + $0x85] sm:$0xff]
          %v1785 = vld [vmem:[%s270 + $0x8d] sm:$0xff]
          %v1786 = vld [vmem:[%s270 + $0x95] sm:$0xff]
          %v1787 = vld [vmem:[%s270 + $0x9d] sm:$0xff]
          %v1788 = vld [vmem:[%s270 + $0xa5] sm:$0xff]
          %v1789 = vld [vmem:[%s270 + $0xad] sm:$0xff]
          %v1790 = vld [vmem:[%s274] sm:$0xf]
          %vm1791 = vcmask 31744
          %v1793 = vsel %vm1791, %v1772, 0
          %v1796 = vsel %vm1791, %v1773, 0
          %v1799 = vsel %vm1791, %v1774, 0
          %v1802 = vsel %vm1791, %v1775, 0
          %v1805 = vsel %vm1791, %v1776, 0
          %v1808 = vsel %vm1791, %v1777, 0
          %v1811 = vsel %vm1791, %v1778, 0
          %v1814 = vsel %vm1791, %v1779, 0
          %v1817 = vsel %vm1791, %v1780, 0
          %v1820 = vsel %vm1791, %v1781, 0
          %v1823 = vsel %vm1791, %v1782, 0
          %v1826 = vsel %vm1791, %v1783, 0
          %v1829 = vsel %vm1791, %v1784, 0
          %v1832 = vsel %vm1791, %v1785, 0
          %v1835 = vsel %vm1791, %v1786, 0
          %v1838 = vsel %vm1791, %v1787, 0
          %v1841 = vsel %vm1791, %v1788, 0
          %v1844 = vsel %vm1791, %v1789, 0
          %vm1846 = vcmask 1043456
          %v1848 = vsel %vm1846, %v1790, 0
          %1850 = vmatpush.msra.mxu0 0.0
          %1851 = vmatpush.msra.mxu0 0.0
          %1852 = vmatpush.msra.mxu0 0.0
          %1853 = vmatpush.msra.mxu0 0.0
          %1854 = vmatpush.msra.mxu0 0.0
          %1855 = vmatpush.msra.mxu0 0.0
          %1856 = vmatpush.msra.mxu0 0.0
          %1857 = vmatpush.msra.mxu0 0.0
          %1858 = vmatpush.msra.mxu0 0.0
          %1859 = vmatpush.msra.mxu0 0.0
          %1860 = vmatpush.msra.mxu0 0.0
          %1861 = vmatpush.msra.mxu0 0.0
          %1862 = vmatpush.msra.mxu0 0.0
          %1863 = vmatpush.msra.mxu0 0.0
          %1864 = vmatpush.msra.mxu0 0.0
          %1865 = vmatpush.msra.mxu0 %v1848
          %1866 = vmatmul.f32.gmra.mxu0 %v1793
          %v1867 = vpop.f32.mrf.mxu0
          %v1868 = vadd.f32 0.0, %v1867
          %1869 = vmatmul.f32.gmra.mxu0 %v1796
          %v1870 = vpop.f32.mrf.mxu0
          %v1871 = vadd.f32 0.0, %v1870
          %1872 = vmatmul.f32.gmra.mxu0 %v1799
          %v1873 = vpop.f32.mrf.mxu0
          %v1874 = vadd.f32 0.0, %v1873
          %1875 = vmatmul.f32.gmra.mxu0 %v1802
          %v1876 = vpop.f32.mrf.mxu0
          %v1877 = vadd.f32 0.0, %v1876
          %1878 = vmatmul.f32.gmra.mxu0 %v1805
          %v1879 = vpop.f32.mrf.mxu0
          %v1880 = vadd.f32 0.0, %v1879
          %1881 = vmatmul.f32.gmra.mxu0 %v1808
          %v1882 = vpop.f32.mrf.mxu0
          %v1883 = vadd.f32 0.0, %v1882
          %1884 = vmatmul.f32.gmra.mxu0 %v1811
          %v1885 = vpop.f32.mrf.mxu0
          %v1886 = vadd.f32 0.0, %v1885
          %1887 = vmatmul.f32.gmra.mxu0 %v1814
          %v1888 = vpop.f32.mrf.mxu0
          %v1889 = vadd.f32 0.0, %v1888
          %1890 = vmatmul.f32.gmra.mxu0 %v1817
          %v1891 = vpop.f32.mrf.mxu0
          %v1892 = vadd.f32 0.0, %v1891
          %1893 = vmatmul.f32.gmra.mxu0 %v1820
          %v1894 = vpop.f32.mrf.mxu0
          %v1895 = vadd.f32 0.0, %v1894
          %1896 = vmatmul.f32.gmra.mxu0 %v1823
          %v1897 = vpop.f32.mrf.mxu0
          %v1898 = vadd.f32 0.0, %v1897
          %1899 = vmatmul.f32.gmra.mxu0 %v1826
          %v1900 = vpop.f32.mrf.mxu0
          %v1901 = vadd.f32 0.0, %v1900
          %1902 = vmatmul.f32.gmra.mxu0 %v1829
          %v1903 = vpop.f32.mrf.mxu0
          %v1904 = vadd.f32 0.0, %v1903
          %1905 = vmatmul.f32.gmra.mxu0 %v1832
          %v1906 = vpop.f32.mrf.mxu0
          %v1907 = vadd.f32 0.0, %v1906
          %1908 = vmatmul.f32.gmra.mxu0 %v1835
          %v1909 = vpop.f32.mrf.mxu0
          %v1910 = vadd.f32 0.0, %v1909
          %1911 = vmatmul.f32.gmra.mxu0 %v1838
          %v1912 = vpop.f32.mrf.mxu0
          %v1913 = vadd.f32 0.0, %v1912
          %1914 = vmatmul.f32.gmra.mxu0 %v1841
          %v1915 = vpop.f32.mrf.mxu0
          %v1916 = vadd.f32 0.0, %v1915
          %1917 = vmatmul.f32.gmra.mxu0 %v1844
          %v1918 = vpop.f32.mrf.mxu0
          %v1919 = vadd.f32 0.0, %v1918
          %1920 = vdwg.mxu0
          %v1921 = vadd.f32 %v1754, %v1868
          %v1922 = vadd.f32 %v1755, %v1871
          %v1923 = vadd.f32 %v1756, %v1874
          %v1924 = vadd.f32 %v1757, %v1877
          %v1925 = vadd.f32 %v1758, %v1880
          %v1926 = vadd.f32 %v1759, %v1883
          %v1927 = vadd.f32 %v1760, %v1886
          %v1928 = vadd.f32 %v1761, %v1889
          %v1929 = vadd.f32 %v1762, %v1892
          %v1930 = vadd.f32 %v1763, %v1895
          %v1931 = vadd.f32 %v1764, %v1898
          %v1932 = vadd.f32 %v1765, %v1901
          %v1933 = vadd.f32 %v1766, %v1904
          %v1934 = vadd.f32 %v1767, %v1907
          %v1935 = vadd.f32 %v1768, %v1910
          %v1936 = vadd.f32 %v1769, %v1913
          %v1937 = vadd.f32 %v1770, %v1916
          %v1938 = vadd.f32 %v1771, %v1919
          %vm1939 = vcmask 64512
          %1940 = vst.msk [vmem:[#allocation2] sm:$0xff] %vm1939, %v1921
          %1941 = vst.msk [vmem:[#allocation2 + $0x8] sm:$0xff] %vm1939, %v1922
          %1942 = vst.msk [vmem:[#allocation2 + $0x10] sm:$0xff] %vm1939, %v1923
          %1943 = vst.msk [vmem:[#allocation2 + $0x18] sm:$0xff] %vm1939, %v1924
          %1944 = vst.msk [vmem:[#allocation2 + $0x20] sm:$0xff] %vm1939, %v1925
          %1945 = vst.msk [vmem:[#allocation2 + $0x28] sm:$0xff] %vm1939, %v1926
          %1946 = vst.msk [vmem:[#allocation2 + $0x30] sm:$0xff] %vm1939, %v1927
          %1947 = vst.msk [vmem:[#allocation2 + $0x38] sm:$0xff] %vm1939, %v1928
          %1948 = vst.msk [vmem:[#allocation2 + $0x40] sm:$0xff] %vm1939, %v1929
          %1949 = vst.msk [vmem:[#allocation2 + $0x48] sm:$0xff] %vm1939, %v1930
          %1950 = vst.msk [vmem:[#allocation2 + $0x50] sm:$0xff] %vm1939, %v1931
          %1951 = vst.msk [vmem:[#allocation2 + $0x58] sm:$0xff] %vm1939, %v1932
          %1952 = vst.msk [vmem:[#allocation2 + $0x60] sm:$0xff] %vm1939, %v1933
          %1953 = vst.msk [vmem:[#allocation2 + $0x68] sm:$0xff] %vm1939, %v1934
          %1954 = vst.msk [vmem:[#allocation2 + $0x70] sm:$0xff] %vm1939, %v1935
          %1955 = vst.msk [vmem:[#allocation2 + $0x78] sm:$0xff] %vm1939, %v1936
          %1956 = vst.msk [vmem:[#allocation2 + $0x80] sm:$0xff] %vm1939, %v1937
          %1957 = vst.msk [vmem:[#allocation2 + $0x88] sm:$0xff] %vm1939, %v1938
        $region72: #{tpu_custom_call.1} parent=39 // pred_fallthru
          _
        %p1958 = scmp.eq.s32.totalorder %s26, 8
        // Predicated region
        $region73: #{tpu_custom_call.1} parent=39 // pred_check
          %p1959 = pneg %p1958
        $region74: #{tpu_custom_call.1} parent=39 // pred_check_branch
          %1961 = sbr.rel (%p1959) target = $region76
        $region75: #{tpu_custom_call.1} parent=39 // pred_region
          %v1962 = vld [vmem:[#allocation2] sm:$0xff]
          %v1963 = vld [vmem:[#allocation2 + $0x8] sm:$0xff]
          %v1964 = vld [vmem:[#allocation2 + $0x10] sm:$0xff]
          %v1965 = vld [vmem:[#allocation2 + $0x18] sm:$0xff]
          %v1966 = vld [vmem:[#allocation2 + $0x20] sm:$0xff]
          %v1967 = vld [vmem:[#allocation2 + $0x28] sm:$0xff]
          %v1968 = vld [vmem:[#allocation2 + $0x30] sm:$0xff]
          %v1969 = vld [vmem:[#allocation2 + $0x38] sm:$0xff]
          %v1970 = vld [vmem:[#allocation2 + $0x40] sm:$0xff]
          %v1971 = vld [vmem:[#allocation2 + $0x48] sm:$0xff]
          %v1972 = vld [vmem:[#allocation2 + $0x50] sm:$0xff]
          %v1973 = vld [vmem:[#allocation2 + $0x58] sm:$0xff]
          %v1974 = vld [vmem:[#allocation2 + $0x60] sm:$0xff]
          %v1975 = vld [vmem:[#allocation2 + $0x68] sm:$0xff]
          %v1976 = vld [vmem:[#allocation2 + $0x70] sm:$0xff]
          %v1977 = vld [vmem:[#allocation2 + $0x78] sm:$0xff]
          %v1978 = vld [vmem:[#allocation2 + $0x80] sm:$0xff]
          %v1979 = vld [vmem:[#allocation2 + $0x88] sm:$0xff]
          %v1980 = vld [vmem:[%s270 + $0x26] sm:$0xff]
          %v1981 = vld [vmem:[%s270 + $0x2e] sm:$0xff]
          %v1982 = vld [vmem:[%s270 + $0x36] sm:$0xff]
          %v1983 = vld [vmem:[%s270 + $0x3e] sm:$0xff]
          %v1984 = vld [vmem:[%s270 + $0x46] sm:$0xff]
          %v1985 = vld [vmem:[%s270 + $0x4e] sm:$0xff]
          %v1986 = vld [vmem:[%s270 + $0x56] sm:$0xff]
          %v1987 = vld [vmem:[%s270 + $0x5e] sm:$0xff]
          %v1988 = vld [vmem:[%s270 + $0x66] sm:$0xff]
          %v1989 = vld [vmem:[%s270 + $0x6e] sm:$0xff]
          %v1990 = vld [vmem:[%s270 + $0x76] sm:$0xff]
          %v1991 = vld [vmem:[%s270 + $0x7e] sm:$0xff]
          %v1992 = vld [vmem:[%s270 + $0x86] sm:$0xff]
          %v1993 = vld [vmem:[%s270 + $0x8e] sm:$0xff]
          %v1994 = vld [vmem:[%s270 + $0x96] sm:$0xff]
          %v1995 = vld [vmem:[%s270 + $0x9e] sm:$0xff]
          %v1996 = vld [vmem:[%s270 + $0xa6] sm:$0xff]
          %v1997 = vld [vmem:[%s270 + $0xae] sm:$0xff]
          %v1998 = vld [vmem:[%s274] sm:$0xf]
          %vm1999 = vcmask 31744
          %v2001 = vsel %vm1999, %v1980, 0
          %v2004 = vsel %vm1999, %v1981, 0
          %v2007 = vsel %vm1999, %v1982, 0
          %v2010 = vsel %vm1999, %v1983, 0
          %v2013 = vsel %vm1999, %v1984, 0
          %v2016 = vsel %vm1999, %v1985, 0
          %v2019 = vsel %vm1999, %v1986, 0
          %v2022 = vsel %vm1999, %v1987, 0
          %v2025 = vsel %vm1999, %v1988, 0
          %v2028 = vsel %vm1999, %v1989, 0
          %v2031 = vsel %vm1999, %v1990, 0
          %v2034 = vsel %vm1999, %v1991, 0
          %v2037 = vsel %vm1999, %v1992, 0
          %v2040 = vsel %vm1999, %v1993, 0
          %v2043 = vsel %vm1999, %v1994, 0
          %v2046 = vsel %vm1999, %v1995, 0
          %v2049 = vsel %vm1999, %v1996, 0
          %v2052 = vsel %vm1999, %v1997, 0
          %vm2054 = vcmask 1043456
          %v2056 = vsel %vm2054, %v1998, 0
          %2058 = vmatpush.msra.mxu0 0.0
          %2059 = vmatpush.msra.mxu0 0.0
          %2060 = vmatpush.msra.mxu0 0.0
          %2061 = vmatpush.msra.mxu0 0.0
          %2062 = vmatpush.msra.mxu0 0.0
          %2063 = vmatpush.msra.mxu0 0.0
          %2064 = vmatpush.msra.mxu0 0.0
          %2065 = vmatpush.msra.mxu0 0.0
          %2066 = vmatpush.msra.mxu0 0.0
          %2067 = vmatpush.msra.mxu0 0.0
          %2068 = vmatpush.msra.mxu0 0.0
          %2069 = vmatpush.msra.mxu0 0.0
          %2070 = vmatpush.msra.mxu0 0.0
          %2071 = vmatpush.msra.mxu0 0.0
          %2072 = vmatpush.msra.mxu0 0.0
          %2073 = vmatpush.msra.mxu0 %v2056
          %2074 = vmatmul.f32.gmra.mxu0 %v2001
          %v2075 = vpop.f32.mrf.mxu0
          %v2076 = vadd.f32 0.0, %v2075
          %2077 = vmatmul.f32.gmra.mxu0 %v2004
          %v2078 = vpop.f32.mrf.mxu0
          %v2079 = vadd.f32 0.0, %v2078
          %2080 = vmatmul.f32.gmra.mxu0 %v2007
          %v2081 = vpop.f32.mrf.mxu0
          %v2082 = vadd.f32 0.0, %v2081
          %2083 = vmatmul.f32.gmra.mxu0 %v2010
          %v2084 = vpop.f32.mrf.mxu0
          %v2085 = vadd.f32 0.0, %v2084
          %2086 = vmatmul.f32.gmra.mxu0 %v2013
          %v2087 = vpop.f32.mrf.mxu0
          %v2088 = vadd.f32 0.0, %v2087
          %2089 = vmatmul.f32.gmra.mxu0 %v2016
          %v2090 = vpop.f32.mrf.mxu0
          %v2091 = vadd.f32 0.0, %v2090
          %2092 = vmatmul.f32.gmra.mxu0 %v2019
          %v2093 = vpop.f32.mrf.mxu0
          %v2094 = vadd.f32 0.0, %v2093
          %2095 = vmatmul.f32.gmra.mxu0 %v2022
          %v2096 = vpop.f32.mrf.mxu0
          %v2097 = vadd.f32 0.0, %v2096
          %2098 = vmatmul.f32.gmra.mxu0 %v2025
          %v2099 = vpop.f32.mrf.mxu0
          %v2100 = vadd.f32 0.0, %v2099
          %2101 = vmatmul.f32.gmra.mxu0 %v2028
          %v2102 = vpop.f32.mrf.mxu0
          %v2103 = vadd.f32 0.0, %v2102
          %2104 = vmatmul.f32.gmra.mxu0 %v2031
          %v2105 = vpop.f32.mrf.mxu0
          %v2106 = vadd.f32 0.0, %v2105
          %2107 = vmatmul.f32.gmra.mxu0 %v2034
          %v2108 = vpop.f32.mrf.mxu0
          %v2109 = vadd.f32 0.0, %v2108
          %2110 = vmatmul.f32.gmra.mxu0 %v2037
          %v2111 = vpop.f32.mrf.mxu0
          %v2112 = vadd.f32 0.0, %v2111
          %2113 = vmatmul.f32.gmra.mxu0 %v2040
          %v2114 = vpop.f32.mrf.mxu0
          %v2115 = vadd.f32 0.0, %v2114
          %2116 = vmatmul.f32.gmra.mxu0 %v2043
          %v2117 = vpop.f32.mrf.mxu0
          %v2118 = vadd.f32 0.0, %v2117
          %2119 = vmatmul.f32.gmra.mxu0 %v2046
          %v2120 = vpop.f32.mrf.mxu0
          %v2121 = vadd.f32 0.0, %v2120
          %2122 = vmatmul.f32.gmra.mxu0 %v2049
          %v2123 = vpop.f32.mrf.mxu0
          %v2124 = vadd.f32 0.0, %v2123
          %2125 = vmatmul.f32.gmra.mxu0 %v2052
          %v2126 = vpop.f32.mrf.mxu0
          %v2127 = vadd.f32 0.0, %v2126
          %2128 = vdwg.mxu0
          %v2129 = vadd.f32 %v1962, %v2076
          %v2130 = vadd.f32 %v1963, %v2079
          %v2131 = vadd.f32 %v1964, %v2082
          %v2132 = vadd.f32 %v1965, %v2085
          %v2133 = vadd.f32 %v1966, %v2088
          %v2134 = vadd.f32 %v1967, %v2091
          %v2135 = vadd.f32 %v1968, %v2094
          %v2136 = vadd.f32 %v1969, %v2097
          %v2137 = vadd.f32 %v1970, %v2100
          %v2138 = vadd.f32 %v1971, %v2103
          %v2139 = vadd.f32 %v1972, %v2106
          %v2140 = vadd.f32 %v1973, %v2109
          %v2141 = vadd.f32 %v1974, %v2112
          %v2142 = vadd.f32 %v1975, %v2115
          %v2143 = vadd.f32 %v1976, %v2118
          %v2144 = vadd.f32 %v1977, %v2121
          %v2145 = vadd.f32 %v1978, %v2124
          %v2146 = vadd.f32 %v1979, %v2127
          %vm2147 = vcmask 64512
          %2148 = vst.msk [vmem:[#allocation2] sm:$0xff] %vm2147, %v2129
          %2149 = vst.msk [vmem:[#allocation2 + $0x8] sm:$0xff] %vm2147, %v2130
          %2150 = vst.msk [vmem:[#allocation2 + $0x10] sm:$0xff] %vm2147, %v2131
          %2151 = vst.msk [vmem:[#allocation2 + $0x18] sm:$0xff] %vm2147, %v2132
          %2152 = vst.msk [vmem:[#allocation2 + $0x20] sm:$0xff] %vm2147, %v2133
          %2153 = vst.msk [vmem:[#allocation2 + $0x28] sm:$0xff] %vm2147, %v2134
          %2154 = vst.msk [vmem:[#allocation2 + $0x30] sm:$0xff] %vm2147, %v2135
          %2155 = vst.msk [vmem:[#allocation2 + $0x38] sm:$0xff] %vm2147, %v2136
          %2156 = vst.msk [vmem:[#allocation2 + $0x40] sm:$0xff] %vm2147, %v2137
          %2157 = vst.msk [vmem:[#allocation2 + $0x48] sm:$0xff] %vm2147, %v2138
          %2158 = vst.msk [vmem:[#allocation2 + $0x50] sm:$0xff] %vm2147, %v2139
          %2159 = vst.msk [vmem:[#allocation2 + $0x58] sm:$0xff] %vm2147, %v2140
          %2160 = vst.msk [vmem:[#allocation2 + $0x60] sm:$0xff] %vm2147, %v2141
          %2161 = vst.msk [vmem:[#allocation2 + $0x68] sm:$0xff] %vm2147, %v2142
          %2162 = vst.msk [vmem:[#allocation2 + $0x70] sm:$0xff] %vm2147, %v2143
          %2163 = vst.msk [vmem:[#allocation2 + $0x78] sm:$0xff] %vm2147, %v2144
          %2164 = vst.msk [vmem:[#allocation2 + $0x80] sm:$0xff] %vm2147, %v2145
          %2165 = vst.msk [vmem:[#allocation2 + $0x88] sm:$0xff] %vm2147, %v2146
          %v2166 = vld [vmem:[#allocation2] sm:$0xff]
          %v2167 = vld [vmem:[#allocation2 + $0x8] sm:$0xff]
          %v2168 = vld [vmem:[#allocation2 + $0x10] sm:$0xff]
          %v2169 = vld [vmem:[#allocation2 + $0x18] sm:$0xff]
          %v2170 = vld [vmem:[#allocation2 + $0x20] sm:$0xff]
          %v2171 = vld [vmem:[#allocation2 + $0x28] sm:$0xff]
          %v2172 = vld [vmem:[#allocation2 + $0x30] sm:$0xff]
          %v2173 = vld [vmem:[#allocation2 + $0x38] sm:$0xff]
          %v2174 = vld [vmem:[#allocation2 + $0x40] sm:$0xff]
          %v2175 = vld [vmem:[#allocation2 + $0x48] sm:$0xff]
          %v2176 = vld [vmem:[#allocation2 + $0x50] sm:$0xff]
          %v2177 = vld [vmem:[#allocation2 + $0x58] sm:$0xff]
          %v2178 = vld [vmem:[#allocation2 + $0x60] sm:$0xff]
          %v2179 = vld [vmem:[#allocation2 + $0x68] sm:$0xff]
          %v2180 = vld [vmem:[#allocation2 + $0x70] sm:$0xff]
          %v2181 = vld [vmem:[#allocation2 + $0x78] sm:$0xff]
          %v2182 = vld [vmem:[#allocation2 + $0x80] sm:$0xff]
          %v2183 = vld [vmem:[#allocation2 + $0x88] sm:$0xff]
          %v2184 = vld [vmem:[%s2] sm:$0x1]
          %v2186 = vperm.slane %v2184, 0
          %v2188 = vadd.f32 %v2166, %v2186
          %v2189 = vadd.f32 %v2167, %v2186
          %v2190 = vadd.f32 %v2168, %v2186
          %v2191 = vadd.f32 %v2169, %v2186
          %v2192 = vadd.f32 %v2170, %v2186
          %v2193 = vadd.f32 %v2171, %v2186
          %v2194 = vadd.f32 %v2172, %v2186
          %v2195 = vadd.f32 %v2173, %v2186
          %v2196 = vadd.f32 %v2174, %v2186
          %v2197 = vadd.f32 %v2175, %v2186
          %v2198 = vadd.f32 %v2176, %v2186
          %v2199 = vadd.f32 %v2177, %v2186
          %v2200 = vadd.f32 %v2178, %v2186
          %v2201 = vadd.f32 %v2179, %v2186
          %v2202 = vadd.f32 %v2180, %v2186
          %v2203 = vadd.f32 %v2181, %v2186
          %v2204 = vadd.f32 %v2182, %v2186
          %v2205 = vadd.f32 %v2183, %v2186
          %v2206 = vmul.f32 %v2188, 0.1
          %v2207 = vmul.f32 %v2189, 0.1
          %v2208 = vmul.f32 %v2190, 0.1
          %v2209 = vmul.f32 %v2191, 0.1
          %v2210 = vmul.f32 %v2192, 0.1
          %v2211 = vmul.f32 %v2193, 0.1
          %v2212 = vmul.f32 %v2194, 0.1
          %v2213 = vmul.f32 %v2195, 0.1
          %v2214 = vmul.f32 %v2196, 0.1
          %v2215 = vmul.f32 %v2197, 0.1
          %v2216 = vmul.f32 %v2198, 0.1
          %v2217 = vmul.f32 %v2199, 0.1
          %v2218 = vmul.f32 %v2200, 0.1
          %v2219 = vmul.f32 %v2201, 0.1
          %v2220 = vmul.f32 %v2202, 0.1
          %v2221 = vmul.f32 %v2203, 0.1
          %v2222 = vmul.f32 %v2204, 0.1
          %v2223 = vmul.f32 %v2205, 0.1
          %v2224 = vmax.f32 %v2188, %v2206
          %v2225 = vmax.f32 %v2189, %v2207
          %v2226 = vmax.f32 %v2190, %v2208
          %v2227 = vmax.f32 %v2191, %v2209
          %v2228 = vmax.f32 %v2192, %v2210
          %v2229 = vmax.f32 %v2193, %v2211
          %v2230 = vmax.f32 %v2194, %v2212
          %v2231 = vmax.f32 %v2195, %v2213
          %v2232 = vmax.f32 %v2196, %v2214
          %v2233 = vmax.f32 %v2197, %v2215
          %v2234 = vmax.f32 %v2198, %v2216
          %v2235 = vmax.f32 %v2199, %v2217
          %v2236 = vmax.f32 %v2200, %v2218
          %v2237 = vmax.f32 %v2201, %v2219
          %v2238 = vmax.f32 %v2202, %v2220
          %v2239 = vmax.f32 %v2203, %v2221
          %v2240 = vmax.f32 %v2204, %v2222
          %v2241 = vmax.f32 %v2205, %v2223
          %v2242 = vld [vmem:[%s3] sm:$0xff]
          %v2243 = vld [vmem:[%s4] sm:$0x1]
          %v2245 = vperm.slane %v2243, 0
          %v2248 = vsel %vm2147, %v2224, 0
          %v2251 = vsel %vm2147, %v2225, 0
          %v2254 = vsel %vm2147, %v2226, 0
          %v2257 = vsel %vm2147, %v2227, 0
          %v2260 = vsel %vm2147, %v2228, 0
          %v2263 = vsel %vm2147, %v2229, 0
          %v2266 = vsel %vm2147, %v2230, 0
          %v2269 = vsel %vm2147, %v2231, 0
          %v2272 = vsel %vm2147, %v2232, 0
          %v2275 = vsel %vm2147, %v2233, 0
          %v2278 = vsel %vm2147, %v2234, 0
          %v2281 = vsel %vm2147, %v2235, 0
          %v2284 = vsel %vm2147, %v2236, 0
          %v2287 = vsel %vm2147, %v2237, 0
          %v2290 = vsel %vm2147, %v2238, 0
          %v2293 = vsel %vm2147, %v2239, 0
          %v2296 = vsel %vm2147, %v2240, 0
          %v2299 = vsel %vm2147, %v2241, 0
          %2301 = vmatpush.msra.mxu0 0.0
          %2302 = vmatpush.msra.mxu0 0.0
          %2303 = vmatpush.msra.mxu0 0.0
          %2304 = vmatpush.msra.mxu0 0.0
          %2305 = vmatpush.msra.mxu0 0.0
          %2306 = vmatpush.msra.mxu0 0.0
          %2307 = vmatpush.msra.mxu0 0.0
          %2308 = vmatpush.msra.mxu0 0.0
          %2309 = vmatpush.msra.mxu0 0.0
          %2310 = vmatpush.msra.mxu0 0.0
          %2311 = vmatpush.msra.mxu0 0.0
          %2312 = vmatpush.msra.mxu0 0.0
          %2313 = vmatpush.msra.mxu0 0.0
          %2314 = vmatpush.msra.mxu0 0.0
          %2315 = vmatpush.msra.mxu0 0.0
          %2316 = vmatpush.msra.mxu0 %v2242
          %2317 = vmatmul.f32.gmra.mxu0 %v2248
          %v2318 = vpop.f32.mrf.mxu0
          %v2319 = vadd.f32 %v2245, %v2318
          %2320 = vmatmul.f32.gmra.mxu0 %v2251
          %v2321 = vpop.f32.mrf.mxu0
          %v2322 = vadd.f32 %v2245, %v2321
          %2323 = vmatmul.f32.gmra.mxu0 %v2254
          %v2324 = vpop.f32.mrf.mxu0
          %v2325 = vadd.f32 %v2245, %v2324
          %2326 = vmatmul.f32.gmra.mxu0 %v2257
          %v2327 = vpop.f32.mrf.mxu0
          %v2328 = vadd.f32 %v2245, %v2327
          %2329 = vmatmul.f32.gmra.mxu0 %v2260
          %v2330 = vpop.f32.mrf.mxu0
          %v2331 = vadd.f32 %v2245, %v2330
          %2332 = vmatmul.f32.gmra.mxu0 %v2263
          %v2333 = vpop.f32.mrf.mxu0
          %v2334 = vadd.f32 %v2245, %v2333
          %2335 = vmatmul.f32.gmra.mxu0 %v2266
          %v2336 = vpop.f32.mrf.mxu0
          %v2337 = vadd.f32 %v2245, %v2336
          %2338 = vmatmul.f32.gmra.mxu0 %v2269
          %v2339 = vpop.f32.mrf.mxu0
          %v2340 = vadd.f32 %v2245, %v2339
          %2341 = vmatmul.f32.gmra.mxu0 %v2272
          %v2342 = vpop.f32.mrf.mxu0
          %v2343 = vadd.f32 %v2245, %v2342
          %2344 = vmatmul.f32.gmra.mxu0 %v2275
          %v2345 = vpop.f32.mrf.mxu0
          %v2346 = vadd.f32 %v2245, %v2345
          %2347 = vmatmul.f32.gmra.mxu0 %v2278
          %v2348 = vpop.f32.mrf.mxu0
          %v2349 = vadd.f32 %v2245, %v2348
          %2350 = vmatmul.f32.gmra.mxu0 %v2281
          %v2351 = vpop.f32.mrf.mxu0
          %v2352 = vadd.f32 %v2245, %v2351
          %2353 = vmatmul.f32.gmra.mxu0 %v2284
          %v2354 = vpop.f32.mrf.mxu0
          %v2355 = vadd.f32 %v2245, %v2354
          %2356 = vmatmul.f32.gmra.mxu0 %v2287
          %v2357 = vpop.f32.mrf.mxu0
          %v2358 = vadd.f32 %v2245, %v2357
          %2359 = vmatmul.f32.gmra.mxu0 %v2290
          %v2360 = vpop.f32.mrf.mxu0
          %v2361 = vadd.f32 %v2245, %v2360
          %2362 = vmatmul.f32.gmra.mxu0 %v2293
          %v2363 = vpop.f32.mrf.mxu0
          %v2364 = vadd.f32 %v2245, %v2363
          %2365 = vmatmul.f32.gmra.mxu0 %v2296
          %v2366 = vpop.f32.mrf.mxu0
          %v2367 = vadd.f32 %v2245, %v2366
          %2368 = vmatmul.f32.gmra.mxu0 %v2299
          %v2369 = vpop.f32.mrf.mxu0
          %v2370 = vadd.f32 %v2245, %v2369
          %2371 = vdwg.mxu0
          %2372 = vst [vmem:[%s261] sm:$0xff] %v2319
          %2373 = vst [vmem:[%s261 + $0x8] sm:$0xff] %v2322
          %2374 = vst [vmem:[%s261 + $0x10] sm:$0xff] %v2325
          %2375 = vst [vmem:[%s261 + $0x18] sm:$0xff] %v2328
          %2376 = vst [vmem:[%s261 + $0x20] sm:$0xff] %v2331
          %2377 = vst [vmem:[%s261 + $0x28] sm:$0xff] %v2334
          %2378 = vst [vmem:[%s261 + $0x30] sm:$0xff] %v2337
          %2379 = vst [vmem:[%s261 + $0x38] sm:$0xff] %v2340
          %2380 = vst [vmem:[%s261 + $0x40] sm:$0xff] %v2343
          %2381 = vst [vmem:[%s261 + $0x48] sm:$0xff] %v2346
          %2382 = vst [vmem:[%s261 + $0x50] sm:$0xff] %v2349
          %2383 = vst [vmem:[%s261 + $0x58] sm:$0xff] %v2352
          %2384 = vst [vmem:[%s261 + $0x60] sm:$0xff] %v2355
          %2385 = vst [vmem:[%s261 + $0x68] sm:$0xff] %v2358
          %2386 = vst [vmem:[%s261 + $0x70] sm:$0xff] %v2361
          %2387 = vst [vmem:[%s261 + $0x78] sm:$0xff] %v2364
          %2388 = vst [vmem:[%s261 + $0x80] sm:$0xff] %v2367
          %2389 = vst [vmem:[%s261 + $0x88] sm:$0xff] %v2370
        $region76: #{tpu_custom_call.1} parent=39 // pred_fallthru
          _
        %s2390 = sand.u32 %s165, 1
        %s2391 = scalar_lea.sflag [#allocation4], %s2390
        %s2392 = sand.u32 %s165, 1
        %s2393 = smul.addr %s2392, 144
        %s2394 = scalar_lea.vmem [#allocation3], %s2393
        // Predicated region
        $region77: #{tpu_custom_call.1} parent=39 // pred_check
          %p2395 = pneg %p175
        $region78: #{tpu_custom_call.1} parent=39 // pred_check_branch
          %2397 = sbr.rel (%p2395) target = $region80
        $region79: #{tpu_custom_call.1} parent=39 // pred_region
          %s2398 = smul.u32 18, %s25
          %2400 = vsyncadd %s2391, 0
          %s2401 = smul.addr %s24, 36
          %s2402 = sadd.s32 %s2398, %s2401
          %s2403 = smul.addr %s2402, 8
          %s2404 = scalar_lea.hbm %s5, %s2403
          %s2405 = sshll.u32 %s2394, 4
          %s2406 = int_to_ptr.vmem [resolvable:$true] %s2405
          %s2407 = sshll.u32 %s2404, 4
          %s2408 = int_to_ptr.hbm [resolvable:$true] %s2407
          %2413 = dma.vmem_to_hbm [thread:$0]  %s2406, 2304, %s2408, %s2391, 128, 128, 8
        $region80: #{tpu_custom_call.1} parent=39 // pred_fallthru
          _
      $region40: #{tpu_custom_call.1} parent=5 // pred_fallthru
        _
      %p2414 = scmp.le.s32.totalorder 2, %s14
      // Predicated region
      $region81: #{tpu_custom_call.1} parent=5 // pred_check
        %p2415 = pneg %p2414
      $region82: #{tpu_custom_call.1} parent=5 // pred_check_branch
        %2417 = sbr.rel (%p2415) target = $region84
      $region83: #{tpu_custom_call.1} parent=5 // pred_region
        %s2418 = ssub.s32 %s14, 2
        // Predicated region
        $region85: #{tpu_custom_call.1} parent=83 // pred_check
          %p2419 = pneg %p181
        $region86: #{tpu_custom_call.1} parent=83 // pred_check_branch
          %2421 = sbr.rel (%p2419) target = $region88
        $region87: #{tpu_custom_call.1} parent=83 // pred_region
          %s2422 = sand.u32 %s166, 1
          %s2423 = scalar_lea.sflag [#allocation4], %s2422
          %s2424 = sand.u32 %s166, 1
          %s2425 = smul.addr %s2424, 144
          %s2426 = scalar_lea.vmem [#allocation3], %s2425
          %2428 = dma.done %s2423, 2304
        $region88: #{tpu_custom_call.1} parent=83 // pred_fallthru
          _
      $region84: #{tpu_custom_call.1} parent=5 // pred_fallthru
        _
    $region6: #{tpu_custom_call.1} parent=1 // loop_footer
      %s18 = sadd.s32 1, %s14
    $region7: #{tpu_custom_call.1} parent=1 // loop_footer_branch
      %13 = sbr.rel target = $region3
    $region8: #{tpu_custom_call.1} parent=1 // loop_exit
      _
    %2429 = vsyncpa [#allocation4], 1
    %s2430 = scalar_lea.sflag [#allocation4], 1
    %2431 = vsyncpa %s2430, 1

</llo_original>
